<compile_context>
chip_gen: v7x
topology: tpu7x:2x2x1
jax: 0.10.0
libtpu: 0.0.40
codegen_flags: <defaults>
</compile_context>

<pallas_src>
import functools

import jax
import jax.numpy as jnp
import numpy as np
from jax.experimental import pallas as pl


# ---------------------------------------------------------------------------
# Single fused kernel: MI-LSTM + standard LSTM + ReLU + Linear head.
# No grid: everything (inputs, weights, state) lives in VMEM; time loop is
# fully unrolled at trace time.
# ---------------------------------------------------------------------------
def fused_net_kernel(x_ref, w_in_ref, b_in_ref, w_rec_ref, batt_ref,
                     w2_ref, b2_ref, wlin_ref, blin_ref, out_ref,
                     *, seq, batch, hidden):
    B, H = batch, hidden

    # ---- input-side gate pre-activations for ALL steps / streams: one wide matmul ----
    # x_ref:    (seq*B, 4F) rows ordered [t0 b0, t0 b1, t1 b0, ...], cols [Y|x1|x2|x3]
    # w_in_ref: block-diagonal (4F, 10H) -> [main 4H | aux0 2H | aux1 2H | aux2 2H]
    gx_all = (jnp.dot(x_ref[...], w_in_ref[...], preferred_element_type=jnp.float32)
              + b_in_ref[...])                                          # (seq*B, 10H)

    # weights loaded once, reused across the unrolled time loop
    w_rec = w_rec_ref[...]            # (2H, 11H): blockdiag([Um|Ua0|Ua1|Ua2], Watt)
    w2 = w2_ref[...]                  # (2H, 4H):  [Wih ; Whh]
    b2 = b2_ref[...]                  # (1, 4H)
    batt = batt_ref[...]              # (1, 1)

    h1 = jnp.zeros((B, H), jnp.float32)   # MI-LSTM state
    c1 = jnp.zeros((B, H), jnp.float32)
    h2 = jnp.zeros((B, H), jnp.float32)   # standard-LSTM state
    c2 = jnp.zeros((B, H), jnp.float32)

    # fully unrolled (seq is small & static); both LSTMs advance together, so the
    # MI-LSTM hidden sequence is never materialized.
    for t in range(seq):
        gx = gx_all[t * B:(t + 1) * B, :]                               # (B, 10H)

        # one recurrent matmul: [h_prev | c_prev] @ blockdiag(U_all, Watt)
        hc = jnp.concatenate([h1, c1], axis=1)                          # (B, 2H)
        gu = jnp.dot(hc, w_rec, preferred_element_type=jnp.float32)     # (B, 11H)

        # main-stream gates [i, f, o, c~]
        g = gx[:, :4 * H] + gu[:, :4 * H]
        i_t = jax.nn.sigmoid(g[:, 0 * H:1 * H])
        f_t = jax.nn.sigmoid(g[:, 1 * H:2 * H])
        o_t = jax.nn.sigmoid(g[:, 2 * H:3 * H])
        c_til = jnp.tanh(g[:, 3 * H:4 * H])

        # aux-stream candidate contributions
        ga = gx[:, 4 * H:] + gu[:, 4 * H:10 * H]                        # (B, 6H)
        cands = [i_t * c_til]
        for k in range(3):
            gk = ga[:, 2 * H * k:2 * H * (k + 1)]
            cands.append(jax.nn.sigmoid(gk[:, :H]) * jnp.tanh(gk[:, H:]))

        # attention over the 4 candidate streams (softmax vectorized on (B,4))
        wc = gu[:, 10 * H:]                                             # (B, H) = c_prev @ Watt
        scores = jnp.concatenate(
            [jnp.sum(l * wc, axis=-1, keepdims=True) for l in cands], axis=1)  # (B, 4)
        u = jnp.tanh(scores + batt)
        m = jnp.max(u, axis=-1, keepdims=True)
        e = jnp.exp(u - m)
        alpha = e / jnp.sum(e, axis=-1, keepdims=True)                  # (B, 4)
        big_l = (alpha[:, 0:1] * cands[0] + alpha[:, 1:2] * cands[1]
                 + alpha[:, 2:3] * cands[2] + alpha[:, 3:4] * cands[3])  # (B, H)

        c1 = f_t * c1 + big_l
        h1 = o_t * jnp.tanh(c1)

        # standard LSTM step fed by this step's MI-LSTM hidden (PyTorch gate order i,f,g,o)
        xh = jnp.concatenate([h1, h2], axis=1)                          # (B, 2H)
        g2 = jnp.dot(xh, w2, preferred_element_type=jnp.float32) + b2   # (B, 4H)
        i2 = jax.nn.sigmoid(g2[:, 0 * H:1 * H])
        f2 = jax.nn.sigmoid(g2[:, 1 * H:2 * H])
        gg = jnp.tanh(g2[:, 2 * H:3 * H])
        o2 = jax.nn.sigmoid(g2[:, 3 * H:4 * H])
        c2 = f2 * c2 + i2 * gg
        h2 = o2 * jnp.tanh(c2)

    # head: ReLU(h_n) @ Wlin + blin
    y = jnp.maximum(h2, 0.0)
    out_ref[...] = (jnp.dot(y, wlin_ref[...], preferred_element_type=jnp.float32)
                    + blin_ref[...])


# ---------------------------------------------------------------------------
# Wrapper: weight concatenation / block-diagonal packing + single pallas_call.
# ---------------------------------------------------------------------------
def _prep_fused_weights(mp, lp):
    F = mp["Wm"].shape[0]
    H = mp["Um"].shape[0]

    # input-side block-diagonal projection: [Y|x1|x2|x3] (4F) ->
    #   [main 4H | aux0 2H | aux1 2H | aux2 2H]  (10H)
    w_in = jnp.zeros((4 * F, 10 * H), jnp.float32)
    w_in = w_in.at[0:F, 0:4 * H].set(mp["Wm"])
    for k in range(3):
        w_in = w_in.at[(k + 1) * F:(k + 2) * F,
                       4 * H + 2 * H * k:4 * H + 2 * H * (k + 1)].set(mp["Wa"][k])
    b_in = jnp.concatenate([mp["bm"], mp["ba"][0], mp["ba"][1], mp["ba"][2]], axis=1)

    # recurrent block-diagonal projection: [h|c] (2H) -> [gates 10H | attention H]
    u_all = jnp.concatenate([mp["Um"], mp["Ua"][0], mp["Ua"][1], mp["Ua"][2]], axis=1)
    w_rec = jnp.zeros((2 * H, 11 * H), jnp.float32)
    w_rec = w_rec.at[0:H, 0:10 * H].set(u_all)
    w_rec = w_rec.at[H:2 * H, 10 * H:11 * H].set(mp["Watt"])

    # std-LSTM stacked input/recurrent weights
    w2 = jnp.concatenate([lp["Wih"], lp["Whh"]], axis=0)                 # (2H, 4H)
    return w_in, b_in, w_rec, mp["batt"], w2, lp["b"], lp["Wlin"], lp["blin"]


@jax.jit
def net_forward(Y, x1, x2, x3, mi_params, lstm_params):
    seq, B, F = Y.shape
    H = mi_params["Um"].shape[0]
    weights = _prep_fused_weights(mi_params, lstm_params)

    # concat the 4 input streams along features; flatten time/batch rows
    x_cat = jnp.concatenate([Y, x1, x2, x3], axis=-1).reshape(seq * B, 4 * F)

    out = pl.pallas_call(
        functools.partial(fused_net_kernel, seq=seq, batch=B, hidden=H),
        out_shape=jax.ShapeDtypeStruct((B, 1), jnp.float32),
    )(x_cat, *weights)
    return out.reshape(1, B, 1)          # match PyTorch: (num_layers=1, batch, 1)


# ---------------------------------------------------------------------------
# Pure-JAX reference (same math, un-fused / un-concatenated params) for verification.
# ---------------------------------------------------------------------------
def reference_forward(Y, x1, x2, x3, mp, lp):
    seq, B, _ = Y.shape
    H = mp["Um"].shape[0]
    h = jnp.zeros((B, H)); c = jnp.zeros((B, H))
    hs = []
    for t in range(seq):
        g = Y[t] @ mp["Wm"] + h @ mp["Um"] + mp["bm"]
        i_t = jax.nn.sigmoid(g[:, :H]); f_t = jax.nn.sigmoid(g[:, H:2 * H])
        o_t = jax.nn.sigmoid(g[:, 2 * H:3 * H]); c_til = jnp.tanh(g[:, 3 * H:])
        ls = [i_t * c_til]
        for k, xk in enumerate((x1, x2, x3)):
            ga = xk[t] @ mp["Wa"][k] + h @ mp["Ua"][k] + mp["ba"][k]
            ls.append(jax.nn.sigmoid(ga[:, :H]) * jnp.tanh(ga[:, H:]))
        wc = c @ mp["Watt"]
        us = [jnp.tanh(jnp.sum(l * wc, -1, keepdims=True) + mp["batt"]) for l in ls]
        m = us[0]
        for u in us[1:]:
            m = jnp.maximum(m, u)
        es = [jnp.exp(u - m) for u in us]
        den = es[0] + es[1] + es[2] + es[3]
        L = sum((e / den) * l for e, l in zip(es, ls))
        c = f_t * c + L
        h = o_t * jnp.tanh(c)
        hs.append(h)
    hseq = jnp.stack(hs, 0)

    h = jnp.zeros((B, H)); c = jnp.zeros((B, H))
    for t in range(seq):
        g = hseq[t] @ lp["Wih"] + h @ lp["Whh"] + lp["b"]
        i_t = jax.nn.sigmoid(g[:, :H]); f_t = jax.nn.sigmoid(g[:, H:2 * H])
        g_t = jnp.tanh(g[:, 2 * H:3 * H]); o_t = jax.nn.sigmoid(g[:, 3 * H:])
        c = f_t * c + i_t * g_t
        h = o_t * jnp.tanh(c)
    y = jnp.maximum(h, 0.0) @ lp["Wlin"] + lp["blin"]
    return y.reshape(1, B, 1)


# ---------------------------------------------------------------------------
# Deterministic parameter construction + demo run
# ---------------------------------------------------------------------------
def make_params(key, in_feat, H):
    ks = jax.random.split(key, 12)
    s = 0.1
    mi = dict(
        Wm=jax.random.normal(ks[0], (in_feat, 4 * H), jnp.float32) * s,
        Um=jax.random.normal(ks[1], (H, 4 * H), jnp.float32) * s,
        bm=jax.random.normal(ks[2], (1, 4 * H), jnp.float32) * s,
        Wa=jax.random.normal(ks[3], (3, in_feat, 2 * H), jnp.float32) * s,
        Ua=jax.random.normal(ks[4], (3, H, 2 * H), jnp.float32) * s,
        ba=jax.random.normal(ks[5], (3, 1, 2 * H), jnp.float32) * s,
        Watt=jax.random.normal(ks[6], (H, H), jnp.float32) * s,
        batt=jax.random.normal(ks[7], (1, 1), jnp.float32) * s,
    )
    lstm = dict(
        Wih=jax.random.normal(ks[8], (H, 4 * H), jnp.float32) * s,
        Whh=jax.random.normal(ks[9], (H, 4 * H), jnp.float32) * s,
        b=jax.random.normal(ks[10], (1, 4 * H), jnp.float32) * s,
        Wlin=jax.random.normal(ks[11], (H, 1), jnp.float32) * s,
        blin=jnp.full((1, 1), 0.05, jnp.float32),
    )
    return mi, lstm


if __name__ == "__main__":
    SEQ, B, F, H = 8, 2, 5, 32

    key = jax.random.PRNGKey(0)
    k_in, k_p = jax.random.split(key)
    kY, k1, k2, k3 = jax.random.split(k_in, 4)
    # time-major inputs: (seq, batch, 5)
    Y = jax.random.normal(kY, (SEQ, B, F), jnp.float32)
    x1 = jax.random.normal(k1, (SEQ, B, F), jnp.float32)
    x2 = jax.random.normal(k2, (SEQ, B, F), jnp.float32)
    x3 = jax.random.normal(k3, (SEQ, B, F), jnp.float32)

    mi_params, lstm_params = make_params(k_p, F, H)

    out = net_forward(Y, x1, x2, x3, mi_params, lstm_params)
    out = jax.block_until_ready(out)

    ref = reference_forward(Y, x1, x2, x3, mi_params, lstm_params)
    np.testing.assert_allclose(np.asarray(out), np.asarray(ref), rtol=1e-3, atol=1e-3)
    assert out.shape == (1, B, 1)

    print("KERNEL_OK")
</pallas_src>

<mosaic_0001>
module attributes {stable_mosaic.version = 11 : i64} {
  func.func @fused_net_kernel(%arg0: memref<16x20xf32, #tpu.memory_space<vmem>>, %arg1: memref<20x320xf32, #tpu.memory_space<vmem>>, %arg2: memref<1x320xf32, #tpu.memory_space<vmem>>, %arg3: memref<64x352xf32, #tpu.memory_space<vmem>>, %arg4: memref<1x1xf32, #tpu.memory_space<vmem>>, %arg5: memref<64x128xf32, #tpu.memory_space<vmem>>, %arg6: memref<1x128xf32, #tpu.memory_space<vmem>>, %arg7: memref<32x1xf32, #tpu.memory_space<vmem>>, %arg8: memref<1x1xf32, #tpu.memory_space<vmem>>, %arg9: memref<2x1xf32, #tpu.memory_space<vmem>>) attributes {dimension_semantics = [], scalar_prefetch = 0 : i64, scratch_operands = 0 : i64, tpu.core_type = #tpu.core_type<tc>} {
    %c0 = arith.constant 0 : index
    %c0_0 = arith.constant 0 : index
    %0 = vector.load %arg0[%c0, %c0_0] : memref<16x20xf32, #tpu.memory_space<vmem>>, vector<16x20xf32>
    %c0_1 = arith.constant 0 : index
    %c0_2 = arith.constant 0 : index
    %1 = vector.load %arg1[%c0_1, %c0_2] : memref<20x320xf32, #tpu.memory_space<vmem>>, vector<20x320xf32>
    %cst = arith.constant dense<0.000000e+00> : vector<16x320xf32>
    %2 = tpu.matmul %0, %1, %cst {dimension_numbers = #tpu.dot_dimension_numbers<[1], [0], [0], [1], [0, 0, 1, 1], [], []>} : vector<16x20xf32>, vector<20x320xf32>, vector<16x320xf32> -> vector<16x320xf32>
    %c0_3 = arith.constant 0 : index
    %c0_4 = arith.constant 0 : index
    %3 = vector.load %arg2[%c0_3, %c0_4] : memref<1x320xf32, #tpu.memory_space<vmem>>, vector<1x320xf32>
    %4 = vector.broadcast %3 : vector<1x320xf32> to vector<16x320xf32>
    %5 = arith.addf %2, %4 : vector<16x320xf32>
    %c0_5 = arith.constant 0 : index
    %c0_6 = arith.constant 0 : index
    %6 = vector.load %arg3[%c0_5, %c0_6] : memref<64x352xf32, #tpu.memory_space<vmem>>, vector<64x352xf32>
    %c0_7 = arith.constant 0 : index
    %c0_8 = arith.constant 0 : index
    %7 = vector.load %arg5[%c0_7, %c0_8] : memref<64x128xf32, #tpu.memory_space<vmem>>, vector<64x128xf32>
    %c0_9 = arith.constant 0 : index
    %c0_10 = arith.constant 0 : index
    %8 = vector.load %arg6[%c0_9, %c0_10] : memref<1x128xf32, #tpu.memory_space<vmem>>, vector<1x128xf32>
    %c0_11 = arith.constant 0 : index
    %c0_12 = arith.constant 0 : index
    %9 = vector.load %arg4[%c0_11, %c0_12] : memref<1x1xf32, #tpu.memory_space<vmem>>, vector<1x1xf32>
    %cst_13 = arith.constant 0.000000e+00 : f32
    %10 = vector.broadcast %cst_13 : f32 to vector<2x32xf32>
    %cst_14 = arith.constant 0.000000e+00 : f32
    %11 = vector.broadcast %cst_14 : f32 to vector<2x32xf32>
    %cst_15 = arith.constant 0.000000e+00 : f32
    %12 = vector.broadcast %cst_15 : f32 to vector<2x32xf32>
    %cst_16 = arith.constant 0.000000e+00 : f32
    %13 = vector.broadcast %cst_16 : f32 to vector<2x32xf32>
    %14 = vector.extract_strided_slice %5 {offsets = [0, 0], sizes = [2, 320], strides = [1, 1]} : vector<16x320xf32> to vector<2x320xf32>
    %15 = tpu.concatenate %10, %11 in 1 : vector<2x32xf32>, vector<2x32xf32> -> vector<2x64xf32>
    %cst_17 = arith.constant dense<0.000000e+00> : vector<2x352xf32>
    %16 = tpu.matmul %15, %6, %cst_17 {dimension_numbers = #tpu.dot_dimension_numbers<[1], [0], [0], [1], [0, 0, 1, 1], [], []>} : vector<2x64xf32>, vector<64x352xf32>, vector<2x352xf32> -> vector<2x352xf32>
    %17 = vector.extract_strided_slice %14 {offsets = [0, 0], sizes = [2, 128], strides = [1, 1]} : vector<2x320xf32> to vector<2x128xf32>
    %18 = vector.extract_strided_slice %16 {offsets = [0, 0], sizes = [2, 128], strides = [1, 1]} : vector<2x352xf32> to vector<2x128xf32>
    %19 = arith.addf %17, %18 : vector<2x128xf32>
    %20 = vector.extract_strided_slice %19 {offsets = [0, 0], sizes = [2, 32], strides = [1, 1]} : vector<2x128xf32> to vector<2x32xf32>
    %21 = arith.negf %20 : vector<2x32xf32>
    %22 = math.exp %21 : vector<2x32xf32>
    %cst_18 = arith.constant 1.000000e+00 : f32
    %23 = vector.broadcast %cst_18 : f32 to vector<2x32xf32>
    %24 = arith.addf %23, %22 : vector<2x32xf32>
    %25 = arith.divf %23, %24 : vector<2x32xf32>
    %26 = vector.extract_strided_slice %19 {offsets = [0, 32], sizes = [2, 32], strides = [1, 1]} : vector<2x128xf32> to vector<2x32xf32>
    %27 = arith.negf %26 : vector<2x32xf32>
    %28 = math.exp %27 : vector<2x32xf32>
    %cst_19 = arith.constant 1.000000e+00 : f32
    %29 = vector.broadcast %cst_19 : f32 to vector<2x32xf32>
    %30 = arith.addf %29, %28 : vector<2x32xf32>
    %31 = arith.divf %29, %30 : vector<2x32xf32>
    %32 = vector.extract_strided_slice %19 {offsets = [0, 64], sizes = [2, 32], strides = [1, 1]} : vector<2x128xf32> to vector<2x32xf32>
    %33 = arith.negf %32 : vector<2x32xf32>
    %34 = math.exp %33 : vector<2x32xf32>
    %cst_20 = arith.constant 1.000000e+00 : f32
    %35 = vector.broadcast %cst_20 : f32 to vector<2x32xf32>
    %36 = arith.addf %35, %34 : vector<2x32xf32>
    %37 = arith.divf %35, %36 : vector<2x32xf32>
    %38 = vector.extract_strided_slice %19 {offsets = [0, 96], sizes = [2, 32], strides = [1, 1]} : vector<2x128xf32> to vector<2x32xf32>
    %39 = math.tanh %38 : vector<2x32xf32>
    %40 = vector.extract_strided_slice %14 {offsets = [0, 128], sizes = [2, 192], strides = [1, 1]} : vector<2x320xf32> to vector<2x192xf32>
    %41 = vector.extract_strided_slice %16 {offsets = [0, 128], sizes = [2, 192], strides = [1, 1]} : vector<2x352xf32> to vector<2x192xf32>
    %42 = arith.addf %40, %41 : vector<2x192xf32>
    %43 = arith.mulf %25, %39 : vector<2x32xf32>
    %44 = vector.extract_strided_slice %42 {offsets = [0, 0], sizes = [2, 64], strides = [1, 1]} : vector<2x192xf32> to vector<2x64xf32>
    %45 = vector.extract_strided_slice %44 {offsets = [0, 0], sizes = [2, 32], strides = [1, 1]} : vector<2x64xf32> to vector<2x32xf32>
    %46 = arith.negf %45 : vector<2x32xf32>
    %47 = math.exp %46 : vector<2x32xf32>
    %cst_21 = arith.constant 1.000000e+00 : f32
    %48 = vector.broadcast %cst_21 : f32 to vector<2x32xf32>
    %49 = arith.addf %48, %47 : vector<2x32xf32>
    %50 = arith.divf %48, %49 : vector<2x32xf32>
    %51 = vector.extract_strided_slice %44 {offsets = [0, 32], sizes = [2, 32], strides = [1, 1]} : vector<2x64xf32> to vector<2x32xf32>
    %52 = math.tanh %51 : vector<2x32xf32>
    %53 = arith.mulf %50, %52 : vector<2x32xf32>
    %54 = vector.extract_strided_slice %42 {offsets = [0, 64], sizes = [2, 64], strides = [1, 1]} : vector<2x192xf32> to vector<2x64xf32>
    %55 = vector.extract_strided_slice %54 {offsets = [0, 0], sizes = [2, 32], strides = [1, 1]} : vector<2x64xf32> to vector<2x32xf32>
    %56 = arith.negf %55 : vector<2x32xf32>
    %57 = math.exp %56 : vector<2x32xf32>
    %cst_22 = arith.constant 1.000000e+00 : f32
    %58 = vector.broadcast %cst_22 : f32 to vector<2x32xf32>
    %59 = arith.addf %58, %57 : vector<2x32xf32>
    %60 = arith.divf %58, %59 : vector<2x32xf32>
    %61 = vector.extract_strided_slice %54 {offsets = [0, 32], sizes = [2, 32], strides = [1, 1]} : vector<2x64xf32> to vector<2x32xf32>
    %62 = math.tanh %61 : vector<2x32xf32>
    %63 = arith.mulf %60, %62 : vector<2x32xf32>
    %64 = vector.extract_strided_slice %42 {offsets = [0, 128], sizes = [2, 64], strides = [1, 1]} : vector<2x192xf32> to vector<2x64xf32>
    %65 = vector.extract_strided_slice %64 {offsets = [0, 0], sizes = [2, 32], strides = [1, 1]} : vector<2x64xf32> to vector<2x32xf32>
    %66 = arith.negf %65 : vector<2x32xf32>
    %67 = math.exp %66 : vector<2x32xf32>
    %cst_23 = arith.constant 1.000000e+00 : f32
    %68 = vector.broadcast %cst_23 : f32 to vector<2x32xf32>
    %69 = arith.addf %68, %67 : vector<2x32xf32>
    %70 = arith.divf %68, %69 : vector<2x32xf32>
    %71 = vector.extract_strided_slice %64 {offsets = [0, 32], sizes = [2, 32], strides = [1, 1]} : vector<2x64xf32> to vector<2x32xf32>
    %72 = math.tanh %71 : vector<2x32xf32>
    %73 = arith.mulf %70, %72 : vector<2x32xf32>
    %74 = vector.extract_strided_slice %16 {offsets = [0, 320], sizes = [2, 32], strides = [1, 1]} : vector<2x352xf32> to vector<2x32xf32>
    %75 = arith.mulf %43, %74 : vector<2x32xf32>
    %cst_24 = arith.constant dense<0.000000e+00> : vector<2xf32>
    %76 = vector.multi_reduction <add>, %75, %cst_24 [1] : vector<2x32xf32> to vector<2xf32>
    %77 = vector.shape_cast %76 : vector<2xf32> to vector<2x1xf32>
    %78 = arith.mulf %53, %74 : vector<2x32xf32>
    %cst_25 = arith.constant dense<0.000000e+00> : vector<2xf32>
    %79 = vector.multi_reduction <add>, %78, %cst_25 [1] : vector<2x32xf32> to vector<2xf32>
    %80 = vector.shape_cast %79 : vector<2xf32> to vector<2x1xf32>
    %81 = arith.mulf %63, %74 : vector<2x32xf32>
    %cst_26 = arith.constant dense<0.000000e+00> : vector<2xf32>
    %82 = vector.multi_reduction <add>, %81, %cst_26 [1] : vector<2x32xf32> to vector<2xf32>
    %83 = vector.shape_cast %82 : vector<2xf32> to vector<2x1xf32>
    %84 = arith.mulf %73, %74 : vector<2x32xf32>
    %cst_27 = arith.constant dense<0.000000e+00> : vector<2xf32>
    %85 = vector.multi_reduction <add>, %84, %cst_27 [1] : vector<2x32xf32> to vector<2xf32>
    %86 = vector.shape_cast %85 : vector<2xf32> to vector<2x1xf32>
    %87 = tpu.concatenate %77, %80, %83, %86 in 1 : vector<2x1xf32>, vector<2x1xf32>, vector<2x1xf32>, vector<2x1xf32> -> vector<2x4xf32>
    %88 = vector.broadcast %9 : vector<1x1xf32> to vector<2x4xf32>
    %89 = arith.addf %87, %88 : vector<2x4xf32>
    %90 = math.tanh %89 : vector<2x4xf32>
    %cst_28 = arith.constant dense<0xFF800000> : vector<2xf32>
    %91 = vector.multi_reduction <maximumf>, %90, %cst_28 [1] : vector<2x4xf32> to vector<2xf32>
    %92 = vector.shape_cast %91 : vector<2xf32> to vector<2x1xf32>
    %93 = vector.broadcast %92 : vector<2x1xf32> to vector<2x4xf32>
    %94 = arith.subf %90, %93 : vector<2x4xf32>
    %95 = math.exp %94 : vector<2x4xf32>
    %cst_29 = arith.constant dense<0.000000e+00> : vector<2xf32>
    %96 = vector.multi_reduction <add>, %95, %cst_29 [1] : vector<2x4xf32> to vector<2xf32>
    %97 = vector.shape_cast %96 : vector<2xf32> to vector<2x1xf32>
    %98 = vector.broadcast %97 : vector<2x1xf32> to vector<2x4xf32>
    %99 = arith.divf %95, %98 : vector<2x4xf32>
    %100 = vector.extract_strided_slice %99 {offsets = [0, 0], sizes = [2, 1], strides = [1, 1]} : vector<2x4xf32> to vector<2x1xf32>
    %101 = vector.broadcast %100 : vector<2x1xf32> to vector<2x32xf32>
    %102 = arith.mulf %101, %43 : vector<2x32xf32>
    %103 = vector.extract_strided_slice %99 {offsets = [0, 1], sizes = [2, 1], strides = [1, 1]} : vector<2x4xf32> to vector<2x1xf32>
    %104 = vector.broadcast %103 : vector<2x1xf32> to vector<2x32xf32>
    %105 = arith.mulf %104, %53 : vector<2x32xf32>
    %106 = arith.addf %102, %105 : vector<2x32xf32>
    %107 = vector.extract_strided_slice %99 {offsets = [0, 2], sizes = [2, 1], strides = [1, 1]} : vector<2x4xf32> to vector<2x1xf32>
    %108 = vector.broadcast %107 : vector<2x1xf32> to vector<2x32xf32>
    %109 = arith.mulf %108, %63 : vector<2x32xf32>
    %110 = arith.addf %106, %109 : vector<2x32xf32>
    %111 = vector.extract_strided_slice %99 {offsets = [0, 3], sizes = [2, 1], strides = [1, 1]} : vector<2x4xf32> to vector<2x1xf32>
    %112 = vector.broadcast %111 : vector<2x1xf32> to vector<2x32xf32>
    %113 = arith.mulf %112, %73 : vector<2x32xf32>
    %114 = arith.addf %110, %113 : vector<2x32xf32>
    %115 = arith.mulf %31, %11 : vector<2x32xf32>
    %116 = arith.addf %115, %114 : vector<2x32xf32>
    %117 = math.tanh %116 : vector<2x32xf32>
    %118 = arith.mulf %37, %117 : vector<2x32xf32>
    %119 = tpu.concatenate %118, %12 in 1 : vector<2x32xf32>, vector<2x32xf32> -> vector<2x64xf32>
    %cst_30 = arith.constant dense<0.000000e+00> : vector<2x128xf32>
    %120 = tpu.matmul %119, %7, %cst_30 {dimension_numbers = #tpu.dot_dimension_numbers<[1], [0], [0], [1], [0, 0, 1, 1], [], []>} : vector<2x64xf32>, vector<64x128xf32>, vector<2x128xf32> -> vector<2x128xf32>
    %121 = vector.broadcast %8 : vector<1x128xf32> to vector<2x128xf32>
    %122 = arith.addf %120, %121 : vector<2x128xf32>
    %123 = vector.extract_strided_slice %122 {offsets = [0, 0], sizes = [2, 32], strides = [1, 1]} : vector<2x128xf32> to vector<2x32xf32>
    %124 = arith.negf %123 : vector<2x32xf32>
    %125 = math.exp %124 : vector<2x32xf32>
    %cst_31 = arith.constant 1.000000e+00 : f32
    %126 = vector.broadcast %cst_31 : f32 to vector<2x32xf32>
    %127 = arith.addf %126, %125 : vector<2x32xf32>
    %128 = arith.divf %126, %127 : vector<2x32xf32>
    %129 = vector.extract_strided_slice %122 {offsets = [0, 32], sizes = [2, 32], strides = [1, 1]} : vector<2x128xf32> to vector<2x32xf32>
    %130 = arith.negf %129 : vector<2x32xf32>
    %131 = math.exp %130 : vector<2x32xf32>
    %cst_32 = arith.constant 1.000000e+00 : f32
    %132 = vector.broadcast %cst_32 : f32 to vector<2x32xf32>
    %133 = arith.addf %132, %131 : vector<2x32xf32>
    %134 = arith.divf %132, %133 : vector<2x32xf32>
    %135 = vector.extract_strided_slice %122 {offsets = [0, 64], sizes = [2, 32], strides = [1, 1]} : vector<2x128xf32> to vector<2x32xf32>
    %136 = math.tanh %135 : vector<2x32xf32>
    %137 = vector.extract_strided_slice %122 {offsets = [0, 96], sizes = [2, 32], strides = [1, 1]} : vector<2x128xf32> to vector<2x32xf32>
    %138 = arith.negf %137 : vector<2x32xf32>
    %139 = math.exp %138 : vector<2x32xf32>
    %cst_33 = arith.constant 1.000000e+00 : f32
    %140 = vector.broadcast %cst_33 : f32 to vector<2x32xf32>
    %141 = arith.addf %140, %139 : vector<2x32xf32>
    %142 = arith.divf %140, %141 : vector<2x32xf32>
    %143 = arith.mulf %134, %13 : vector<2x32xf32>
    %144 = arith.mulf %128, %136 : vector<2x32xf32>
    %145 = arith.addf %143, %144 : vector<2x32xf32>
    %146 = math.tanh %145 : vector<2x32xf32>
    %147 = arith.mulf %142, %146 : vector<2x32xf32>
    %148 = vector.extract_strided_slice %5 {offsets = [2, 0], sizes = [2, 320], strides = [1, 1]} : vector<16x320xf32> to vector<2x320xf32>
    %149 = tpu.concatenate %118, %116 in 1 : vector<2x32xf32>, vector<2x32xf32> -> vector<2x64xf32>
    %cst_34 = arith.constant dense<0.000000e+00> : vector<2x352xf32>
    %150 = tpu.matmul %149, %6, %cst_34 {dimension_numbers = #tpu.dot_dimension_numbers<[1], [0], [0], [1], [0, 0, 1, 1], [], []>} : vector<2x64xf32>, vector<64x352xf32>, vector<2x352xf32> -> vector<2x352xf32>
    %151 = vector.extract_strided_slice %148 {offsets = [0, 0], sizes = [2, 128], strides = [1, 1]} : vector<2x320xf32> to vector<2x128xf32>
    %152 = vector.extract_strided_slice %150 {offsets = [0, 0], sizes = [2, 128], strides = [1, 1]} : vector<2x352xf32> to vector<2x128xf32>
    %153 = arith.addf %151, %152 : vector<2x128xf32>
    %154 = vector.extract_strided_slice %153 {offsets = [0, 0], sizes = [2, 32], strides = [1, 1]} : vector<2x128xf32> to vector<2x32xf32>
    %155 = arith.negf %154 : vector<2x32xf32>
    %156 = math.exp %155 : vector<2x32xf32>
    %cst_35 = arith.constant 1.000000e+00 : f32
    %157 = vector.broadcast %cst_35 : f32 to vector<2x32xf32>
    %158 = arith.addf %157, %156 : vector<2x32xf32>
    %159 = arith.divf %157, %158 : vector<2x32xf32>
    %160 = vector.extract_strided_slice %153 {offsets = [0, 32], sizes = [2, 32], strides = [1, 1]} : vector<2x128xf32> to vector<2x32xf32>
    %161 = arith.negf %160 : vector<2x32xf32>
    %162 = math.exp %161 : vector<2x32xf32>
    %cst_36 = arith.constant 1.000000e+00 : f32
    %163 = vector.broadcast %cst_36 : f32 to vector<2x32xf32>
    %164 = arith.addf %163, %162 : vector<2x32xf32>
    %165 = arith.divf %163, %164 : vector<2x32xf32>
    %166 = vector.extract_strided_slice %153 {offsets = [0, 64], sizes = [2, 32], strides = [1, 1]} : vector<2x128xf32> to vector<2x32xf32>
    %167 = arith.negf %166 : vector<2x32xf32>
    %168 = math.exp %167 : vector<2x32xf32>
    %cst_37 = arith.constant 1.000000e+00 : f32
    %169 = vector.broadcast %cst_37 : f32 to vector<2x32xf32>
    %170 = arith.addf %169, %168 : vector<2x32xf32>
    %171 = arith.divf %169, %170 : vector<2x32xf32>
    %172 = vector.extract_strided_slice %153 {offsets = [0, 96], sizes = [2, 32], strides = [1, 1]} : vector<2x128xf32> to vector<2x32xf32>
    %173 = math.tanh %172 : vector<2x32xf32>
    %174 = vector.extract_strided_slice %148 {offsets = [0, 128], sizes = [2, 192], strides = [1, 1]} : vector<2x320xf32> to vector<2x192xf32>
    %175 = vector.extract_strided_slice %150 {offsets = [0, 128], sizes = [2, 192], strides = [1, 1]} : vector<2x352xf32> to vector<2x192xf32>
    %176 = arith.addf %174, %175 : vector<2x192xf32>
    %177 = arith.mulf %159, %173 : vector<2x32xf32>
    %178 = vector.extract_strided_slice %176 {offsets = [0, 0], sizes = [2, 64], strides = [1, 1]} : vector<2x192xf32> to vector<2x64xf32>
    %179 = vector.extract_strided_slice %178 {offsets = [0, 0], sizes = [2, 32], strides = [1, 1]} : vector<2x64xf32> to vector<2x32xf32>
    %180 = arith.negf %179 : vector<2x32xf32>
    %181 = math.exp %180 : vector<2x32xf32>
    %cst_38 = arith.constant 1.000000e+00 : f32
    %182 = vector.broadcast %cst_38 : f32 to vector<2x32xf32>
    %183 = arith.addf %182, %181 : vector<2x32xf32>
    %184 = arith.divf %182, %183 : vector<2x32xf32>
    %185 = vector.extract_strided_slice %178 {offsets = [0, 32], sizes = [2, 32], strides = [1, 1]} : vector<2x64xf32> to vector<2x32xf32>
    %186 = math.tanh %185 : vector<2x32xf32>
    %187 = arith.mulf %184, %186 : vector<2x32xf32>
    %188 = vector.extract_strided_slice %176 {offsets = [0, 64], sizes = [2, 64], strides = [1, 1]} : vector<2x192xf32> to vector<2x64xf32>
    %189 = vector.extract_strided_slice %188 {offsets = [0, 0], sizes = [2, 32], strides = [1, 1]} : vector<2x64xf32> to vector<2x32xf32>
    %190 = arith.negf %189 : vector<2x32xf32>
    %191 = math.exp %190 : vector<2x32xf32>
    %cst_39 = arith.constant 1.000000e+00 : f32
    %192 = vector.broadcast %cst_39 : f32 to vector<2x32xf32>
    %193 = arith.addf %192, %191 : vector<2x32xf32>
    %194 = arith.divf %192, %193 : vector<2x32xf32>
    %195 = vector.extract_strided_slice %188 {offsets = [0, 32], sizes = [2, 32], strides = [1, 1]} : vector<2x64xf32> to vector<2x32xf32>
    %196 = math.tanh %195 : vector<2x32xf32>
    %197 = arith.mulf %194, %196 : vector<2x32xf32>
    %198 = vector.extract_strided_slice %176 {offsets = [0, 128], sizes = [2, 64], strides = [1, 1]} : vector<2x192xf32> to vector<2x64xf32>
    %199 = vector.extract_strided_slice %198 {offsets = [0, 0], sizes = [2, 32], strides = [1, 1]} : vector<2x64xf32> to vector<2x32xf32>
    %200 = arith.negf %199 : vector<2x32xf32>
    %201 = math.exp %200 : vector<2x32xf32>
    %cst_40 = arith.constant 1.000000e+00 : f32
    %202 = vector.broadcast %cst_40 : f32 to vector<2x32xf32>
    %203 = arith.addf %202, %201 : vector<2x32xf32>
    %204 = arith.divf %202, %203 : vector<2x32xf32>
    %205 = vector.extract_strided_slice %198 {offsets = [0, 32], sizes = [2, 32], strides = [1, 1]} : vector<2x64xf32> to vector<2x32xf32>
    %206 = math.tanh %205 : vector<2x32xf32>
    %207 = arith.mulf %204, %206 : vector<2x32xf32>
    %208 = vector.extract_strided_slice %150 {offsets = [0, 320], sizes = [2, 32], strides = [1, 1]} : vector<2x352xf32> to vector<2x32xf32>
    %209 = arith.mulf %177, %208 : vector<2x32xf32>
    %cst_41 = arith.constant dense<0.000000e+00> : vector<2xf32>
    %210 = vector.multi_reduction <add>, %209, %cst_41 [1] : vector<2x32xf32> to vector<2xf32>
    %211 = vector.shape_cast %210 : vector<2xf32> to vector<2x1xf32>
    %212 = arith.mulf %187, %208 : vector<2x32xf32>
    %cst_42 = arith.constant dense<0.000000e+00> : vector<2xf32>
    %213 = vector.multi_reduction <add>, %212, %cst_42 [1] : vector<2x32xf32> to vector<2xf32>
    %214 = vector.shape_cast %213 : vector<2xf32> to vector<2x1xf32>
    %215 = arith.mulf %197, %208 : vector<2x32xf32>
    %cst_43 = arith.constant dense<0.000000e+00> : vector<2xf32>
    %216 = vector.multi_reduction <add>, %215, %cst_43 [1] : vector<2x32xf32> to vector<2xf32>
    %217 = vector.shape_cast %216 : vector<2xf32> to vector<2x1xf32>
    %218 = arith.mulf %207, %208 : vector<2x32xf32>
    %cst_44 = arith.constant dense<0.000000e+00> : vector<2xf32>
    %219 = vector.multi_reduction <add>, %218, %cst_44 [1] : vector<2x32xf32> to vector<2xf32>
    %220 = vector.shape_cast %219 : vector<2xf32> to vector<2x1xf32>
    %221 = tpu.concatenate %211, %214, %217, %220 in 1 : vector<2x1xf32>, vector<2x1xf32>, vector<2x1xf32>, vector<2x1xf32> -> vector<2x4xf32>
    %222 = vector.broadcast %9 : vector<1x1xf32> to vector<2x4xf32>
    %223 = arith.addf %221, %222 : vector<2x4xf32>
    %224 = math.tanh %223 : vector<2x4xf32>
    %cst_45 = arith.constant dense<0xFF800000> : vector<2xf32>
    %225 = vector.multi_reduction <maximumf>, %224, %cst_45 [1] : vector<2x4xf32> to vector<2xf32>
    %226 = vector.shape_cast %225 : vector<2xf32> to vector<2x1xf32>
    %227 = vector.broadcast %226 : vector<2x1xf32> to vector<2x4xf32>
    %228 = arith.subf %224, %227 : vector<2x4xf32>
    %229 = math.exp %228 : vector<2x4xf32>
    %cst_46 = arith.constant dense<0.000000e+00> : vector<2xf32>
    %230 = vector.multi_reduction <add>, %229, %cst_46 [1] : vector<2x4xf32> to vector<2xf32>
    %231 = vector.shape_cast %230 : vector<2xf32> to vector<2x1xf32>
    %232 = vector.broadcast %231 : vector<2x1xf32> to vector<2x4xf32>
    %233 = arith.divf %229, %232 : vector<2x4xf32>
    %234 = vector.extract_strided_slice %233 {offsets = [0, 0], sizes = [2, 1], strides = [1, 1]} : vector<2x4xf32> to vector<2x1xf32>
    %235 = vector.broadcast %234 : vector<2x1xf32> to vector<2x32xf32>
    %236 = arith.mulf %235, %177 : vector<2x32xf32>
    %237 = vector.extract_strided_slice %233 {offsets = [0, 1], sizes = [2, 1], strides = [1, 1]} : vector<2x4xf32> to vector<2x1xf32>
    %238 = vector.broadcast %237 : vector<2x1xf32> to vector<2x32xf32>
    %239 = arith.mulf %238, %187 : vector<2x32xf32>
    %240 = arith.addf %236, %239 : vector<2x32xf32>
    %241 = vector.extract_strided_slice %233 {offsets = [0, 2], sizes = [2, 1], strides = [1, 1]} : vector<2x4xf32> to vector<2x1xf32>
    %242 = vector.broadcast %241 : vector<2x1xf32> to vector<2x32xf32>
    %243 = arith.mulf %242, %197 : vector<2x32xf32>
    %244 = arith.addf %240, %243 : vector<2x32xf32>
    %245 = vector.extract_strided_slice %233 {offsets = [0, 3], sizes = [2, 1], strides = [1, 1]} : vector<2x4xf32> to vector<2x1xf32>
    %246 = vector.broadcast %245 : vector<2x1xf32> to vector<2x32xf32>
    %247 = arith.mulf %246, %207 : vector<2x32xf32>
    %248 = arith.addf %244, %247 : vector<2x32xf32>
    %249 = arith.mulf %165, %116 : vector<2x32xf32>
    %250 = arith.addf %249, %248 : vector<2x32xf32>
    %251 = math.tanh %250 : vector<2x32xf32>
    %252 = arith.mulf %171, %251 : vector<2x32xf32>
    %253 = tpu.concatenate %252, %147 in 1 : vector<2x32xf32>, vector<2x32xf32> -> vector<2x64xf32>
    %cst_47 = arith.constant dense<0.000000e+00> : vector<2x128xf32>
    %254 = tpu.matmul %253, %7, %cst_47 {dimension_numbers = #tpu.dot_dimension_numbers<[1], [0], [0], [1], [0, 0, 1, 1], [], []>} : vector<2x64xf32>, vector<64x128xf32>, vector<2x128xf32> -> vector<2x128xf32>
    %255 = vector.broadcast %8 : vector<1x128xf32> to vector<2x128xf32>
    %256 = arith.addf %254, %255 : vector<2x128xf32>
    %257 = vector.extract_strided_slice %256 {offsets = [0, 0], sizes = [2, 32], strides = [1, 1]} : vector<2x128xf32> to vector<2x32xf32>
    %258 = arith.negf %257 : vector<2x32xf32>
    %259 = math.exp %258 : vector<2x32xf32>
    %cst_48 = arith.constant 1.000000e+00 : f32
    %260 = vector.broadcast %cst_48 : f32 to vector<2x32xf32>
    %261 = arith.addf %260, %259 : vector<2x32xf32>
    %262 = arith.divf %260, %261 : vector<2x32xf32>
    %263 = vector.extract_strided_slice %256 {offsets = [0, 32], sizes = [2, 32], strides = [1, 1]} : vector<2x128xf32> to vector<2x32xf32>
    %264 = arith.negf %263 : vector<2x32xf32>
    %265 = math.exp %264 : vector<2x32xf32>
    %cst_49 = arith.constant 1.000000e+00 : f32
    %266 = vector.broadcast %cst_49 : f32 to vector<2x32xf32>
    %267 = arith.addf %266, %265 : vector<2x32xf32>
    %268 = arith.divf %266, %267 : vector<2x32xf32>
    %269 = vector.extract_strided_slice %256 {offsets = [0, 64], sizes = [2, 32], strides = [1, 1]} : vector<2x128xf32> to vector<2x32xf32>
    %270 = math.tanh %269 : vector<2x32xf32>
    %271 = vector.extract_strided_slice %256 {offsets = [0, 96], sizes = [2, 32], strides = [1, 1]} : vector<2x128xf32> to vector<2x32xf32>
    %272 = arith.negf %271 : vector<2x32xf32>
    %273 = math.exp %272 : vector<2x32xf32>
    %cst_50 = arith.constant 1.000000e+00 : f32
    %274 = vector.broadcast %cst_50 : f32 to vector<2x32xf32>
    %275 = arith.addf %274, %273 : vector<2x32xf32>
    %276 = arith.divf %274, %275 : vector<2x32xf32>
    %277 = arith.mulf %268, %145 : vector<2x32xf32>
    %278 = arith.mulf %262, %270 : vector<2x32xf32>
    %279 = arith.addf %277, %278 : vector<2x32xf32>
    %280 = math.tanh %279 : vector<2x32xf32>
    %281 = arith.mulf %276, %280 : vector<2x32xf32>
    %282 = vector.extract_strided_slice %5 {offsets = [4, 0], sizes = [2, 320], strides = [1, 1]} : vector<16x320xf32> to vector<2x320xf32>
    %283 = tpu.concatenate %252, %250 in 1 : vector<2x32xf32>, vector<2x32xf32> -> vector<2x64xf32>
    %cst_51 = arith.constant dense<0.000000e+00> : vector<2x352xf32>
    %284 = tpu.matmul %283, %6, %cst_51 {dimension_numbers = #tpu.dot_dimension_numbers<[1], [0], [0], [1], [0, 0, 1, 1], [], []>} : vector<2x64xf32>, vector<64x352xf32>, vector<2x352xf32> -> vector<2x352xf32>
    %285 = vector.extract_strided_slice %282 {offsets = [0, 0], sizes = [2, 128], strides = [1, 1]} : vector<2x320xf32> to vector<2x128xf32>
    %286 = vector.extract_strided_slice %284 {offsets = [0, 0], sizes = [2, 128], strides = [1, 1]} : vector<2x352xf32> to vector<2x128xf32>
    %287 = arith.addf %285, %286 : vector<2x128xf32>
    %288 = vector.extract_strided_slice %287 {offsets = [0, 0], sizes = [2, 32], strides = [1, 1]} : vector<2x128xf32> to vector<2x32xf32>
    %289 = arith.negf %288 : vector<2x32xf32>
    %290 = math.exp %289 : vector<2x32xf32>
    %cst_52 = arith.constant 1.000000e+00 : f32
    %291 = vector.broadcast %cst_52 : f32 to vector<2x32xf32>
    %292 = arith.addf %291, %290 : vector<2x32xf32>
    %293 = arith.divf %291, %292 : vector<2x32xf32>
    %294 = vector.extract_strided_slice %287 {offsets = [0, 32], sizes = [2, 32], strides = [1, 1]} : vector<2x128xf32> to vector<2x32xf32>
    %295 = arith.negf %294 : vector<2x32xf32>
    %296 = math.exp %295 : vector<2x32xf32>
    %cst_53 = arith.constant 1.000000e+00 : f32
    %297 = vector.broadcast %cst_53 : f32 to vector<2x32xf32>
    %298 = arith.addf %297, %296 : vector<2x32xf32>
    %299 = arith.divf %297, %298 : vector<2x32xf32>
    %300 = vector.extract_strided_slice %287 {offsets = [0, 64], sizes = [2, 32], strides = [1, 1]} : vector<2x128xf32> to vector<2x32xf32>
    %301 = arith.negf %300 : vector<2x32xf32>
    %302 = math.exp %301 : vector<2x32xf32>
    %cst_54 = arith.constant 1.000000e+00 : f32
    %303 = vector.broadcast %cst_54 : f32 to vector<2x32xf32>
    %304 = arith.addf %303, %302 : vector<2x32xf32>
    %305 = arith.divf %303, %304 : vector<2x32xf32>
    %306 = vector.extract_strided_slice %287 {offsets = [0, 96], sizes = [2, 32], strides = [1, 1]} : vector<2x128xf32> to vector<2x32xf32>
    %307 = math.tanh %306 : vector<2x32xf32>
    %308 = vector.extract_strided_slice %282 {offsets = [0, 128], sizes = [2, 192], strides = [1, 1]} : vector<2x320xf32> to vector<2x192xf32>
    %309 = vector.extract_strided_slice %284 {offsets = [0, 128], sizes = [2, 192], strides = [1, 1]} : vector<2x352xf32> to vector<2x192xf32>
    %310 = arith.addf %308, %309 : vector<2x192xf32>
    %311 = arith.mulf %293, %307 : vector<2x32xf32>
    %312 = vector.extract_strided_slice %310 {offsets = [0, 0], sizes = [2, 64], strides = [1, 1]} : vector<2x192xf32> to vector<2x64xf32>
    %313 = vector.extract_strided_slice %312 {offsets = [0, 0], sizes = [2, 32], strides = [1, 1]} : vector<2x64xf32> to vector<2x32xf32>
    %314 = arith.negf %313 : vector<2x32xf32>
    %315 = math.exp %314 : vector<2x32xf32>
    %cst_55 = arith.constant 1.000000e+00 : f32
    %316 = vector.broadcast %cst_55 : f32 to vector<2x32xf32>
    %317 = arith.addf %316, %315 : vector<2x32xf32>
    %318 = arith.divf %316, %317 : vector<2x32xf32>
    %319 = vector.extract_strided_slice %312 {offsets = [0, 32], sizes = [2, 32], strides = [1, 1]} : vector<2x64xf32> to vector<2x32xf32>
    %320 = math.tanh %319 : vector<2x32xf32>
    %321 = arith.mulf %318, %320 : vector<2x32xf32>
    %322 = vector.extract_strided_slice %310 {offsets = [0, 64], sizes = [2, 64], strides = [1, 1]} : vector<2x192xf32> to vector<2x64xf32>
    %323 = vector.extract_strided_slice %322 {offsets = [0, 0], sizes = [2, 32], strides = [1, 1]} : vector<2x64xf32> to vector<2x32xf32>
    %324 = arith.negf %323 : vector<2x32xf32>
    %325 = math.exp %324 : vector<2x32xf32>
    %cst_56 = arith.constant 1.000000e+00 : f32
    %326 = vector.broadcast %cst_56 : f32 to vector<2x32xf32>
    %327 = arith.addf %326, %325 : vector<2x32xf32>
    %328 = arith.divf %326, %327 : vector<2x32xf32>
    %329 = vector.extract_strided_slice %322 {offsets = [0, 32], sizes = [2, 32], strides = [1, 1]} : vector<2x64xf32> to vector<2x32xf32>
    %330 = math.tanh %329 : vector<2x32xf32>
    %331 = arith.mulf %328, %330 : vector<2x32xf32>
    %332 = vector.extract_strided_slice %310 {offsets = [0, 128], sizes = [2, 64], strides = [1, 1]} : vector<2x192xf32> to vector<2x64xf32>
    %333 = vector.extract_strided_slice %332 {offsets = [0, 0], sizes = [2, 32], strides = [1, 1]} : vector<2x64xf32> to vector<2x32xf32>
    %334 = arith.negf %333 : vector<2x32xf32>
    %335 = math.exp %334 : vector<2x32xf32>
    %cst_57 = arith.constant 1.000000e+00 : f32
    %336 = vector.broadcast %cst_57 : f32 to vector<2x32xf32>
    %337 = arith.addf %336, %335 : vector<2x32xf32>
    %338 = arith.divf %336, %337 : vector<2x32xf32>
    %339 = vector.extract_strided_slice %332 {offsets = [0, 32], sizes = [2, 32], strides = [1, 1]} : vector<2x64xf32> to vector<2x32xf32>
    %340 = math.tanh %339 : vector<2x32xf32>
    %341 = arith.mulf %338, %340 : vector<2x32xf32>
    %342 = vector.extract_strided_slice %284 {offsets = [0, 320], sizes = [2, 32], strides = [1, 1]} : vector<2x352xf32> to vector<2x32xf32>
    %343 = arith.mulf %311, %342 : vector<2x32xf32>
    %cst_58 = arith.constant dense<0.000000e+00> : vector<2xf32>
    %344 = vector.multi_reduction <add>, %343, %cst_58 [1] : vector<2x32xf32> to vector<2xf32>
    %345 = vector.shape_cast %344 : vector<2xf32> to vector<2x1xf32>
    %346 = arith.mulf %321, %342 : vector<2x32xf32>
    %cst_59 = arith.constant dense<0.000000e+00> : vector<2xf32>
    %347 = vector.multi_reduction <add>, %346, %cst_59 [1] : vector<2x32xf32> to vector<2xf32>
    %348 = vector.shape_cast %347 : vector<2xf32> to vector<2x1xf32>
    %349 = arith.mulf %331, %342 : vector<2x32xf32>
    %cst_60 = arith.constant dense<0.000000e+00> : vector<2xf32>
    %350 = vector.multi_reduction <add>, %349, %cst_60 [1] : vector<2x32xf32> to vector<2xf32>
    %351 = vector.shape_cast %350 : vector<2xf32> to vector<2x1xf32>
    %352 = arith.mulf %341, %342 : vector<2x32xf32>
    %cst_61 = arith.constant dense<0.000000e+00> : vector<2xf32>
    %353 = vector.multi_reduction <add>, %352, %cst_61 [1] : vector<2x32xf32> to vector<2xf32>
    %354 = vector.shape_cast %353 : vector<2xf32> to vector<2x1xf32>
    %355 = tpu.concatenate %345, %348, %351, %354 in 1 : vector<2x1xf32>, vector<2x1xf32>, vector<2x1xf32>, vector<2x1xf32> -> vector<2x4xf32>
    %356 = vector.broadcast %9 : vector<1x1xf32> to vector<2x4xf32>
    %357 = arith.addf %355, %356 : vector<2x4xf32>
    %358 = math.tanh %357 : vector<2x4xf32>
    %cst_62 = arith.constant dense<0xFF800000> : vector<2xf32>
    %359 = vector.multi_reduction <maximumf>, %358, %cst_62 [1] : vector<2x4xf32> to vector<2xf32>
    %360 = vector.shape_cast %359 : vector<2xf32> to vector<2x1xf32>
    %361 = vector.broadcast %360 : vector<2x1xf32> to vector<2x4xf32>
    %362 = arith.subf %358, %361 : vector<2x4xf32>
    %363 = math.exp %362 : vector<2x4xf32>
    %cst_63 = arith.constant dense<0.000000e+00> : vector<2xf32>
    %364 = vector.multi_reduction <add>, %363, %cst_63 [1] : vector<2x4xf32> to vector<2xf32>
    %365 = vector.shape_cast %364 : vector<2xf32> to vector<2x1xf32>
    %366 = vector.broadcast %365 : vector<2x1xf32> to vector<2x4xf32>
    %367 = arith.divf %363, %366 : vector<2x4xf32>
    %368 = vector.extract_strided_slice %367 {offsets = [0, 0], sizes = [2, 1], strides = [1, 1]} : vector<2x4xf32> to vector<2x1xf32>
    %369 = vector.broadcast %368 : vector<2x1xf32> to vector<2x32xf32>
    %370 = arith.mulf %369, %311 : vector<2x32xf32>
    %371 = vector.extract_strided_slice %367 {offsets = [0, 1], sizes = [2, 1], strides = [1, 1]} : vector<2x4xf32> to vector<2x1xf32>
    %372 = vector.broadcast %371 : vector<2x1xf32> to vector<2x32xf32>
    %373 = arith.mulf %372, %321 : vector<2x32xf32>
    %374 = arith.addf %370, %373 : vector<2x32xf32>
    %375 = vector.extract_strided_slice %367 {offsets = [0, 2], sizes = [2, 1], strides = [1, 1]} : vector<2x4xf32> to vector<2x1xf32>
    %376 = vector.broadcast %375 : vector<2x1xf32> to vector<2x32xf32>
    %377 = arith.mulf %376, %331 : vector<2x32xf32>
    %378 = arith.addf %374, %377 : vector<2x32xf32>
    %379 = vector.extract_strided_slice %367 {offsets = [0, 3], sizes = [2, 1], strides = [1, 1]} : vector<2x4xf32> to vector<2x1xf32>
    %380 = vector.broadcast %379 : vector<2x1xf32> to vector<2x32xf32>
    %381 = arith.mulf %380, %341 : vector<2x32xf32>
    %382 = arith.addf %378, %381 : vector<2x32xf32>
    %383 = arith.mulf %299, %250 : vector<2x32xf32>
    %384 = arith.addf %383, %382 : vector<2x32xf32>
    %385 = math.tanh %384 : vector<2x32xf32>
    %386 = arith.mulf %305, %385 : vector<2x32xf32>
    %387 = tpu.concatenate %386, %281 in 1 : vector<2x32xf32>, vector<2x32xf32> -> vector<2x64xf32>
    %cst_64 = arith.constant dense<0.000000e+00> : vector<2x128xf32>
    %388 = tpu.matmul %387, %7, %cst_64 {dimension_numbers = #tpu.dot_dimension_numbers<[1], [0], [0], [1], [0, 0, 1, 1], [], []>} : vector<2x64xf32>, vector<64x128xf32>, vector<2x128xf32> -> vector<2x128xf32>
    %389 = vector.broadcast %8 : vector<1x128xf32> to vector<2x128xf32>
    %390 = arith.addf %388, %389 : vector<2x128xf32>
    %391 = vector.extract_strided_slice %390 {offsets = [0, 0], sizes = [2, 32], strides = [1, 1]} : vector<2x128xf32> to vector<2x32xf32>
    %392 = arith.negf %391 : vector<2x32xf32>
    %393 = math.exp %392 : vector<2x32xf32>
    %cst_65 = arith.constant 1.000000e+00 : f32
    %394 = vector.broadcast %cst_65 : f32 to vector<2x32xf32>
    %395 = arith.addf %394, %393 : vector<2x32xf32>
    %396 = arith.divf %394, %395 : vector<2x32xf32>
    %397 = vector.extract_strided_slice %390 {offsets = [0, 32], sizes = [2, 32], strides = [1, 1]} : vector<2x128xf32> to vector<2x32xf32>
    %398 = arith.negf %397 : vector<2x32xf32>
    %399 = math.exp %398 : vector<2x32xf32>
    %cst_66 = arith.constant 1.000000e+00 : f32
    %400 = vector.broadcast %cst_66 : f32 to vector<2x32xf32>
    %401 = arith.addf %400, %399 : vector<2x32xf32>
    %402 = arith.divf %400, %401 : vector<2x32xf32>
    %403 = vector.extract_strided_slice %390 {offsets = [0, 64], sizes = [2, 32], strides = [1, 1]} : vector<2x128xf32> to vector<2x32xf32>
    %404 = math.tanh %403 : vector<2x32xf32>
    %405 = vector.extract_strided_slice %390 {offsets = [0, 96], sizes = [2, 32], strides = [1, 1]} : vector<2x128xf32> to vector<2x32xf32>
    %406 = arith.negf %405 : vector<2x32xf32>
    %407 = math.exp %406 : vector<2x32xf32>
    %cst_67 = arith.constant 1.000000e+00 : f32
    %408 = vector.broadcast %cst_67 : f32 to vector<2x32xf32>
    %409 = arith.addf %408, %407 : vector<2x32xf32>
    %410 = arith.divf %408, %409 : vector<2x32xf32>
    %411 = arith.mulf %402, %279 : vector<2x32xf32>
    %412 = arith.mulf %396, %404 : vector<2x32xf32>
    %413 = arith.addf %411, %412 : vector<2x32xf32>
    %414 = math.tanh %413 : vector<2x32xf32>
    %415 = arith.mulf %410, %414 : vector<2x32xf32>
    %416 = vector.extract_strided_slice %5 {offsets = [6, 0], sizes = [2, 320], strides = [1, 1]} : vector<16x320xf32> to vector<2x320xf32>
    %417 = tpu.concatenate %386, %384 in 1 : vector<2x32xf32>, vector<2x32xf32> -> vector<2x64xf32>
    %cst_68 = arith.constant dense<0.000000e+00> : vector<2x352xf32>
    %418 = tpu.matmul %417, %6, %cst_68 {dimension_numbers = #tpu.dot_dimension_numbers<[1], [0], [0], [1], [0, 0, 1, 1], [], []>} : vector<2x64xf32>, vector<64x352xf32>, vector<2x352xf32> -> vector<2x352xf32>
    %419 = vector.extract_strided_slice %416 {offsets = [0, 0], sizes = [2, 128], strides = [1, 1]} : vector<2x320xf32> to vector<2x128xf32>
    %420 = vector.extract_strided_slice %418 {offsets = [0, 0], sizes = [2, 128], strides = [1, 1]} : vector<2x352xf32> to vector<2x128xf32>
    %421 = arith.addf %419, %420 : vector<2x128xf32>
    %422 = vector.extract_strided_slice %421 {offsets = [0, 0], sizes = [2, 32], strides = [1, 1]} : vector<2x128xf32> to vector<2x32xf32>
    %423 = arith.negf %422 : vector<2x32xf32>
    %424 = math.exp %423 : vector<2x32xf32>
    %cst_69 = arith.constant 1.000000e+00 : f32
    %425 = vector.broadcast %cst_69 : f32 to vector<2x32xf32>
    %426 = arith.addf %425, %424 : vector<2x32xf32>
    %427 = arith.divf %425, %426 : vector<2x32xf32>
    %428 = vector.extract_strided_slice %421 {offsets = [0, 32], sizes = [2, 32], strides = [1, 1]} : vector<2x128xf32> to vector<2x32xf32>
    %429 = arith.negf %428 : vector<2x32xf32>
    %430 = math.exp %429 : vector<2x32xf32>
    %cst_70 = arith.constant 1.000000e+00 : f32
    %431 = vector.broadcast %cst_70 : f32 to vector<2x32xf32>
    %432 = arith.addf %431, %430 : vector<2x32xf32>
    %433 = arith.divf %431, %432 : vector<2x32xf32>
    %434 = vector.extract_strided_slice %421 {offsets = [0, 64], sizes = [2, 32], strides = [1, 1]} : vector<2x128xf32> to vector<2x32xf32>
    %435 = arith.negf %434 : vector<2x32xf32>
    %436 = math.exp %435 : vector<2x32xf32>
    %cst_71 = arith.constant 1.000000e+00 : f32
    %437 = vector.broadcast %cst_71 : f32 to vector<2x32xf32>
    %438 = arith.addf %437, %436 : vector<2x32xf32>
    %439 = arith.divf %437, %438 : vector<2x32xf32>
    %440 = vector.extract_strided_slice %421 {offsets = [0, 96], sizes = [2, 32], strides = [1, 1]} : vector<2x128xf32> to vector<2x32xf32>
    %441 = math.tanh %440 : vector<2x32xf32>
    %442 = vector.extract_strided_slice %416 {offsets = [0, 128], sizes = [2, 192], strides = [1, 1]} : vector<2x320xf32> to vector<2x192xf32>
    %443 = vector.extract_strided_slice %418 {offsets = [0, 128], sizes = [2, 192], strides = [1, 1]} : vector<2x352xf32> to vector<2x192xf32>
    %444 = arith.addf %442, %443 : vector<2x192xf32>
    %445 = arith.mulf %427, %441 : vector<2x32xf32>
    %446 = vector.extract_strided_slice %444 {offsets = [0, 0], sizes = [2, 64], strides = [1, 1]} : vector<2x192xf32> to vector<2x64xf32>
    %447 = vector.extract_strided_slice %446 {offsets = [0, 0], sizes = [2, 32], strides = [1, 1]} : vector<2x64xf32> to vector<2x32xf32>
    %448 = arith.negf %447 : vector<2x32xf32>
    %449 = math.exp %448 : vector<2x32xf32>
    %cst_72 = arith.constant 1.000000e+00 : f32
    %450 = vector.broadcast %cst_72 : f32 to vector<2x32xf32>
    %451 = arith.addf %450, %449 : vector<2x32xf32>
    %452 = arith.divf %450, %451 : vector<2x32xf32>
    %453 = vector.extract_strided_slice %446 {offsets = [0, 32], sizes = [2, 32], strides = [1, 1]} : vector<2x64xf32> to vector<2x32xf32>
    %454 = math.tanh %453 : vector<2x32xf32>
    %455 = arith.mulf %452, %454 : vector<2x32xf32>
    %456 = vector.extract_strided_slice %444 {offsets = [0, 64], sizes = [2, 64], strides = [1, 1]} : vector<2x192xf32> to vector<2x64xf32>
    %457 = vector.extract_strided_slice %456 {offsets = [0, 0], sizes = [2, 32], strides = [1, 1]} : vector<2x64xf32> to vector<2x32xf32>
    %458 = arith.negf %457 : vector<2x32xf32>
    %459 = math.exp %458 : vector<2x32xf32>
    %cst_73 = arith.constant 1.000000e+00 : f32
    %460 = vector.broadcast %cst_73 : f32 to vector<2x32xf32>
    %461 = arith.addf %460, %459 : vector<2x32xf32>
    %462 = arith.divf %460, %461 : vector<2x32xf32>
    %463 = vector.extract_strided_slice %456 {offsets = [0, 32], sizes = [2, 32], strides = [1, 1]} : vector<2x64xf32> to vector<2x32xf32>
    %464 = math.tanh %463 : vector<2x32xf32>
    %465 = arith.mulf %462, %464 : vector<2x32xf32>
    %466 = vector.extract_strided_slice %444 {offsets = [0, 128], sizes = [2, 64], strides = [1, 1]} : vector<2x192xf32> to vector<2x64xf32>
    %467 = vector.extract_strided_slice %466 {offsets = [0, 0], sizes = [2, 32], strides = [1, 1]} : vector<2x64xf32> to vector<2x32xf32>
    %468 = arith.negf %467 : vector<2x32xf32>
    %469 = math.exp %468 : vector<2x32xf32>
    %cst_74 = arith.constant 1.000000e+00 : f32
    %470 = vector.broadcast %cst_74 : f32 to vector<2x32xf32>
    %471 = arith.addf %470, %469 : vector<2x32xf32>
    %472 = arith.divf %470, %471 : vector<2x32xf32>
    %473 = vector.extract_strided_slice %466 {offsets = [0, 32], sizes = [2, 32], strides = [1, 1]} : vector<2x64xf32> to vector<2x32xf32>
    %474 = math.tanh %473 : vector<2x32xf32>
    %475 = arith.mulf %472, %474 : vector<2x32xf32>
    %476 = vector.extract_strided_slice %418 {offsets = [0, 320], sizes = [2, 32], strides = [1, 1]} : vector<2x352xf32> to vector<2x32xf32>
    %477 = arith.mulf %445, %476 : vector<2x32xf32>
    %cst_75 = arith.constant dense<0.000000e+00> : vector<2xf32>
    %478 = vector.multi_reduction <add>, %477, %cst_75 [1] : vector<2x32xf32> to vector<2xf32>
    %479 = vector.shape_cast %478 : vector<2xf32> to vector<2x1xf32>
    %480 = arith.mulf %455, %476 : vector<2x32xf32>
    %cst_76 = arith.constant dense<0.000000e+00> : vector<2xf32>
    %481 = vector.multi_reduction <add>, %480, %cst_76 [1] : vector<2x32xf32> to vector<2xf32>
    %482 = vector.shape_cast %481 : vector<2xf32> to vector<2x1xf32>
    %483 = arith.mulf %465, %476 : vector<2x32xf32>
    %cst_77 = arith.constant dense<0.000000e+00> : vector<2xf32>
    %484 = vector.multi_reduction <add>, %483, %cst_77 [1] : vector<2x32xf32> to vector<2xf32>
    %485 = vector.shape_cast %484 : vector<2xf32> to vector<2x1xf32>
    %486 = arith.mulf %475, %476 : vector<2x32xf32>
    %cst_78 = arith.constant dense<0.000000e+00> : vector<2xf32>
    %487 = vector.multi_reduction <add>, %486, %cst_78 [1] : vector<2x32xf32> to vector<2xf32>
    %488 = vector.shape_cast %487 : vector<2xf32> to vector<2x1xf32>
    %489 = tpu.concatenate %479, %482, %485, %488 in 1 : vector<2x1xf32>, vector<2x1xf32>, vector<2x1xf32>, vector<2x1xf32> -> vector<2x4xf32>
    %490 = vector.broadcast %9 : vector<1x1xf32> to vector<2x4xf32>
    %491 = arith.addf %489, %490 : vector<2x4xf32>
    %492 = math.tanh %491 : vector<2x4xf32>
    %cst_79 = arith.constant dense<0xFF800000> : vector<2xf32>
    %493 = vector.multi_reduction <maximumf>, %492, %cst_79 [1] : vector<2x4xf32> to vector<2xf32>
    %494 = vector.shape_cast %493 : vector<2xf32> to vector<2x1xf32>
    %495 = vector.broadcast %494 : vector<2x1xf32> to vector<2x4xf32>
    %496 = arith.subf %492, %495 : vector<2x4xf32>
    %497 = math.exp %496 : vector<2x4xf32>
    %cst_80 = arith.constant dense<0.000000e+00> : vector<2xf32>
    %498 = vector.multi_reduction <add>, %497, %cst_80 [1] : vector<2x4xf32> to vector<2xf32>
    %499 = vector.shape_cast %498 : vector<2xf32> to vector<2x1xf32>
    %500 = vector.broadcast %499 : vector<2x1xf32> to vector<2x4xf32>
    %501 = arith.divf %497, %500 : vector<2x4xf32>
    %502 = vector.extract_strided_slice %501 {offsets = [0, 0], sizes = [2, 1], strides = [1, 1]} : vector<2x4xf32> to vector<2x1xf32>
    %503 = vector.broadcast %502 : vector<2x1xf32> to vector<2x32xf32>
    %504 = arith.mulf %503, %445 : vector<2x32xf32>
    %505 = vector.extract_strided_slice %501 {offsets = [0, 1], sizes = [2, 1], strides = [1, 1]} : vector<2x4xf32> to vector<2x1xf32>
    %506 = vector.broadcast %505 : vector<2x1xf32> to vector<2x32xf32>
    %507 = arith.mulf %506, %455 : vector<2x32xf32>
    %508 = arith.addf %504, %507 : vector<2x32xf32>
    %509 = vector.extract_strided_slice %501 {offsets = [0, 2], sizes = [2, 1], strides = [1, 1]} : vector<2x4xf32> to vector<2x1xf32>
    %510 = vector.broadcast %509 : vector<2x1xf32> to vector<2x32xf32>
    %511 = arith.mulf %510, %465 : vector<2x32xf32>
    %512 = arith.addf %508, %511 : vector<2x32xf32>
    %513 = vector.extract_strided_slice %501 {offsets = [0, 3], sizes = [2, 1], strides = [1, 1]} : vector<2x4xf32> to vector<2x1xf32>
    %514 = vector.broadcast %513 : vector<2x1xf32> to vector<2x32xf32>
    %515 = arith.mulf %514, %475 : vector<2x32xf32>
    %516 = arith.addf %512, %515 : vector<2x32xf32>
    %517 = arith.mulf %433, %384 : vector<2x32xf32>
    %518 = arith.addf %517, %516 : vector<2x32xf32>
    %519 = math.tanh %518 : vector<2x32xf32>
    %520 = arith.mulf %439, %519 : vector<2x32xf32>
    %521 = tpu.concatenate %520, %415 in 1 : vector<2x32xf32>, vector<2x32xf32> -> vector<2x64xf32>
    %cst_81 = arith.constant dense<0.000000e+00> : vector<2x128xf32>
    %522 = tpu.matmul %521, %7, %cst_81 {dimension_numbers = #tpu.dot_dimension_numbers<[1], [0], [0], [1], [0, 0, 1, 1], [], []>} : vector<2x64xf32>, vector<64x128xf32>, vector<2x128xf32> -> vector<2x128xf32>
    %523 = vector.broadcast %8 : vector<1x128xf32> to vector<2x128xf32>
    %524 = arith.addf %522, %523 : vector<2x128xf32>
    %525 = vector.extract_strided_slice %524 {offsets = [0, 0], sizes = [2, 32], strides = [1, 1]} : vector<2x128xf32> to vector<2x32xf32>
    %526 = arith.negf %525 : vector<2x32xf32>
    %527 = math.exp %526 : vector<2x32xf32>
    %cst_82 = arith.constant 1.000000e+00 : f32
    %528 = vector.broadcast %cst_82 : f32 to vector<2x32xf32>
    %529 = arith.addf %528, %527 : vector<2x32xf32>
    %530 = arith.divf %528, %529 : vector<2x32xf32>
    %531 = vector.extract_strided_slice %524 {offsets = [0, 32], sizes = [2, 32], strides = [1, 1]} : vector<2x128xf32> to vector<2x32xf32>
    %532 = arith.negf %531 : vector<2x32xf32>
    %533 = math.exp %532 : vector<2x32xf32>
    %cst_83 = arith.constant 1.000000e+00 : f32
    %534 = vector.broadcast %cst_83 : f32 to vector<2x32xf32>
    %535 = arith.addf %534, %533 : vector<2x32xf32>
    %536 = arith.divf %534, %535 : vector<2x32xf32>
    %537 = vector.extract_strided_slice %524 {offsets = [0, 64], sizes = [2, 32], strides = [1, 1]} : vector<2x128xf32> to vector<2x32xf32>
    %538 = math.tanh %537 : vector<2x32xf32>
    %539 = vector.extract_strided_slice %524 {offsets = [0, 96], sizes = [2, 32], strides = [1, 1]} : vector<2x128xf32> to vector<2x32xf32>
    %540 = arith.negf %539 : vector<2x32xf32>
    %541 = math.exp %540 : vector<2x32xf32>
    %cst_84 = arith.constant 1.000000e+00 : f32
    %542 = vector.broadcast %cst_84 : f32 to vector<2x32xf32>
    %543 = arith.addf %542, %541 : vector<2x32xf32>
    %544 = arith.divf %542, %543 : vector<2x32xf32>
    %545 = arith.mulf %536, %413 : vector<2x32xf32>
    %546 = arith.mulf %530, %538 : vector<2x32xf32>
    %547 = arith.addf %545, %546 : vector<2x32xf32>
    %548 = math.tanh %547 : vector<2x32xf32>
    %549 = arith.mulf %544, %548 : vector<2x32xf32>
    %550 = vector.extract_strided_slice %5 {offsets = [8, 0], sizes = [2, 320], strides = [1, 1]} : vector<16x320xf32> to vector<2x320xf32>
    %551 = tpu.concatenate %520, %518 in 1 : vector<2x32xf32>, vector<2x32xf32> -> vector<2x64xf32>
    %cst_85 = arith.constant dense<0.000000e+00> : vector<2x352xf32>
    %552 = tpu.matmul %551, %6, %cst_85 {dimension_numbers = #tpu.dot_dimension_numbers<[1], [0], [0], [1], [0, 0, 1, 1], [], []>} : vector<2x64xf32>, vector<64x352xf32>, vector<2x352xf32> -> vector<2x352xf32>
    %553 = vector.extract_strided_slice %550 {offsets = [0, 0], sizes = [2, 128], strides = [1, 1]} : vector<2x320xf32> to vector<2x128xf32>
    %554 = vector.extract_strided_slice %552 {offsets = [0, 0], sizes = [2, 128], strides = [1, 1]} : vector<2x352xf32> to vector<2x128xf32>
    %555 = arith.addf %553, %554 : vector<2x128xf32>
    %556 = vector.extract_strided_slice %555 {offsets = [0, 0], sizes = [2, 32], strides = [1, 1]} : vector<2x128xf32> to vector<2x32xf32>
    %557 = arith.negf %556 : vector<2x32xf32>
    %558 = math.exp %557 : vector<2x32xf32>
    %cst_86 = arith.constant 1.000000e+00 : f32
    %559 = vector.broadcast %cst_86 : f32 to vector<2x32xf32>
    %560 = arith.addf %559, %558 : vector<2x32xf32>
    %561 = arith.divf %559, %560 : vector<2x32xf32>
    %562 = vector.extract_strided_slice %555 {offsets = [0, 32], sizes = [2, 32], strides = [1, 1]} : vector<2x128xf32> to vector<2x32xf32>
    %563 = arith.negf %562 : vector<2x32xf32>
    %564 = math.exp %563 : vector<2x32xf32>
    %cst_87 = arith.constant 1.000000e+00 : f32
    %565 = vector.broadcast %cst_87 : f32 to vector<2x32xf32>
    %566 = arith.addf %565, %564 : vector<2x32xf32>
    %567 = arith.divf %565, %566 : vector<2x32xf32>
    %568 = vector.extract_strided_slice %555 {offsets = [0, 64], sizes = [2, 32], strides = [1, 1]} : vector<2x128xf32> to vector<2x32xf32>
    %569 = arith.negf %568 : vector<2x32xf32>
    %570 = math.exp %569 : vector<2x32xf32>
    %cst_88 = arith.constant 1.000000e+00 : f32
    %571 = vector.broadcast %cst_88 : f32 to vector<2x32xf32>
    %572 = arith.addf %571, %570 : vector<2x32xf32>
    %573 = arith.divf %571, %572 : vector<2x32xf32>
    %574 = vector.extract_strided_slice %555 {offsets = [0, 96], sizes = [2, 32], strides = [1, 1]} : vector<2x128xf32> to vector<2x32xf32>
    %575 = math.tanh %574 : vector<2x32xf32>
    %576 = vector.extract_strided_slice %550 {offsets = [0, 128], sizes = [2, 192], strides = [1, 1]} : vector<2x320xf32> to vector<2x192xf32>
    %577 = vector.extract_strided_slice %552 {offsets = [0, 128], sizes = [2, 192], strides = [1, 1]} : vector<2x352xf32> to vector<2x192xf32>
    %578 = arith.addf %576, %577 : vector<2x192xf32>
    %579 = arith.mulf %561, %575 : vector<2x32xf32>
    %580 = vector.extract_strided_slice %578 {offsets = [0, 0], sizes = [2, 64], strides = [1, 1]} : vector<2x192xf32> to vector<2x64xf32>
    %581 = vector.extract_strided_slice %580 {offsets = [0, 0], sizes = [2, 32], strides = [1, 1]} : vector<2x64xf32> to vector<2x32xf32>
    %582 = arith.negf %581 : vector<2x32xf32>
    %583 = math.exp %582 : vector<2x32xf32>
    %cst_89 = arith.constant 1.000000e+00 : f32
    %584 = vector.broadcast %cst_89 : f32 to vector<2x32xf32>
    %585 = arith.addf %584, %583 : vector<2x32xf32>
    %586 = arith.divf %584, %585 : vector<2x32xf32>
    %587 = vector.extract_strided_slice %580 {offsets = [0, 32], sizes = [2, 32], strides = [1, 1]} : vector<2x64xf32> to vector<2x32xf32>
    %588 = math.tanh %587 : vector<2x32xf32>
    %589 = arith.mulf %586, %588 : vector<2x32xf32>
    %590 = vector.extract_strided_slice %578 {offsets = [0, 64], sizes = [2, 64], strides = [1, 1]} : vector<2x192xf32> to vector<2x64xf32>
    %591 = vector.extract_strided_slice %590 {offsets = [0, 0], sizes = [2, 32], strides = [1, 1]} : vector<2x64xf32> to vector<2x32xf32>
    %592 = arith.negf %591 : vector<2x32xf32>
    %593 = math.exp %592 : vector<2x32xf32>
    %cst_90 = arith.constant 1.000000e+00 : f32
    %594 = vector.broadcast %cst_90 : f32 to vector<2x32xf32>
    %595 = arith.addf %594, %593 : vector<2x32xf32>
    %596 = arith.divf %594, %595 : vector<2x32xf32>
    %597 = vector.extract_strided_slice %590 {offsets = [0, 32], sizes = [2, 32], strides = [1, 1]} : vector<2x64xf32> to vector<2x32xf32>
    %598 = math.tanh %597 : vector<2x32xf32>
    %599 = arith.mulf %596, %598 : vector<2x32xf32>
    %600 = vector.extract_strided_slice %578 {offsets = [0, 128], sizes = [2, 64], strides = [1, 1]} : vector<2x192xf32> to vector<2x64xf32>
    %601 = vector.extract_strided_slice %600 {offsets = [0, 0], sizes = [2, 32], strides = [1, 1]} : vector<2x64xf32> to vector<2x32xf32>
    %602 = arith.negf %601 : vector<2x32xf32>
    %603 = math.exp %602 : vector<2x32xf32>
    %cst_91 = arith.constant 1.000000e+00 : f32
    %604 = vector.broadcast %cst_91 : f32 to vector<2x32xf32>
    %605 = arith.addf %604, %603 : vector<2x32xf32>
    %606 = arith.divf %604, %605 : vector<2x32xf32>
    %607 = vector.extract_strided_slice %600 {offsets = [0, 32], sizes = [2, 32], strides = [1, 1]} : vector<2x64xf32> to vector<2x32xf32>
    %608 = math.tanh %607 : vector<2x32xf32>
    %609 = arith.mulf %606, %608 : vector<2x32xf32>
    %610 = vector.extract_strided_slice %552 {offsets = [0, 320], sizes = [2, 32], strides = [1, 1]} : vector<2x352xf32> to vector<2x32xf32>
    %611 = arith.mulf %579, %610 : vector<2x32xf32>
    %cst_92 = arith.constant dense<0.000000e+00> : vector<2xf32>
    %612 = vector.multi_reduction <add>, %611, %cst_92 [1] : vector<2x32xf32> to vector<2xf32>
    %613 = vector.shape_cast %612 : vector<2xf32> to vector<2x1xf32>
    %614 = arith.mulf %589, %610 : vector<2x32xf32>
    %cst_93 = arith.constant dense<0.000000e+00> : vector<2xf32>
    %615 = vector.multi_reduction <add>, %614, %cst_93 [1] : vector<2x32xf32> to vector<2xf32>
    %616 = vector.shape_cast %615 : vector<2xf32> to vector<2x1xf32>
    %617 = arith.mulf %599, %610 : vector<2x32xf32>
    %cst_94 = arith.constant dense<0.000000e+00> : vector<2xf32>
    %618 = vector.multi_reduction <add>, %617, %cst_94 [1] : vector<2x32xf32> to vector<2xf32>
    %619 = vector.shape_cast %618 : vector<2xf32> to vector<2x1xf32>
    %620 = arith.mulf %609, %610 : vector<2x32xf32>
    %cst_95 = arith.constant dense<0.000000e+00> : vector<2xf32>
    %621 = vector.multi_reduction <add>, %620, %cst_95 [1] : vector<2x32xf32> to vector<2xf32>
    %622 = vector.shape_cast %621 : vector<2xf32> to vector<2x1xf32>
    %623 = tpu.concatenate %613, %616, %619, %622 in 1 : vector<2x1xf32>, vector<2x1xf32>, vector<2x1xf32>, vector<2x1xf32> -> vector<2x4xf32>
    %624 = vector.broadcast %9 : vector<1x1xf32> to vector<2x4xf32>
    %625 = arith.addf %623, %624 : vector<2x4xf32>
    %626 = math.tanh %625 : vector<2x4xf32>
    %cst_96 = arith.constant dense<0xFF800000> : vector<2xf32>
    %627 = vector.multi_reduction <maximumf>, %626, %cst_96 [1] : vector<2x4xf32> to vector<2xf32>
    %628 = vector.shape_cast %627 : vector<2xf32> to vector<2x1xf32>
    %629 = vector.broadcast %628 : vector<2x1xf32> to vector<2x4xf32>
    %630 = arith.subf %626, %629 : vector<2x4xf32>
    %631 = math.exp %630 : vector<2x4xf32>
    %cst_97 = arith.constant dense<0.000000e+00> : vector<2xf32>
    %632 = vector.multi_reduction <add>, %631, %cst_97 [1] : vector<2x4xf32> to vector<2xf32>
    %633 = vector.shape_cast %632 : vector<2xf32> to vector<2x1xf32>
    %634 = vector.broadcast %633 : vector<2x1xf32> to vector<2x4xf32>
    %635 = arith.divf %631, %634 : vector<2x4xf32>
    %636 = vector.extract_strided_slice %635 {offsets = [0, 0], sizes = [2, 1], strides = [1, 1]} : vector<2x4xf32> to vector<2x1xf32>
    %637 = vector.broadcast %636 : vector<2x1xf32> to vector<2x32xf32>
    %638 = arith.mulf %637, %579 : vector<2x32xf32>
    %639 = vector.extract_strided_slice %635 {offsets = [0, 1], sizes = [2, 1], strides = [1, 1]} : vector<2x4xf32> to vector<2x1xf32>
    %640 = vector.broadcast %639 : vector<2x1xf32> to vector<2x32xf32>
    %641 = arith.mulf %640, %589 : vector<2x32xf32>
    %642 = arith.addf %638, %641 : vector<2x32xf32>
    %643 = vector.extract_strided_slice %635 {offsets = [0, 2], sizes = [2, 1], strides = [1, 1]} : vector<2x4xf32> to vector<2x1xf32>
    %644 = vector.broadcast %643 : vector<2x1xf32> to vector<2x32xf32>
    %645 = arith.mulf %644, %599 : vector<2x32xf32>
    %646 = arith.addf %642, %645 : vector<2x32xf32>
    %647 = vector.extract_strided_slice %635 {offsets = [0, 3], sizes = [2, 1], strides = [1, 1]} : vector<2x4xf32> to vector<2x1xf32>
    %648 = vector.broadcast %647 : vector<2x1xf32> to vector<2x32xf32>
    %649 = arith.mulf %648, %609 : vector<2x32xf32>
    %650 = arith.addf %646, %649 : vector<2x32xf32>
    %651 = arith.mulf %567, %518 : vector<2x32xf32>
    %652 = arith.addf %651, %650 : vector<2x32xf32>
    %653 = math.tanh %652 : vector<2x32xf32>
    %654 = arith.mulf %573, %653 : vector<2x32xf32>
    %655 = tpu.concatenate %654, %549 in 1 : vector<2x32xf32>, vector<2x32xf32> -> vector<2x64xf32>
    %cst_98 = arith.constant dense<0.000000e+00> : vector<2x128xf32>
    %656 = tpu.matmul %655, %7, %cst_98 {dimension_numbers = #tpu.dot_dimension_numbers<[1], [0], [0], [1], [0, 0, 1, 1], [], []>} : vector<2x64xf32>, vector<64x128xf32>, vector<2x128xf32> -> vector<2x128xf32>
    %657 = vector.broadcast %8 : vector<1x128xf32> to vector<2x128xf32>
    %658 = arith.addf %656, %657 : vector<2x128xf32>
    %659 = vector.extract_strided_slice %658 {offsets = [0, 0], sizes = [2, 32], strides = [1, 1]} : vector<2x128xf32> to vector<2x32xf32>
    %660 = arith.negf %659 : vector<2x32xf32>
    %661 = math.exp %660 : vector<2x32xf32>
    %cst_99 = arith.constant 1.000000e+00 : f32
    %662 = vector.broadcast %cst_99 : f32 to vector<2x32xf32>
    %663 = arith.addf %662, %661 : vector<2x32xf32>
    %664 = arith.divf %662, %663 : vector<2x32xf32>
    %665 = vector.extract_strided_slice %658 {offsets = [0, 32], sizes = [2, 32], strides = [1, 1]} : vector<2x128xf32> to vector<2x32xf32>
    %666 = arith.negf %665 : vector<2x32xf32>
    %667 = math.exp %666 : vector<2x32xf32>
    %cst_100 = arith.constant 1.000000e+00 : f32
    %668 = vector.broadcast %cst_100 : f32 to vector<2x32xf32>
    %669 = arith.addf %668, %667 : vector<2x32xf32>
    %670 = arith.divf %668, %669 : vector<2x32xf32>
    %671 = vector.extract_strided_slice %658 {offsets = [0, 64], sizes = [2, 32], strides = [1, 1]} : vector<2x128xf32> to vector<2x32xf32>
    %672 = math.tanh %671 : vector<2x32xf32>
    %673 = vector.extract_strided_slice %658 {offsets = [0, 96], sizes = [2, 32], strides = [1, 1]} : vector<2x128xf32> to vector<2x32xf32>
    %674 = arith.negf %673 : vector<2x32xf32>
    %675 = math.exp %674 : vector<2x32xf32>
    %cst_101 = arith.constant 1.000000e+00 : f32
    %676 = vector.broadcast %cst_101 : f32 to vector<2x32xf32>
    %677 = arith.addf %676, %675 : vector<2x32xf32>
    %678 = arith.divf %676, %677 : vector<2x32xf32>
    %679 = arith.mulf %670, %547 : vector<2x32xf32>
    %680 = arith.mulf %664, %672 : vector<2x32xf32>
    %681 = arith.addf %679, %680 : vector<2x32xf32>
    %682 = math.tanh %681 : vector<2x32xf32>
    %683 = arith.mulf %678, %682 : vector<2x32xf32>
    %684 = vector.extract_strided_slice %5 {offsets = [10, 0], sizes = [2, 320], strides = [1, 1]} : vector<16x320xf32> to vector<2x320xf32>
    %685 = tpu.concatenate %654, %652 in 1 : vector<2x32xf32>, vector<2x32xf32> -> vector<2x64xf32>
    %cst_102 = arith.constant dense<0.000000e+00> : vector<2x352xf32>
    %686 = tpu.matmul %685, %6, %cst_102 {dimension_numbers = #tpu.dot_dimension_numbers<[1], [0], [0], [1], [0, 0, 1, 1], [], []>} : vector<2x64xf32>, vector<64x352xf32>, vector<2x352xf32> -> vector<2x352xf32>
    %687 = vector.extract_strided_slice %684 {offsets = [0, 0], sizes = [2, 128], strides = [1, 1]} : vector<2x320xf32> to vector<2x128xf32>
    %688 = vector.extract_strided_slice %686 {offsets = [0, 0], sizes = [2, 128], strides = [1, 1]} : vector<2x352xf32> to vector<2x128xf32>
    %689 = arith.addf %687, %688 : vector<2x128xf32>
    %690 = vector.extract_strided_slice %689 {offsets = [0, 0], sizes = [2, 32], strides = [1, 1]} : vector<2x128xf32> to vector<2x32xf32>
    %691 = arith.negf %690 : vector<2x32xf32>
    %692 = math.exp %691 : vector<2x32xf32>
    %cst_103 = arith.constant 1.000000e+00 : f32
    %693 = vector.broadcast %cst_103 : f32 to vector<2x32xf32>
    %694 = arith.addf %693, %692 : vector<2x32xf32>
    %695 = arith.divf %693, %694 : vector<2x32xf32>
    %696 = vector.extract_strided_slice %689 {offsets = [0, 32], sizes = [2, 32], strides = [1, 1]} : vector<2x128xf32> to vector<2x32xf32>
    %697 = arith.negf %696 : vector<2x32xf32>
    %698 = math.exp %697 : vector<2x32xf32>
    %cst_104 = arith.constant 1.000000e+00 : f32
    %699 = vector.broadcast %cst_104 : f32 to vector<2x32xf32>
    %700 = arith.addf %699, %698 : vector<2x32xf32>
    %701 = arith.divf %699, %700 : vector<2x32xf32>
    %702 = vector.extract_strided_slice %689 {offsets = [0, 64], sizes = [2, 32], strides = [1, 1]} : vector<2x128xf32> to vector<2x32xf32>
    %703 = arith.negf %702 : vector<2x32xf32>
    %704 = math.exp %703 : vector<2x32xf32>
    %cst_105 = arith.constant 1.000000e+00 : f32
    %705 = vector.broadcast %cst_105 : f32 to vector<2x32xf32>
    %706 = arith.addf %705, %704 : vector<2x32xf32>
    %707 = arith.divf %705, %706 : vector<2x32xf32>
    %708 = vector.extract_strided_slice %689 {offsets = [0, 96], sizes = [2, 32], strides = [1, 1]} : vector<2x128xf32> to vector<2x32xf32>
    %709 = math.tanh %708 : vector<2x32xf32>
    %710 = vector.extract_strided_slice %684 {offsets = [0, 128], sizes = [2, 192], strides = [1, 1]} : vector<2x320xf32> to vector<2x192xf32>
    %711 = vector.extract_strided_slice %686 {offsets = [0, 128], sizes = [2, 192], strides = [1, 1]} : vector<2x352xf32> to vector<2x192xf32>
    %712 = arith.addf %710, %711 : vector<2x192xf32>
    %713 = arith.mulf %695, %709 : vector<2x32xf32>
    %714 = vector.extract_strided_slice %712 {offsets = [0, 0], sizes = [2, 64], strides = [1, 1]} : vector<2x192xf32> to vector<2x64xf32>
    %715 = vector.extract_strided_slice %714 {offsets = [0, 0], sizes = [2, 32], strides = [1, 1]} : vector<2x64xf32> to vector<2x32xf32>
    %716 = arith.negf %715 : vector<2x32xf32>
    %717 = math.exp %716 : vector<2x32xf32>
    %cst_106 = arith.constant 1.000000e+00 : f32
    %718 = vector.broadcast %cst_106 : f32 to vector<2x32xf32>
    %719 = arith.addf %718, %717 : vector<2x32xf32>
    %720 = arith.divf %718, %719 : vector<2x32xf32>
    %721 = vector.extract_strided_slice %714 {offsets = [0, 32], sizes = [2, 32], strides = [1, 1]} : vector<2x64xf32> to vector<2x32xf32>
    %722 = math.tanh %721 : vector<2x32xf32>
    %723 = arith.mulf %720, %722 : vector<2x32xf32>
    %724 = vector.extract_strided_slice %712 {offsets = [0, 64], sizes = [2, 64], strides = [1, 1]} : vector<2x192xf32> to vector<2x64xf32>
    %725 = vector.extract_strided_slice %724 {offsets = [0, 0], sizes = [2, 32], strides = [1, 1]} : vector<2x64xf32> to vector<2x32xf32>
    %726 = arith.negf %725 : vector<2x32xf32>
    %727 = math.exp %726 : vector<2x32xf32>
    %cst_107 = arith.constant 1.000000e+00 : f32
    %728 = vector.broadcast %cst_107 : f32 to vector<2x32xf32>
    %729 = arith.addf %728, %727 : vector<2x32xf32>
    %730 = arith.divf %728, %729 : vector<2x32xf32>
    %731 = vector.extract_strided_slice %724 {offsets = [0, 32], sizes = [2, 32], strides = [1, 1]} : vector<2x64xf32> to vector<2x32xf32>
    %732 = math.tanh %731 : vector<2x32xf32>
    %733 = arith.mulf %730, %732 : vector<2x32xf32>
    %734 = vector.extract_strided_slice %712 {offsets = [0, 128], sizes = [2, 64], strides = [1, 1]} : vector<2x192xf32> to vector<2x64xf32>
    %735 = vector.extract_strided_slice %734 {offsets = [0, 0], sizes = [2, 32], strides = [1, 1]} : vector<2x64xf32> to vector<2x32xf32>
    %736 = arith.negf %735 : vector<2x32xf32>
    %737 = math.exp %736 : vector<2x32xf32>
    %cst_108 = arith.constant 1.000000e+00 : f32
    %738 = vector.broadcast %cst_108 : f32 to vector<2x32xf32>
    %739 = arith.addf %738, %737 : vector<2x32xf32>
    %740 = arith.divf %738, %739 : vector<2x32xf32>
    %741 = vector.extract_strided_slice %734 {offsets = [0, 32], sizes = [2, 32], strides = [1, 1]} : vector<2x64xf32> to vector<2x32xf32>
    %742 = math.tanh %741 : vector<2x32xf32>
    %743 = arith.mulf %740, %742 : vector<2x32xf32>
    %744 = vector.extract_strided_slice %686 {offsets = [0, 320], sizes = [2, 32], strides = [1, 1]} : vector<2x352xf32> to vector<2x32xf32>
    %745 = arith.mulf %713, %744 : vector<2x32xf32>
    %cst_109 = arith.constant dense<0.000000e+00> : vector<2xf32>
    %746 = vector.multi_reduction <add>, %745, %cst_109 [1] : vector<2x32xf32> to vector<2xf32>
    %747 = vector.shape_cast %746 : vector<2xf32> to vector<2x1xf32>
    %748 = arith.mulf %723, %744 : vector<2x32xf32>
    %cst_110 = arith.constant dense<0.000000e+00> : vector<2xf32>
    %749 = vector.multi_reduction <add>, %748, %cst_110 [1] : vector<2x32xf32> to vector<2xf32>
    %750 = vector.shape_cast %749 : vector<2xf32> to vector<2x1xf32>
    %751 = arith.mulf %733, %744 : vector<2x32xf32>
    %cst_111 = arith.constant dense<0.000000e+00> : vector<2xf32>
    %752 = vector.multi_reduction <add>, %751, %cst_111 [1] : vector<2x32xf32> to vector<2xf32>
    %753 = vector.shape_cast %752 : vector<2xf32> to vector<2x1xf32>
    %754 = arith.mulf %743, %744 : vector<2x32xf32>
    %cst_112 = arith.constant dense<0.000000e+00> : vector<2xf32>
    %755 = vector.multi_reduction <add>, %754, %cst_112 [1] : vector<2x32xf32> to vector<2xf32>
    %756 = vector.shape_cast %755 : vector<2xf32> to vector<2x1xf32>
    %757 = tpu.concatenate %747, %750, %753, %756 in 1 : vector<2x1xf32>, vector<2x1xf32>, vector<2x1xf32>, vector<2x1xf32> -> vector<2x4xf32>
    %758 = vector.broadcast %9 : vector<1x1xf32> to vector<2x4xf32>
    %759 = arith.addf %757, %758 : vector<2x4xf32>
    %760 = math.tanh %759 : vector<2x4xf32>
    %cst_113 = arith.constant dense<0xFF800000> : vector<2xf32>
    %761 = vector.multi_reduction <maximumf>, %760, %cst_113 [1] : vector<2x4xf32> to vector<2xf32>
    %762 = vector.shape_cast %761 : vector<2xf32> to vector<2x1xf32>
    %763 = vector.broadcast %762 : vector<2x1xf32> to vector<2x4xf32>
    %764 = arith.subf %760, %763 : vector<2x4xf32>
    %765 = math.exp %764 : vector<2x4xf32>
    %cst_114 = arith.constant dense<0.000000e+00> : vector<2xf32>
    %766 = vector.multi_reduction <add>, %765, %cst_114 [1] : vector<2x4xf32> to vector<2xf32>
    %767 = vector.shape_cast %766 : vector<2xf32> to vector<2x1xf32>
    %768 = vector.broadcast %767 : vector<2x1xf32> to vector<2x4xf32>
    %769 = arith.divf %765, %768 : vector<2x4xf32>
    %770 = vector.extract_strided_slice %769 {offsets = [0, 0], sizes = [2, 1], strides = [1, 1]} : vector<2x4xf32> to vector<2x1xf32>
    %771 = vector.broadcast %770 : vector<2x1xf32> to vector<2x32xf32>
    %772 = arith.mulf %771, %713 : vector<2x32xf32>
    %773 = vector.extract_strided_slice %769 {offsets = [0, 1], sizes = [2, 1], strides = [1, 1]} : vector<2x4xf32> to vector<2x1xf32>
    %774 = vector.broadcast %773 : vector<2x1xf32> to vector<2x32xf32>
    %775 = arith.mulf %774, %723 : vector<2x32xf32>
    %776 = arith.addf %772, %775 : vector<2x32xf32>
    %777 = vector.extract_strided_slice %769 {offsets = [0, 2], sizes = [2, 1], strides = [1, 1]} : vector<2x4xf32> to vector<2x1xf32>
    %778 = vector.broadcast %777 : vector<2x1xf32> to vector<2x32xf32>
    %779 = arith.mulf %778, %733 : vector<2x32xf32>
    %780 = arith.addf %776, %779 : vector<2x32xf32>
    %781 = vector.extract_strided_slice %769 {offsets = [0, 3], sizes = [2, 1], strides = [1, 1]} : vector<2x4xf32> to vector<2x1xf32>
    %782 = vector.broadcast %781 : vector<2x1xf32> to vector<2x32xf32>
    %783 = arith.mulf %782, %743 : vector<2x32xf32>
    %784 = arith.addf %780, %783 : vector<2x32xf32>
    %785 = arith.mulf %701, %652 : vector<2x32xf32>
    %786 = arith.addf %785, %784 : vector<2x32xf32>
    %787 = math.tanh %786 : vector<2x32xf32>
    %788 = arith.mulf %707, %787 : vector<2x32xf32>
    %789 = tpu.concatenate %788, %683 in 1 : vector<2x32xf32>, vector<2x32xf32> -> vector<2x64xf32>
    %cst_115 = arith.constant dense<0.000000e+00> : vector<2x128xf32>
    %790 = tpu.matmul %789, %7, %cst_115 {dimension_numbers = #tpu.dot_dimension_numbers<[1], [0], [0], [1], [0, 0, 1, 1], [], []>} : vector<2x64xf32>, vector<64x128xf32>, vector<2x128xf32> -> vector<2x128xf32>
    %791 = vector.broadcast %8 : vector<1x128xf32> to vector<2x128xf32>
    %792 = arith.addf %790, %791 : vector<2x128xf32>
    %793 = vector.extract_strided_slice %792 {offsets = [0, 0], sizes = [2, 32], strides = [1, 1]} : vector<2x128xf32> to vector<2x32xf32>
    %794 = arith.negf %793 : vector<2x32xf32>
    %795 = math.exp %794 : vector<2x32xf32>
    %cst_116 = arith.constant 1.000000e+00 : f32
    %796 = vector.broadcast %cst_116 : f32 to vector<2x32xf32>
    %797 = arith.addf %796, %795 : vector<2x32xf32>
    %798 = arith.divf %796, %797 : vector<2x32xf32>
    %799 = vector.extract_strided_slice %792 {offsets = [0, 32], sizes = [2, 32], strides = [1, 1]} : vector<2x128xf32> to vector<2x32xf32>
    %800 = arith.negf %799 : vector<2x32xf32>
    %801 = math.exp %800 : vector<2x32xf32>
    %cst_117 = arith.constant 1.000000e+00 : f32
    %802 = vector.broadcast %cst_117 : f32 to vector<2x32xf32>
    %803 = arith.addf %802, %801 : vector<2x32xf32>
    %804 = arith.divf %802, %803 : vector<2x32xf32>
    %805 = vector.extract_strided_slice %792 {offsets = [0, 64], sizes = [2, 32], strides = [1, 1]} : vector<2x128xf32> to vector<2x32xf32>
    %806 = math.tanh %805 : vector<2x32xf32>
    %807 = vector.extract_strided_slice %792 {offsets = [0, 96], sizes = [2, 32], strides = [1, 1]} : vector<2x128xf32> to vector<2x32xf32>
    %808 = arith.negf %807 : vector<2x32xf32>
    %809 = math.exp %808 : vector<2x32xf32>
    %cst_118 = arith.constant 1.000000e+00 : f32
    %810 = vector.broadcast %cst_118 : f32 to vector<2x32xf32>
    %811 = arith.addf %810, %809 : vector<2x32xf32>
    %812 = arith.divf %810, %811 : vector<2x32xf32>
    %813 = arith.mulf %804, %681 : vector<2x32xf32>
    %814 = arith.mulf %798, %806 : vector<2x32xf32>
    %815 = arith.addf %813, %814 : vector<2x32xf32>
    %816 = math.tanh %815 : vector<2x32xf32>
    %817 = arith.mulf %812, %816 : vector<2x32xf32>
    %818 = vector.extract_strided_slice %5 {offsets = [12, 0], sizes = [2, 320], strides = [1, 1]} : vector<16x320xf32> to vector<2x320xf32>
    %819 = tpu.concatenate %788, %786 in 1 : vector<2x32xf32>, vector<2x32xf32> -> vector<2x64xf32>
    %cst_119 = arith.constant dense<0.000000e+00> : vector<2x352xf32>
    %820 = tpu.matmul %819, %6, %cst_119 {dimension_numbers = #tpu.dot_dimension_numbers<[1], [0], [0], [1], [0, 0, 1, 1], [], []>} : vector<2x64xf32>, vector<64x352xf32>, vector<2x352xf32> -> vector<2x352xf32>
    %821 = vector.extract_strided_slice %818 {offsets = [0, 0], sizes = [2, 128], strides = [1, 1]} : vector<2x320xf32> to vector<2x128xf32>
    %822 = vector.extract_strided_slice %820 {offsets = [0, 0], sizes = [2, 128], strides = [1, 1]} : vector<2x352xf32> to vector<2x128xf32>
    %823 = arith.addf %821, %822 : vector<2x128xf32>
    %824 = vector.extract_strided_slice %823 {offsets = [0, 0], sizes = [2, 32], strides = [1, 1]} : vector<2x128xf32> to vector<2x32xf32>
    %825 = arith.negf %824 : vector<2x32xf32>
    %826 = math.exp %825 : vector<2x32xf32>
    %cst_120 = arith.constant 1.000000e+00 : f32
    %827 = vector.broadcast %cst_120 : f32 to vector<2x32xf32>
    %828 = arith.addf %827, %826 : vector<2x32xf32>
    %829 = arith.divf %827, %828 : vector<2x32xf32>
    %830 = vector.extract_strided_slice %823 {offsets = [0, 32], sizes = [2, 32], strides = [1, 1]} : vector<2x128xf32> to vector<2x32xf32>
    %831 = arith.negf %830 : vector<2x32xf32>
    %832 = math.exp %831 : vector<2x32xf32>
    %cst_121 = arith.constant 1.000000e+00 : f32
    %833 = vector.broadcast %cst_121 : f32 to vector<2x32xf32>
    %834 = arith.addf %833, %832 : vector<2x32xf32>
    %835 = arith.divf %833, %834 : vector<2x32xf32>
    %836 = vector.extract_strided_slice %823 {offsets = [0, 64], sizes = [2, 32], strides = [1, 1]} : vector<2x128xf32> to vector<2x32xf32>
    %837 = arith.negf %836 : vector<2x32xf32>
    %838 = math.exp %837 : vector<2x32xf32>
    %cst_122 = arith.constant 1.000000e+00 : f32
    %839 = vector.broadcast %cst_122 : f32 to vector<2x32xf32>
    %840 = arith.addf %839, %838 : vector<2x32xf32>
    %841 = arith.divf %839, %840 : vector<2x32xf32>
    %842 = vector.extract_strided_slice %823 {offsets = [0, 96], sizes = [2, 32], strides = [1, 1]} : vector<2x128xf32> to vector<2x32xf32>
    %843 = math.tanh %842 : vector<2x32xf32>
    %844 = vector.extract_strided_slice %818 {offsets = [0, 128], sizes = [2, 192], strides = [1, 1]} : vector<2x320xf32> to vector<2x192xf32>
    %845 = vector.extract_strided_slice %820 {offsets = [0, 128], sizes = [2, 192], strides = [1, 1]} : vector<2x352xf32> to vector<2x192xf32>
    %846 = arith.addf %844, %845 : vector<2x192xf32>
    %847 = arith.mulf %829, %843 : vector<2x32xf32>
    %848 = vector.extract_strided_slice %846 {offsets = [0, 0], sizes = [2, 64], strides = [1, 1]} : vector<2x192xf32> to vector<2x64xf32>
    %849 = vector.extract_strided_slice %848 {offsets = [0, 0], sizes = [2, 32], strides = [1, 1]} : vector<2x64xf32> to vector<2x32xf32>
    %850 = arith.negf %849 : vector<2x32xf32>
    %851 = math.exp %850 : vector<2x32xf32>
    %cst_123 = arith.constant 1.000000e+00 : f32
    %852 = vector.broadcast %cst_123 : f32 to vector<2x32xf32>
    %853 = arith.addf %852, %851 : vector<2x32xf32>
    %854 = arith.divf %852, %853 : vector<2x32xf32>
    %855 = vector.extract_strided_slice %848 {offsets = [0, 32], sizes = [2, 32], strides = [1, 1]} : vector<2x64xf32> to vector<2x32xf32>
    %856 = math.tanh %855 : vector<2x32xf32>
    %857 = arith.mulf %854, %856 : vector<2x32xf32>
    %858 = vector.extract_strided_slice %846 {offsets = [0, 64], sizes = [2, 64], strides = [1, 1]} : vector<2x192xf32> to vector<2x64xf32>
    %859 = vector.extract_strided_slice %858 {offsets = [0, 0], sizes = [2, 32], strides = [1, 1]} : vector<2x64xf32> to vector<2x32xf32>
    %860 = arith.negf %859 : vector<2x32xf32>
    %861 = math.exp %860 : vector<2x32xf32>
    %cst_124 = arith.constant 1.000000e+00 : f32
    %862 = vector.broadcast %cst_124 : f32 to vector<2x32xf32>
    %863 = arith.addf %862, %861 : vector<2x32xf32>
    %864 = arith.divf %862, %863 : vector<2x32xf32>
    %865 = vector.extract_strided_slice %858 {offsets = [0, 32], sizes = [2, 32], strides = [1, 1]} : vector<2x64xf32> to vector<2x32xf32>
    %866 = math.tanh %865 : vector<2x32xf32>
    %867 = arith.mulf %864, %866 : vector<2x32xf32>
    %868 = vector.extract_strided_slice %846 {offsets = [0, 128], sizes = [2, 64], strides = [1, 1]} : vector<2x192xf32> to vector<2x64xf32>
    %869 = vector.extract_strided_slice %868 {offsets = [0, 0], sizes = [2, 32], strides = [1, 1]} : vector<2x64xf32> to vector<2x32xf32>
    %870 = arith.negf %869 : vector<2x32xf32>
    %871 = math.exp %870 : vector<2x32xf32>
    %cst_125 = arith.constant 1.000000e+00 : f32
    %872 = vector.broadcast %cst_125 : f32 to vector<2x32xf32>
    %873 = arith.addf %872, %871 : vector<2x32xf32>
    %874 = arith.divf %872, %873 : vector<2x32xf32>
    %875 = vector.extract_strided_slice %868 {offsets = [0, 32], sizes = [2, 32], strides = [1, 1]} : vector<2x64xf32> to vector<2x32xf32>
    %876 = math.tanh %875 : vector<2x32xf32>
    %877 = arith.mulf %874, %876 : vector<2x32xf32>
    %878 = vector.extract_strided_slice %820 {offsets = [0, 320], sizes = [2, 32], strides = [1, 1]} : vector<2x352xf32> to vector<2x32xf32>
    %879 = arith.mulf %847, %878 : vector<2x32xf32>
    %cst_126 = arith.constant dense<0.000000e+00> : vector<2xf32>
    %880 = vector.multi_reduction <add>, %879, %cst_126 [1] : vector<2x32xf32> to vector<2xf32>
    %881 = vector.shape_cast %880 : vector<2xf32> to vector<2x1xf32>
    %882 = arith.mulf %857, %878 : vector<2x32xf32>
    %cst_127 = arith.constant dense<0.000000e+00> : vector<2xf32>
    %883 = vector.multi_reduction <add>, %882, %cst_127 [1] : vector<2x32xf32> to vector<2xf32>
    %884 = vector.shape_cast %883 : vector<2xf32> to vector<2x1xf32>
    %885 = arith.mulf %867, %878 : vector<2x32xf32>
    %cst_128 = arith.constant dense<0.000000e+00> : vector<2xf32>
    %886 = vector.multi_reduction <add>, %885, %cst_128 [1] : vector<2x32xf32> to vector<2xf32>
    %887 = vector.shape_cast %886 : vector<2xf32> to vector<2x1xf32>
    %888 = arith.mulf %877, %878 : vector<2x32xf32>
    %cst_129 = arith.constant dense<0.000000e+00> : vector<2xf32>
    %889 = vector.multi_reduction <add>, %888, %cst_129 [1] : vector<2x32xf32> to vector<2xf32>
    %890 = vector.shape_cast %889 : vector<2xf32> to vector<2x1xf32>
    %891 = tpu.concatenate %881, %884, %887, %890 in 1 : vector<2x1xf32>, vector<2x1xf32>, vector<2x1xf32>, vector<2x1xf32> -> vector<2x4xf32>
    %892 = vector.broadcast %9 : vector<1x1xf32> to vector<2x4xf32>
    %893 = arith.addf %891, %892 : vector<2x4xf32>
    %894 = math.tanh %893 : vector<2x4xf32>
    %cst_130 = arith.constant dense<0xFF800000> : vector<2xf32>
    %895 = vector.multi_reduction <maximumf>, %894, %cst_130 [1] : vector<2x4xf32> to vector<2xf32>
    %896 = vector.shape_cast %895 : vector<2xf32> to vector<2x1xf32>
    %897 = vector.broadcast %896 : vector<2x1xf32> to vector<2x4xf32>
    %898 = arith.subf %894, %897 : vector<2x4xf32>
    %899 = math.exp %898 : vector<2x4xf32>
    %cst_131 = arith.constant dense<0.000000e+00> : vector<2xf32>
    %900 = vector.multi_reduction <add>, %899, %cst_131 [1] : vector<2x4xf32> to vector<2xf32>
    %901 = vector.shape_cast %900 : vector<2xf32> to vector<2x1xf32>
    %902 = vector.broadcast %901 : vector<2x1xf32> to vector<2x4xf32>
    %903 = arith.divf %899, %902 : vector<2x4xf32>
    %904 = vector.extract_strided_slice %903 {offsets = [0, 0], sizes = [2, 1], strides = [1, 1]} : vector<2x4xf32> to vector<2x1xf32>
    %905 = vector.broadcast %904 : vector<2x1xf32> to vector<2x32xf32>
    %906 = arith.mulf %905, %847 : vector<2x32xf32>
    %907 = vector.extract_strided_slice %903 {offsets = [0, 1], sizes = [2, 1], strides = [1, 1]} : vector<2x4xf32> to vector<2x1xf32>
    %908 = vector.broadcast %907 : vector<2x1xf32> to vector<2x32xf32>
    %909 = arith.mulf %908, %857 : vector<2x32xf32>
    %910 = arith.addf %906, %909 : vector<2x32xf32>
    %911 = vector.extract_strided_slice %903 {offsets = [0, 2], sizes = [2, 1], strides = [1, 1]} : vector<2x4xf32> to vector<2x1xf32>
    %912 = vector.broadcast %911 : vector<2x1xf32> to vector<2x32xf32>
    %913 = arith.mulf %912, %867 : vector<2x32xf32>
    %914 = arith.addf %910, %913 : vector<2x32xf32>
    %915 = vector.extract_strided_slice %903 {offsets = [0, 3], sizes = [2, 1], strides = [1, 1]} : vector<2x4xf32> to vector<2x1xf32>
    %916 = vector.broadcast %915 : vector<2x1xf32> to vector<2x32xf32>
    %917 = arith.mulf %916, %877 : vector<2x32xf32>
    %918 = arith.addf %914, %917 : vector<2x32xf32>
    %919 = arith.mulf %835, %786 : vector<2x32xf32>
    %920 = arith.addf %919, %918 : vector<2x32xf32>
    %921 = math.tanh %920 : vector<2x32xf32>
    %922 = arith.mulf %841, %921 : vector<2x32xf32>
    %923 = tpu.concatenate %922, %817 in 1 : vector<2x32xf32>, vector<2x32xf32> -> vector<2x64xf32>
    %cst_132 = arith.constant dense<0.000000e+00> : vector<2x128xf32>
    %924 = tpu.matmul %923, %7, %cst_132 {dimension_numbers = #tpu.dot_dimension_numbers<[1], [0], [0], [1], [0, 0, 1, 1], [], []>} : vector<2x64xf32>, vector<64x128xf32>, vector<2x128xf32> -> vector<2x128xf32>
    %925 = vector.broadcast %8 : vector<1x128xf32> to vector<2x128xf32>
    %926 = arith.addf %924, %925 : vector<2x128xf32>
    %927 = vector.extract_strided_slice %926 {offsets = [0, 0], sizes = [2, 32], strides = [1, 1]} : vector<2x128xf32> to vector<2x32xf32>
    %928 = arith.negf %927 : vector<2x32xf32>
    %929 = math.exp %928 : vector<2x32xf32>
    %cst_133 = arith.constant 1.000000e+00 : f32
    %930 = vector.broadcast %cst_133 : f32 to vector<2x32xf32>
    %931 = arith.addf %930, %929 : vector<2x32xf32>
    %932 = arith.divf %930, %931 : vector<2x32xf32>
    %933 = vector.extract_strided_slice %926 {offsets = [0, 32], sizes = [2, 32], strides = [1, 1]} : vector<2x128xf32> to vector<2x32xf32>
    %934 = arith.negf %933 : vector<2x32xf32>
    %935 = math.exp %934 : vector<2x32xf32>
    %cst_134 = arith.constant 1.000000e+00 : f32
    %936 = vector.broadcast %cst_134 : f32 to vector<2x32xf32>
    %937 = arith.addf %936, %935 : vector<2x32xf32>
    %938 = arith.divf %936, %937 : vector<2x32xf32>
    %939 = vector.extract_strided_slice %926 {offsets = [0, 64], sizes = [2, 32], strides = [1, 1]} : vector<2x128xf32> to vector<2x32xf32>
    %940 = math.tanh %939 : vector<2x32xf32>
    %941 = vector.extract_strided_slice %926 {offsets = [0, 96], sizes = [2, 32], strides = [1, 1]} : vector<2x128xf32> to vector<2x32xf32>
    %942 = arith.negf %941 : vector<2x32xf32>
    %943 = math.exp %942 : vector<2x32xf32>
    %cst_135 = arith.constant 1.000000e+00 : f32
    %944 = vector.broadcast %cst_135 : f32 to vector<2x32xf32>
    %945 = arith.addf %944, %943 : vector<2x32xf32>
    %946 = arith.divf %944, %945 : vector<2x32xf32>
    %947 = arith.mulf %938, %815 : vector<2x32xf32>
    %948 = arith.mulf %932, %940 : vector<2x32xf32>
    %949 = arith.addf %947, %948 : vector<2x32xf32>
    %950 = math.tanh %949 : vector<2x32xf32>
    %951 = arith.mulf %946, %950 : vector<2x32xf32>
    %952 = vector.extract_strided_slice %5 {offsets = [14, 0], sizes = [2, 320], strides = [1, 1]} : vector<16x320xf32> to vector<2x320xf32>
    %953 = tpu.concatenate %922, %920 in 1 : vector<2x32xf32>, vector<2x32xf32> -> vector<2x64xf32>
    %cst_136 = arith.constant dense<0.000000e+00> : vector<2x352xf32>
    %954 = tpu.matmul %953, %6, %cst_136 {dimension_numbers = #tpu.dot_dimension_numbers<[1], [0], [0], [1], [0, 0, 1, 1], [], []>} : vector<2x64xf32>, vector<64x352xf32>, vector<2x352xf32> -> vector<2x352xf32>
    %955 = vector.extract_strided_slice %952 {offsets = [0, 0], sizes = [2, 128], strides = [1, 1]} : vector<2x320xf32> to vector<2x128xf32>
    %956 = vector.extract_strided_slice %954 {offsets = [0, 0], sizes = [2, 128], strides = [1, 1]} : vector<2x352xf32> to vector<2x128xf32>
    %957 = arith.addf %955, %956 : vector<2x128xf32>
    %958 = vector.extract_strided_slice %957 {offsets = [0, 0], sizes = [2, 32], strides = [1, 1]} : vector<2x128xf32> to vector<2x32xf32>
    %959 = arith.negf %958 : vector<2x32xf32>
    %960 = math.exp %959 : vector<2x32xf32>
    %cst_137 = arith.constant 1.000000e+00 : f32
    %961 = vector.broadcast %cst_137 : f32 to vector<2x32xf32>
    %962 = arith.addf %961, %960 : vector<2x32xf32>
    %963 = arith.divf %961, %962 : vector<2x32xf32>
    %964 = vector.extract_strided_slice %957 {offsets = [0, 32], sizes = [2, 32], strides = [1, 1]} : vector<2x128xf32> to vector<2x32xf32>
    %965 = arith.negf %964 : vector<2x32xf32>
    %966 = math.exp %965 : vector<2x32xf32>
    %cst_138 = arith.constant 1.000000e+00 : f32
    %967 = vector.broadcast %cst_138 : f32 to vector<2x32xf32>
    %968 = arith.addf %967, %966 : vector<2x32xf32>
    %969 = arith.divf %967, %968 : vector<2x32xf32>
    %970 = vector.extract_strided_slice %957 {offsets = [0, 64], sizes = [2, 32], strides = [1, 1]} : vector<2x128xf32> to vector<2x32xf32>
    %971 = arith.negf %970 : vector<2x32xf32>
    %972 = math.exp %971 : vector<2x32xf32>
    %cst_139 = arith.constant 1.000000e+00 : f32
    %973 = vector.broadcast %cst_139 : f32 to vector<2x32xf32>
    %974 = arith.addf %973, %972 : vector<2x32xf32>
    %975 = arith.divf %973, %974 : vector<2x32xf32>
    %976 = vector.extract_strided_slice %957 {offsets = [0, 96], sizes = [2, 32], strides = [1, 1]} : vector<2x128xf32> to vector<2x32xf32>
    %977 = math.tanh %976 : vector<2x32xf32>
    %978 = vector.extract_strided_slice %952 {offsets = [0, 128], sizes = [2, 192], strides = [1, 1]} : vector<2x320xf32> to vector<2x192xf32>
    %979 = vector.extract_strided_slice %954 {offsets = [0, 128], sizes = [2, 192], strides = [1, 1]} : vector<2x352xf32> to vector<2x192xf32>
    %980 = arith.addf %978, %979 : vector<2x192xf32>
    %981 = arith.mulf %963, %977 : vector<2x32xf32>
    %982 = vector.extract_strided_slice %980 {offsets = [0, 0], sizes = [2, 64], strides = [1, 1]} : vector<2x192xf32> to vector<2x64xf32>
    %983 = vector.extract_strided_slice %982 {offsets = [0, 0], sizes = [2, 32], strides = [1, 1]} : vector<2x64xf32> to vector<2x32xf32>
    %984 = arith.negf %983 : vector<2x32xf32>
    %985 = math.exp %984 : vector<2x32xf32>
    %cst_140 = arith.constant 1.000000e+00 : f32
    %986 = vector.broadcast %cst_140 : f32 to vector<2x32xf32>
    %987 = arith.addf %986, %985 : vector<2x32xf32>
    %988 = arith.divf %986, %987 : vector<2x32xf32>
    %989 = vector.extract_strided_slice %982 {offsets = [0, 32], sizes = [2, 32], strides = [1, 1]} : vector<2x64xf32> to vector<2x32xf32>
    %990 = math.tanh %989 : vector<2x32xf32>
    %991 = arith.mulf %988, %990 : vector<2x32xf32>
    %992 = vector.extract_strided_slice %980 {offsets = [0, 64], sizes = [2, 64], strides = [1, 1]} : vector<2x192xf32> to vector<2x64xf32>
    %993 = vector.extract_strided_slice %992 {offsets = [0, 0], sizes = [2, 32], strides = [1, 1]} : vector<2x64xf32> to vector<2x32xf32>
    %994 = arith.negf %993 : vector<2x32xf32>
    %995 = math.exp %994 : vector<2x32xf32>
    %cst_141 = arith.constant 1.000000e+00 : f32
    %996 = vector.broadcast %cst_141 : f32 to vector<2x32xf32>
    %997 = arith.addf %996, %995 : vector<2x32xf32>
    %998 = arith.divf %996, %997 : vector<2x32xf32>
    %999 = vector.extract_strided_slice %992 {offsets = [0, 32], sizes = [2, 32], strides = [1, 1]} : vector<2x64xf32> to vector<2x32xf32>
    %1000 = math.tanh %999 : vector<2x32xf32>
    %1001 = arith.mulf %998, %1000 : vector<2x32xf32>
    %1002 = vector.extract_strided_slice %980 {offsets = [0, 128], sizes = [2, 64], strides = [1, 1]} : vector<2x192xf32> to vector<2x64xf32>
    %1003 = vector.extract_strided_slice %1002 {offsets = [0, 0], sizes = [2, 32], strides = [1, 1]} : vector<2x64xf32> to vector<2x32xf32>
    %1004 = arith.negf %1003 : vector<2x32xf32>
    %1005 = math.exp %1004 : vector<2x32xf32>
    %cst_142 = arith.constant 1.000000e+00 : f32
    %1006 = vector.broadcast %cst_142 : f32 to vector<2x32xf32>
    %1007 = arith.addf %1006, %1005 : vector<2x32xf32>
    %1008 = arith.divf %1006, %1007 : vector<2x32xf32>
    %1009 = vector.extract_strided_slice %1002 {offsets = [0, 32], sizes = [2, 32], strides = [1, 1]} : vector<2x64xf32> to vector<2x32xf32>
    %1010 = math.tanh %1009 : vector<2x32xf32>
    %1011 = arith.mulf %1008, %1010 : vector<2x32xf32>
    %1012 = vector.extract_strided_slice %954 {offsets = [0, 320], sizes = [2, 32], strides = [1, 1]} : vector<2x352xf32> to vector<2x32xf32>
    %1013 = arith.mulf %981, %1012 : vector<2x32xf32>
    %cst_143 = arith.constant dense<0.000000e+00> : vector<2xf32>
    %1014 = vector.multi_reduction <add>, %1013, %cst_143 [1] : vector<2x32xf32> to vector<2xf32>
    %1015 = vector.shape_cast %1014 : vector<2xf32> to vector<2x1xf32>
    %1016 = arith.mulf %991, %1012 : vector<2x32xf32>
    %cst_144 = arith.constant dense<0.000000e+00> : vector<2xf32>
    %1017 = vector.multi_reduction <add>, %1016, %cst_144 [1] : vector<2x32xf32> to vector<2xf32>
    %1018 = vector.shape_cast %1017 : vector<2xf32> to vector<2x1xf32>
    %1019 = arith.mulf %1001, %1012 : vector<2x32xf32>
    %cst_145 = arith.constant dense<0.000000e+00> : vector<2xf32>
    %1020 = vector.multi_reduction <add>, %1019, %cst_145 [1] : vector<2x32xf32> to vector<2xf32>
    %1021 = vector.shape_cast %1020 : vector<2xf32> to vector<2x1xf32>
    %1022 = arith.mulf %1011, %1012 : vector<2x32xf32>
    %cst_146 = arith.constant dense<0.000000e+00> : vector<2xf32>
    %1023 = vector.multi_reduction <add>, %1022, %cst_146 [1] : vector<2x32xf32> to vector<2xf32>
    %1024 = vector.shape_cast %1023 : vector<2xf32> to vector<2x1xf32>
    %1025 = tpu.concatenate %1015, %1018, %1021, %1024 in 1 : vector<2x1xf32>, vector<2x1xf32>, vector<2x1xf32>, vector<2x1xf32> -> vector<2x4xf32>
    %1026 = vector.broadcast %9 : vector<1x1xf32> to vector<2x4xf32>
    %1027 = arith.addf %1025, %1026 : vector<2x4xf32>
    %1028 = math.tanh %1027 : vector<2x4xf32>
    %cst_147 = arith.constant dense<0xFF800000> : vector<2xf32>
    %1029 = vector.multi_reduction <maximumf>, %1028, %cst_147 [1] : vector<2x4xf32> to vector<2xf32>
    %1030 = vector.shape_cast %1029 : vector<2xf32> to vector<2x1xf32>
    %1031 = vector.broadcast %1030 : vector<2x1xf32> to vector<2x4xf32>
    %1032 = arith.subf %1028, %1031 : vector<2x4xf32>
    %1033 = math.exp %1032 : vector<2x4xf32>
    %cst_148 = arith.constant dense<0.000000e+00> : vector<2xf32>
    %1034 = vector.multi_reduction <add>, %1033, %cst_148 [1] : vector<2x4xf32> to vector<2xf32>
    %1035 = vector.shape_cast %1034 : vector<2xf32> to vector<2x1xf32>
    %1036 = vector.broadcast %1035 : vector<2x1xf32> to vector<2x4xf32>
    %1037 = arith.divf %1033, %1036 : vector<2x4xf32>
    %1038 = vector.extract_strided_slice %1037 {offsets = [0, 0], sizes = [2, 1], strides = [1, 1]} : vector<2x4xf32> to vector<2x1xf32>
    %1039 = vector.broadcast %1038 : vector<2x1xf32> to vector<2x32xf32>
    %1040 = arith.mulf %1039, %981 : vector<2x32xf32>
    %1041 = vector.extract_strided_slice %1037 {offsets = [0, 1], sizes = [2, 1], strides = [1, 1]} : vector<2x4xf32> to vector<2x1xf32>
    %1042 = vector.broadcast %1041 : vector<2x1xf32> to vector<2x32xf32>
    %1043 = arith.mulf %1042, %991 : vector<2x32xf32>
    %1044 = arith.addf %1040, %1043 : vector<2x32xf32>
    %1045 = vector.extract_strided_slice %1037 {offsets = [0, 2], sizes = [2, 1], strides = [1, 1]} : vector<2x4xf32> to vector<2x1xf32>
    %1046 = vector.broadcast %1045 : vector<2x1xf32> to vector<2x32xf32>
    %1047 = arith.mulf %1046, %1001 : vector<2x32xf32>
    %1048 = arith.addf %1044, %1047 : vector<2x32xf32>
    %1049 = vector.extract_strided_slice %1037 {offsets = [0, 3], sizes = [2, 1], strides = [1, 1]} : vector<2x4xf32> to vector<2x1xf32>
    %1050 = vector.broadcast %1049 : vector<2x1xf32> to vector<2x32xf32>
    %1051 = arith.mulf %1050, %1011 : vector<2x32xf32>
    %1052 = arith.addf %1048, %1051 : vector<2x32xf32>
    %1053 = arith.mulf %969, %920 : vector<2x32xf32>
    %1054 = arith.addf %1053, %1052 : vector<2x32xf32>
    %1055 = math.tanh %1054 : vector<2x32xf32>
    %1056 = arith.mulf %975, %1055 : vector<2x32xf32>
    %1057 = tpu.concatenate %1056, %951 in 1 : vector<2x32xf32>, vector<2x32xf32> -> vector<2x64xf32>
    %cst_149 = arith.constant dense<0.000000e+00> : vector<2x128xf32>
    %1058 = tpu.matmul %1057, %7, %cst_149 {dimension_numbers = #tpu.dot_dimension_numbers<[1], [0], [0], [1], [0, 0, 1, 1], [], []>} : vector<2x64xf32>, vector<64x128xf32>, vector<2x128xf32> -> vector<2x128xf32>
    %1059 = vector.broadcast %8 : vector<1x128xf32> to vector<2x128xf32>
    %1060 = arith.addf %1058, %1059 : vector<2x128xf32>
    %1061 = vector.extract_strided_slice %1060 {offsets = [0, 0], sizes = [2, 32], strides = [1, 1]} : vector<2x128xf32> to vector<2x32xf32>
    %1062 = arith.negf %1061 : vector<2x32xf32>
    %1063 = math.exp %1062 : vector<2x32xf32>
    %cst_150 = arith.constant 1.000000e+00 : f32
    %1064 = vector.broadcast %cst_150 : f32 to vector<2x32xf32>
    %1065 = arith.addf %1064, %1063 : vector<2x32xf32>
    %1066 = arith.divf %1064, %1065 : vector<2x32xf32>
    %1067 = vector.extract_strided_slice %1060 {offsets = [0, 32], sizes = [2, 32], strides = [1, 1]} : vector<2x128xf32> to vector<2x32xf32>
    %1068 = arith.negf %1067 : vector<2x32xf32>
    %1069 = math.exp %1068 : vector<2x32xf32>
    %cst_151 = arith.constant 1.000000e+00 : f32
    %1070 = vector.broadcast %cst_151 : f32 to vector<2x32xf32>
    %1071 = arith.addf %1070, %1069 : vector<2x32xf32>
    %1072 = arith.divf %1070, %1071 : vector<2x32xf32>
    %1073 = vector.extract_strided_slice %1060 {offsets = [0, 64], sizes = [2, 32], strides = [1, 1]} : vector<2x128xf32> to vector<2x32xf32>
    %1074 = math.tanh %1073 : vector<2x32xf32>
    %1075 = vector.extract_strided_slice %1060 {offsets = [0, 96], sizes = [2, 32], strides = [1, 1]} : vector<2x128xf32> to vector<2x32xf32>
    %1076 = arith.negf %1075 : vector<2x32xf32>
    %1077 = math.exp %1076 : vector<2x32xf32>
    %cst_152 = arith.constant 1.000000e+00 : f32
    %1078 = vector.broadcast %cst_152 : f32 to vector<2x32xf32>
    %1079 = arith.addf %1078, %1077 : vector<2x32xf32>
    %1080 = arith.divf %1078, %1079 : vector<2x32xf32>
    %1081 = arith.mulf %1072, %949 : vector<2x32xf32>
    %1082 = arith.mulf %1066, %1074 : vector<2x32xf32>
    %1083 = arith.addf %1081, %1082 : vector<2x32xf32>
    %1084 = math.tanh %1083 : vector<2x32xf32>
    %1085 = arith.mulf %1080, %1084 : vector<2x32xf32>
    %cst_153 = arith.constant 0.000000e+00 : f32
    %1086 = vector.broadcast %cst_153 : f32 to vector<2x32xf32>
    %1087 = arith.maximumf %1085, %1086 : vector<2x32xf32>
    %c0_154 = arith.constant 0 : index
    %c0_155 = arith.constant 0 : index
    %1088 = vector.load %arg7[%c0_154, %c0_155] : memref<32x1xf32, #tpu.memory_space<vmem>>, vector<32x1xf32>
    %cst_156 = arith.constant dense<0.000000e+00> : vector<2x1xf32>
    %1089 = tpu.matmul %1087, %1088, %cst_156 {dimension_numbers = #tpu.dot_dimension_numbers<[1], [0], [0], [1], [0, 0, 1, 1], [], []>} : vector<2x32xf32>, vector<32x1xf32>, vector<2x1xf32> -> vector<2x1xf32>
    %c0_157 = arith.constant 0 : index
    %c0_158 = arith.constant 0 : index
    %1090 = vector.load %arg8[%c0_157, %c0_158] : memref<1x1xf32, #tpu.memory_space<vmem>>, vector<1x1xf32>
    %1091 = vector.broadcast %1090 : vector<1x1xf32> to vector<2x1xf32>
    %1092 = arith.addf %1089, %1091 : vector<2x1xf32>
    %c0_159 = arith.constant 0 : index
    %c0_160 = arith.constant 0 : index
    %1093 = vector.load %arg9[%c0_159, %c0_160] : memref<2x1xf32, #tpu.memory_space<vmem>>, vector<2x1xf32>
    tpu.vector_store %arg9[%c0_159, %c0_160], %1092 {strides = array<i32>} : memref<2x1xf32, #tpu.memory_space<vmem>>, vector<2x1xf32>,
    return
  }
}

</mosaic_0001>

<llo_original>
// kernel: net_forward.1
$region0: #{net_forward.1}
  #allocation0 [shape = 'u32[]', space=smem, size = 0x4, offset = 0x4, fixed_abs, tag = 'smem constant byte address 0x4 - core index']
  #allocation1 [shape = 'u32[144,128]{1,0:T(1,128)}', space=vmem, size = 0x12000, scoped, tag = 'internal scratch']
  #allocation2 [shape = 'f32[1,1]{1,0:T(1,128)S(1)}', space=vmem, size = 0x200, scoped, tag = 'scoped memory for net_forward.1']
  #allocation3 [shape = 'f32[1,1]{1,0:T(1,128)S(1)}', space=vmem, size = 0x200, scoped, tag = 'scoped memory for net_forward.1']
  %s0 = inlined_call_operand.vmem [shape: f32[16,20], index: 0, kind: input, shape index: {}]
  %s1 = inlined_call_operand.vmem [shape: f32[20,320], index: 1, kind: input, shape index: {}]
  %s2 = inlined_call_operand.vmem [shape: f32[1,320], index: 2, kind: input, shape index: {}]
  %s3 = inlined_call_operand.vmem [shape: f32[64,352], index: 3, kind: input, shape index: {}]
  %s4 = inlined_call_operand.<no memory space> [shape: f32[1,1], index: 4, kind: input, shape index: {}]
  %s5 = inlined_call_operand.vmem [shape: f32[64,128], index: 5, kind: input, shape index: {}]
  %s6 = inlined_call_operand.vmem [shape: f32[1,128], index: 6, kind: input, shape index: {}]
  %s7 = inlined_call_operand.vmem [shape: f32[32,1], index: 7, kind: input, shape index: {}]
  %s8 = inlined_call_operand.<no memory space> [shape: f32[1,1], index: 8, kind: input, shape index: {}]
  %s9 = inlined_call_operand.vmem [shape: f32[2,1], index: 9, kind: output, shape index: {}]
  %s10 = sld [smem:[#allocation0]]
  $region46: #{net_forward.1} parent=0
    _
  %s12 = ssub.s32 1, %s10
  %s13 = scalar_select 0, %s12, %s10
  %v14 = vstv %s4
  %15 = vst [vmem:[#allocation2] sm:$0x1] %v14
  %v16 = vstv %s8
  %17 = vst [vmem:[#allocation3] sm:$0x1] %v16
  // Predicated region
  $region2: #{net_forward.1} parent=0 // pred_check
    _
  $region3: #{net_forward.1} parent=0 // pred_check_branch
    %19 = sbr.rel (0) target = $region5
  $region4: #{net_forward.1} parent=0 // pred_region
    _
  $region5: #{net_forward.1} parent=0 // pred_fallthru
    _
  // Predicated region
  $region6: #{net_forward.1} parent=0 // pred_check
    _
  $region7: #{net_forward.1} parent=0 // pred_check_branch
    %21 = sbr.rel (0) target = $region9
  $region8: #{net_forward.1} parent=0 // pred_region
    _
  $region9: #{net_forward.1} parent=0 // pred_fallthru
    _
  // Predicated region
  $region10: #{net_forward.1} parent=0 // pred_check
    _
  $region11: #{net_forward.1} parent=0 // pred_check_branch
    %23 = sbr.rel (0) target = $region13
  $region12: #{net_forward.1} parent=0 // pred_region
    _
  $region13: #{net_forward.1} parent=0 // pred_fallthru
    _
  // Predicated region
  $region14: #{net_forward.1} parent=0 // pred_check
    _
  $region15: #{net_forward.1} parent=0 // pred_check_branch
    %25 = sbr.rel (0) target = $region17
  $region16: #{net_forward.1} parent=0 // pred_region
    _
  $region17: #{net_forward.1} parent=0 // pred_fallthru
    _
  // Predicated region
  $region18: #{net_forward.1} parent=0 // pred_check
    _
  $region19: #{net_forward.1} parent=0 // pred_check_branch
    %27 = sbr.rel (0) target = $region21
  $region20: #{net_forward.1} parent=0 // pred_region
    _
  $region21: #{net_forward.1} parent=0 // pred_fallthru
    _
  // Predicated region
  $region22: #{net_forward.1} parent=0 // pred_check
    _
  $region23: #{net_forward.1} parent=0 // pred_check_branch
    %29 = sbr.rel (0) target = $region25
  $region24: #{net_forward.1} parent=0 // pred_region
    _
  $region25: #{net_forward.1} parent=0 // pred_fallthru
    _
  // Predicated region
  $region26: #{net_forward.1} parent=0 // pred_check
    _
  $region27: #{net_forward.1} parent=0 // pred_check_branch
    %31 = sbr.rel (0) target = $region29
  $region28: #{net_forward.1} parent=0 // pred_region
    _
  $region29: #{net_forward.1} parent=0 // pred_fallthru
    _
  // Predicated region
  $region30: #{net_forward.1} parent=0 // pred_check
    _
  $region31: #{net_forward.1} parent=0 // pred_check_branch
    %33 = sbr.rel (0) target = $region33
  $region32: #{net_forward.1} parent=0 // pred_region
    _
  $region33: #{net_forward.1} parent=0 // pred_fallthru
    _
  // Predicated region
  $region34: #{net_forward.1} parent=0 // pred_check
    _
  $region35: #{net_forward.1} parent=0 // pred_check_branch
    %35 = sbr.rel (0) target = $region37
  $region36: #{net_forward.1} parent=0 // pred_region
    _
  $region37: #{net_forward.1} parent=0 // pred_fallthru
    _
  %v36 = vld [vmem:[%s0] sm:$0xff]
  %v37 = vld [vmem:[%s0 + $0x8] sm:$0xff]
  %v38 = vld [vmem:[%s1] sm:$0xff]
  %v39 = vld [vmem:[%s1 + $0x8] sm:$0xff]
  %v40 = vld [vmem:[%s1 + $0x10] sm:$0xff]
  %v41 = vld [vmem:[%s1 + $0x18] sm:$0xff]
  %v42 = vld [vmem:[%s1 + $0x20] sm:$0xff]
  %v43 = vld [vmem:[%s1 + $0x28] sm:$0xff]
  %v44 = vld [vmem:[%s1 + $0x30] sm:$0xf]
  %v45 = vld [vmem:[%s1 + $0x38] sm:$0xf]
  %v46 = vld [vmem:[%s1 + $0x40] sm:$0xf]
  %v47 = vld [vmem:[%s2] sm:$0x7]
  %v49 = vlaneseq
  %v50 = vshrl.u32 %v49, 7
  %v51 = vsub.s32 0, %v50
  %v52 = vrot.slane %v47, %v51
  %v53 = vlaneseq
  %v54 = vshrl.u32 %v53, 7
  %v55 = vsub.s32 1, %v54
  %v56 = vrot.slane %v47, %v55
  %v57 = vlaneseq
  %v58 = vshrl.u32 %v57, 7
  %v59 = vsub.s32 2, %v58
  %v60 = vrot.slane %v47, %v59
  %vm64 = vcmask 162816
  %v66 = vsel %vm64, %v36, 0
  %v69 = vsel %vm64, %v37, 0
  %vm71 = vcmask 1043456
  %v73 = vsel %vm71, %v44, 0
  %v76 = vsel %vm71, %v45, 0
  %v79 = vsel %vm71, %v46, 0
  %81 = vmatprep.subr.mxu0 %v39
  %82 = vmatpush1.msra.mxu0 %v38
  %83 = vmatprep.subr.mxu0 %v42
  %84 = vmatpush1.msra.mxu0 %v41
  %85 = vmatprep.subr.mxu0 %v76
  %86 = vmatpush1.msra.mxu0 %v73
  %87 = vmatprep.subr.mxu0 0.0
  %88 = vmatpush1.msra.mxu0 0.0
  %89 = vmatprep.subr.mxu0 0.0
  %90 = vmatpush1.msra.mxu0 0.0
  %91 = vmatprep.subr.mxu0 0.0
  %92 = vmatpush1.msra.mxu0 0.0
  %93 = vmatprep.subr.mxu0 0.0
  %94 = vmatpush1.msra.mxu0 0.0
  %95 = vmatprep.subr.mxu0 0.0
  %96 = vmatpush1.msra.mxu0 0.0
  %97 = vmatprep.subr.mxu0 0.0
  %98 = vmatpush1.msra.mxu0 0.0
  %99 = vmatprep.subr.mxu0 0.0
  %100 = vmatpush1.msra.mxu0 0.0
  %101 = vmatprep.subr.mxu0 0.0
  %102 = vmatpush1.msra.mxu0 0.0
  %103 = vmatprep.subr.mxu0 0.0
  %104 = vmatpush1.msra.mxu0 0.0
  %105 = vmatprep.subr.mxu0 0.0
  %106 = vmatpush1.msra.mxu0 0.0
  %107 = vmatprep.subr.mxu0 0.0
  %108 = vmatpush1.msra.mxu0 0.0
  %109 = vmatprep.subr.mxu0 0.0
  %110 = vmatpush1.msra.mxu0 0.0
  %111 = vmatprep.subr.mxu0 0.0
  %112 = vmatpush1.msra.mxu0 0.0
  %113 = vmatprep.subr.mxu0 0.0
  %114 = vmatpush1.msra.mxu0 0.0
  %115 = vmatprep.subr.mxu0 0.0
  %116 = vmatpush1.msra.mxu0 0.0
  %117 = vmatprep.subr.mxu0 0.0
  %118 = vmatpush1.msra.mxu0 0.0
  %119 = vmatprep.subr.mxu0 0.0
  %120 = vmatpush1.msra.mxu0 0.0
  %121 = vmatprep.subr.mxu0 0.0
  %122 = vmatpush1.msra.mxu0 0.0
  %123 = vmatprep.subr.mxu0 0.0
  %124 = vmatpush1.msra.mxu0 0.0
  %125 = vmatprep.subr.mxu0 0.0
  %126 = vmatpush1.msra.mxu0 0.0
  %127 = vmatprep.subr.mxu0 0.0
  %128 = vmatpush1.msra.mxu0 0.0
  %129 = vmatprep.subr.mxu0 0.0
  %130 = vmatpush1.msra.mxu0 0.0
  %131 = vmatprep.subr.mxu0 0.0
  %132 = vmatpush1.msra.mxu0 0.0
  %133 = vmatprep.subr.mxu0 0.0
  %134 = vmatpush1.msra.mxu0 0.0
  %135 = vmatprep.subr.mxu0 0.0
  %136 = vmatpush1.msra.mxu0 0.0
  %137 = vmatprep.subr.mxu0 0.0
  %138 = vmatpush1.msra.mxu0 0.0
  %139 = vmatprep.subr.mxu0 0.0
  %140 = vmatpush1.msra.mxu0 0.0
  %141 = vmatprep.subr.mxu0 0.0
  %142 = vmatpush1.msra.mxu0 0.0
  %143 = vmatprep.subr.mxu0 0.0
  %144 = vmatpush1.msra.mxu0 0.0
  %145 = vmatprep.mubr.f32.mxu0 0.0
  %146 = vmatmul.mubr.f32.gmra.mrb[0].mxu0 %v66
  %v147 = vpop.f32.mrb[0].mxu0
  %v148 = vadd.f32 %v52, %v147
  %v149 = vpop.f32.mrb[0].mxu0
  %v150 = vadd.f32 %v56, %v149
  %151 = vmatprep.mubr.f32.mxu0 0.0
  %152 = vmatmul.mubr.f32.gmra.mrb[0].mxu0 %v69
  %v153 = vpop.f32.mrb[0].mxu0
  %v154 = vadd.f32 %v52, %v153
  %v155 = vpop.f32.mrb[0].mxu0
  %v156 = vadd.f32 %v56, %v155
  %157 = vdwg.mxu0
  %158 = vmatprep.subr.mxu0 0.0
  %159 = vmatpush1.msra.mxu0 %v40
  %160 = vmatprep.subr.mxu0 0.0
  %161 = vmatpush1.msra.mxu0 %v43
  %162 = vmatprep.subr.mxu0 0.0
  %163 = vmatpush1.msra.mxu0 %v79
  %164 = vmatprep.subr.mxu0 0.0
  %165 = vmatpush1.msra.mxu0 0.0
  %166 = vmatprep.subr.mxu0 0.0
  %167 = vmatpush1.msra.mxu0 0.0
  %168 = vmatprep.subr.mxu0 0.0
  %169 = vmatpush1.msra.mxu0 0.0
  %170 = vmatprep.subr.mxu0 0.0
  %171 = vmatpush1.msra.mxu0 0.0
  %172 = vmatprep.subr.mxu0 0.0
  %173 = vmatpush1.msra.mxu0 0.0
  %174 = vmatprep.subr.mxu0 0.0
  %175 = vmatpush1.msra.mxu0 0.0
  %176 = vmatprep.subr.mxu0 0.0
  %177 = vmatpush1.msra.mxu0 0.0
  %178 = vmatprep.subr.mxu0 0.0
  %179 = vmatpush1.msra.mxu0 0.0
  %180 = vmatprep.subr.mxu0 0.0
  %181 = vmatpush1.msra.mxu0 0.0
  %182 = vmatprep.subr.mxu0 0.0
  %183 = vmatpush1.msra.mxu0 0.0
  %184 = vmatprep.subr.mxu0 0.0
  %185 = vmatpush1.msra.mxu0 0.0
  %186 = vmatprep.subr.mxu0 0.0
  %187 = vmatpush1.msra.mxu0 0.0
  %188 = vmatprep.subr.mxu0 0.0
  %189 = vmatpush1.msra.mxu0 0.0
  %190 = vmatprep.subr.mxu0 0.0
  %191 = vmatpush1.msra.mxu0 0.0
  %192 = vmatprep.subr.mxu0 0.0
  %193 = vmatpush1.msra.mxu0 0.0
  %194 = vmatprep.subr.mxu0 0.0
  %195 = vmatpush1.msra.mxu0 0.0
  %196 = vmatprep.subr.mxu0 0.0
  %197 = vmatpush1.msra.mxu0 0.0
  %198 = vmatprep.subr.mxu0 0.0
  %199 = vmatpush1.msra.mxu0 0.0
  %200 = vmatprep.subr.mxu0 0.0
  %201 = vmatpush1.msra.mxu0 0.0
  %202 = vmatprep.subr.mxu0 0.0
  %203 = vmatpush1.msra.mxu0 0.0
  %204 = vmatprep.subr.mxu0 0.0
  %205 = vmatpush1.msra.mxu0 0.0
  %206 = vmatprep.subr.mxu0 0.0
  %207 = vmatpush1.msra.mxu0 0.0
  %208 = vmatprep.subr.mxu0 0.0
  %209 = vmatpush1.msra.mxu0 0.0
  %210 = vmatprep.subr.mxu0 0.0
  %211 = vmatpush1.msra.mxu0 0.0
  %212 = vmatprep.subr.mxu0 0.0
  %213 = vmatpush1.msra.mxu0 0.0
  %214 = vmatprep.subr.mxu0 0.0
  %215 = vmatpush1.msra.mxu0 0.0
  %216 = vmatprep.subr.mxu0 0.0
  %217 = vmatpush1.msra.mxu0 0.0
  %218 = vmatprep.subr.mxu0 0.0
  %219 = vmatpush1.msra.mxu0 0.0
  %220 = vmatprep.subr.mxu0 0.0
  %221 = vmatpush1.msra.mxu0 0.0
  %222 = vmatprep.mubr.f32.mxu0 0.0
  %223 = vmatmul.mubr.f32.gmra.mrb[0].mxu0 %v66
  %v224 = vpop.f32.mrb[0].mxu0
  %v225 = vadd.f32 %v60, %v224
  %v226 = vpop.f32.mrb[0].mxu0
  %227 = vmatprep.mubr.f32.mxu0 0.0
  %228 = vmatmul.mubr.f32.gmra.mrb[0].mxu0 %v69
  %v229 = vpop.f32.mrb[0].mxu0
  %v230 = vadd.f32 %v60, %v229
  %v231 = vpop.f32.mrb[0].mxu0
  %232 = vdwg.mxu0
  %v233 = vld [vmem:[%s3] sm:$0xff]
  %v234 = vld [vmem:[%s3 + $0x8] sm:$0xff]
  %v235 = vld [vmem:[%s3 + $0x10] sm:$0xff]
  %v236 = vld [vmem:[%s3 + $0x18] sm:$0xff]
  %v237 = vld [vmem:[%s3 + $0x20] sm:$0xff]
  %v238 = vld [vmem:[%s3 + $0x28] sm:$0xff]
  %v239 = vld [vmem:[%s3 + $0x30] sm:$0xff]
  %v240 = vld [vmem:[%s3 + $0x38] sm:$0xff]
  %v241 = vld [vmem:[%s3 + $0x40] sm:$0xff]
  %v242 = vld [vmem:[%s3 + $0x48] sm:$0xff]
  %v243 = vld [vmem:[%s3 + $0x50] sm:$0xff]
  %v244 = vld [vmem:[%s3 + $0x58] sm:$0xff]
  %v245 = vld [vmem:[%s3 + $0x60] sm:$0xff]
  %v246 = vld [vmem:[%s3 + $0x68] sm:$0xff]
  %v247 = vld [vmem:[%s3 + $0x70] sm:$0xff]
  %v248 = vld [vmem:[%s3 + $0x78] sm:$0xff]
  %v249 = vld [vmem:[%s3 + $0x80] sm:$0xff]
  %v250 = vld [vmem:[%s3 + $0x88] sm:$0xff]
  %v251 = vld [vmem:[%s3 + $0x90] sm:$0xff]
  %v252 = vld [vmem:[%s3 + $0x98] sm:$0xff]
  %v253 = vld [vmem:[%s3 + $0xa0] sm:$0xff]
  %v254 = vld [vmem:[%s3 + $0xa8] sm:$0xff]
  %v255 = vld [vmem:[%s3 + $0xb0] sm:$0xff]
  %v256 = vld [vmem:[%s3 + $0xb8] sm:$0xff]
  %v257 = vld [vmem:[%s5] sm:$0xff]
  %v258 = vld [vmem:[%s5 + $0x8] sm:$0xff]
  %v259 = vld [vmem:[%s5 + $0x10] sm:$0xff]
  %v260 = vld [vmem:[%s5 + $0x18] sm:$0xff]
  %v261 = vld [vmem:[%s5 + $0x20] sm:$0xff]
  %v262 = vld [vmem:[%s5 + $0x28] sm:$0xff]
  %v263 = vld [vmem:[%s5 + $0x30] sm:$0xff]
  %v264 = vld [vmem:[%s5 + $0x38] sm:$0xff]
  %v265 = vld [vmem:[%s6] sm:$0x1]
  %v266 = vld [vmem:[#allocation2] sm:$0x1]
  %vm267 = vcmask 523264
  %v269 = vsel %vm267, 0.0, 0
  %271 = vmatprep.subr.mxu0 %v234
  %272 = vmatpush1.msra.mxu0 %v233
  %273 = vmatprep.subr.mxu0 %v237
  %274 = vmatpush1.msra.mxu0 %v236
  %275 = vmatprep.subr.mxu0 %v240
  %276 = vmatpush1.msra.mxu0 %v239
  %277 = vmatprep.subr.mxu0 %v243
  %278 = vmatpush1.msra.mxu0 %v242
  %279 = vmatprep.subr.mxu0 %v246
  %280 = vmatpush1.msra.mxu0 %v245
  %281 = vmatprep.subr.mxu0 %v249
  %282 = vmatpush1.msra.mxu0 %v248
  %283 = vmatprep.subr.mxu0 %v252
  %284 = vmatpush1.msra.mxu0 %v251
  %285 = vmatprep.subr.mxu0 %v255
  %286 = vmatpush1.msra.mxu0 %v254
  %287 = vmatprep.subr.mxu0 0.0
  %288 = vmatpush1.msra.mxu0 0.0
  %289 = vmatprep.subr.mxu0 0.0
  %290 = vmatpush1.msra.mxu0 0.0
  %291 = vmatprep.subr.mxu0 0.0
  %292 = vmatpush1.msra.mxu0 0.0
  %293 = vmatprep.subr.mxu0 0.0
  %294 = vmatpush1.msra.mxu0 0.0
  %295 = vmatprep.subr.mxu0 0.0
  %296 = vmatpush1.msra.mxu0 0.0
  %297 = vmatprep.subr.mxu0 0.0
  %298 = vmatpush1.msra.mxu0 0.0
  %299 = vmatprep.subr.mxu0 0.0
  %300 = vmatpush1.msra.mxu0 0.0
  %301 = vmatprep.subr.mxu0 0.0
  %302 = vmatpush1.msra.mxu0 0.0
  %303 = vmatprep.subr.mxu0 0.0
  %304 = vmatpush1.msra.mxu0 0.0
  %305 = vmatprep.subr.mxu0 0.0
  %306 = vmatpush1.msra.mxu0 0.0
  %307 = vmatprep.subr.mxu0 0.0
  %308 = vmatpush1.msra.mxu0 0.0
  %309 = vmatprep.subr.mxu0 0.0
  %310 = vmatpush1.msra.mxu0 0.0
  %311 = vmatprep.subr.mxu0 0.0
  %312 = vmatpush1.msra.mxu0 0.0
  %313 = vmatprep.subr.mxu0 0.0
  %314 = vmatpush1.msra.mxu0 0.0
  %315 = vmatprep.subr.mxu0 0.0
  %316 = vmatpush1.msra.mxu0 0.0
  %317 = vmatprep.subr.mxu0 0.0
  %318 = vmatpush1.msra.mxu0 0.0
  %319 = vmatprep.subr.mxu0 0.0
  %320 = vmatpush1.msra.mxu0 0.0
  %321 = vmatprep.subr.mxu0 0.0
  %322 = vmatpush1.msra.mxu0 0.0
  %323 = vmatprep.subr.mxu0 0.0
  %324 = vmatpush1.msra.mxu0 0.0
  %325 = vmatprep.subr.mxu0 0.0
  %326 = vmatpush1.msra.mxu0 0.0
  %327 = vmatprep.subr.mxu0 0.0
  %328 = vmatpush1.msra.mxu0 0.0
  %329 = vmatprep.subr.mxu0 0.0
  %330 = vmatpush1.msra.mxu0 0.0
  %331 = vmatprep.subr.mxu0 0.0
  %332 = vmatpush1.msra.mxu0 0.0
  %333 = vmatprep.subr.mxu0 0.0
  %334 = vmatpush1.msra.mxu0 0.0
  %335 = vmatprep.mubr.f32.mxu0 0.0
  %336 = vmatmul.mubr.f32.gmra.mrb[0].mxu0 %v269
  %v337 = vpop.f32.mrb[0].mxu0
  %v338 = vadd.f32 0.0, %v337
  %v339 = vpop.f32.mrb[0].mxu0
  %v340 = vadd.f32 0.0, %v339
  %341 = vdwg.mxu0
  %342 = vmatprep.subr.mxu0 0.0
  %343 = vmatpush1.msra.mxu0 %v235
  %344 = vmatprep.subr.mxu0 0.0
  %345 = vmatpush1.msra.mxu0 %v238
  %346 = vmatprep.subr.mxu0 0.0
  %347 = vmatpush1.msra.mxu0 %v241
  %348 = vmatprep.subr.mxu0 0.0
  %349 = vmatpush1.msra.mxu0 %v244
  %350 = vmatprep.subr.mxu0 0.0
  %351 = vmatpush1.msra.mxu0 %v247
  %352 = vmatprep.subr.mxu0 0.0
  %353 = vmatpush1.msra.mxu0 %v250
  %354 = vmatprep.subr.mxu0 0.0
  %355 = vmatpush1.msra.mxu0 %v253
  %356 = vmatprep.subr.mxu0 0.0
  %357 = vmatpush1.msra.mxu0 %v256
  %358 = vmatprep.subr.mxu0 0.0
  %359 = vmatpush1.msra.mxu0 0.0
  %360 = vmatprep.subr.mxu0 0.0
  %361 = vmatpush1.msra.mxu0 0.0
  %362 = vmatprep.subr.mxu0 0.0
  %363 = vmatpush1.msra.mxu0 0.0
  %364 = vmatprep.subr.mxu0 0.0
  %365 = vmatpush1.msra.mxu0 0.0
  %366 = vmatprep.subr.mxu0 0.0
  %367 = vmatpush1.msra.mxu0 0.0
  %368 = vmatprep.subr.mxu0 0.0
  %369 = vmatpush1.msra.mxu0 0.0
  %370 = vmatprep.subr.mxu0 0.0
  %371 = vmatpush1.msra.mxu0 0.0
  %372 = vmatprep.subr.mxu0 0.0
  %373 = vmatpush1.msra.mxu0 0.0
  %374 = vmatprep.subr.mxu0 0.0
  %375 = vmatpush1.msra.mxu0 0.0
  %376 = vmatprep.subr.mxu0 0.0
  %377 = vmatpush1.msra.mxu0 0.0
  %378 = vmatprep.subr.mxu0 0.0
  %379 = vmatpush1.msra.mxu0 0.0
  %380 = vmatprep.subr.mxu0 0.0
  %381 = vmatpush1.msra.mxu0 0.0
  %382 = vmatprep.subr.mxu0 0.0
  %383 = vmatpush1.msra.mxu0 0.0
  %384 = vmatprep.subr.mxu0 0.0
  %385 = vmatpush1.msra.mxu0 0.0
  %386 = vmatprep.subr.mxu0 0.0
  %387 = vmatpush1.msra.mxu0 0.0
  %388 = vmatprep.subr.mxu0 0.0
  %389 = vmatpush1.msra.mxu0 0.0
  %390 = vmatprep.subr.mxu0 0.0
  %391 = vmatpush1.msra.mxu0 0.0
  %392 = vmatprep.subr.mxu0 0.0
  %393 = vmatpush1.msra.mxu0 0.0
  %394 = vmatprep.subr.mxu0 0.0
  %395 = vmatpush1.msra.mxu0 0.0
  %396 = vmatprep.subr.mxu0 0.0
  %397 = vmatpush1.msra.mxu0 0.0
  %398 = vmatprep.subr.mxu0 0.0
  %399 = vmatpush1.msra.mxu0 0.0
  %400 = vmatprep.subr.mxu0 0.0
  %401 = vmatpush1.msra.mxu0 0.0
  %402 = vmatprep.subr.mxu0 0.0
  %403 = vmatpush1.msra.mxu0 0.0
  %404 = vmatprep.subr.mxu0 0.0
  %405 = vmatpush1.msra.mxu0 0.0
  %406 = vmatprep.mubr.f32.mxu0 0.0
  %407 = vmatmul.mubr.f32.gmra.mrb[0].mxu0 %v269
  %v408 = vpop.f32.mrb[0].mxu0
  %v409 = vadd.f32 0.0, %v408
  %v410 = vpop.f32.mrb[0].mxu0
  %411 = vdwg.mxu0
  %v412 = vadd.f32 %v148, %v338
  %v413 = vxor.u32 %v412, 2147483648
  %v414 = vmul.f32 %v413, 1.442695
  %v415 = vpow.pop %v414
  %v416 = vadd.f32 %v415, 1.0
  %v417 = vrcp.pop %v416
  %v418 = vmul.f32 1.0, %v417
  %v419 = vtanh.pop %v412
  %v420 = vadd.f32 %v150, %v340
  %v421 = vadd.f32 %v225, %v409
  %423 = vrot.lane.b32.xlu0 %v419, 32
  %v424 = vpop.permute.xlu0 %423
  %v426 = vmul.f32 %v418, %v424
  %v427 = vxor.u32 %v420, 2147483648
  %v428 = vmul.f32 %v427, 1.442695
  %v429 = vpow.pop %v428
  %v430 = vadd.f32 %v429, 1.0
  %v431 = vrcp.pop %v430
  %v432 = vmul.f32 1.0, %v431
  %v433 = vtanh.pop %v420
  %435 = vrot.lane.b32.xlu0 %v433, 96
  %v436 = vpop.permute.xlu0 %435
  %v438 = vmul.f32 %v432, %v436
  %v439 = vxor.u32 %v421, 2147483648
  %v440 = vmul.f32 %v439, 1.442695
  %v441 = vpow.pop %v440
  %v442 = vadd.f32 %v441, 1.0
  %v443 = vrcp.pop %v442
  %v444 = vmul.f32 1.0, %v443
  %v445 = vtanh.pop %v421
  %447 = vrot.lane.b32.xlu0 %v445, 96
  %v448 = vpop.permute.xlu0 %447
  %v450 = vmul.f32 %v444, %v448
  %452 = vrot.lane.b32.xlu0 %v409, 64
  %v453 = vpop.permute.xlu0 %452
  %v455 = vmul.f32 %v426, %v453
  %vm456 = vcmask 254976
  %v457 = vsel %vm456, %v455, 0.0
  %458 = vadd.xlane.f32.xlu0 %v457
  %v459 = vpop.xlane.xlu0 %458
  %v460 = vmul.f32 %v438, %v453
  %v461 = vsel %vm456, %v460, 0.0
  %462 = vadd.xlane.f32.xlu0 %v461
  %v463 = vpop.xlane.xlu0 %462
  %v464 = vmul.f32 %v438, %v409
  %466 = vrot.lane.b32.xlu0 %v464, 64
  %v467 = vpop.permute.xlu0 %466
  %v469 = vsel %vm456, %v467, 0.0
  %470 = vadd.xlane.f32.xlu0 %v469
  %v471 = vpop.xlane.xlu0 %470
  %v472 = vmul.f32 %v450, %v453
  %v473 = vsel %vm456, %v472, 0.0
  %474 = vadd.xlane.f32.xlu0 %v473
  %v475 = vpop.xlane.xlu0 %474
  %vm476 = vcmask 7168
  %v477 = vsel %vm476, %v459, %v463
  %vm478 = vcmask 15360
  %v479 = vsel %vm478, %v477, %v471
  %vm480 = vcmask 23552
  %v481 = vsel %vm480, %v479, %v475
  %v483 = vlaneseq
  %v484 = vshrl.u32 %v483, 7
  %v485 = vsub.s32 0, %v484
  %v486 = vrot.slane %v266, %v485
  %487 = vset.pattern.permute.xlu0 0
  %488 = vperm.xlu0 %487, %v486
  %v489 = vpop.permute.xlu0 %488
  %v491 = vadd.f32 %v481, %v489
  %v492 = vtanh.pop %v491
  %vm493 = vcmask 25600
  %v494 = vsel %vm493, %v492, -inf
  %495 = vmax.xlane.f32.xlu0 %v494
  %v496 = vpop.xlane.xlu0 %495
  %v497 = vsub.f32 %v492, %v496
  %v498 = vmul.f32 %v497, 1.442695
  %v499 = vpow.pop %v498
  %v500 = vsel %vm493, %v499, 0.0
  %501 = vadd.xlane.f32.xlu0 %v500
  %v502 = vpop.xlane.xlu0 %501
  %v503 = vrcp.pop %v502
  %v504 = vmul.f32 %v499, %v503
  %506 = vset.pattern.permute.xlu0 0
  %507 = vperm.xlu0 %506, %v504
  %v508 = vpop.permute.xlu0 %507
  %v510 = vmul.f32 %v508, %v426
  %511 = vset.pattern.permute.xlu0 1
  %512 = vperm.xlu0 %511, %v504
  %v513 = vpop.permute.xlu0 %512
  %v515 = vmul.f32 %v513, %v438
  %v516 = vadd.f32 %v510, %v515
  %517 = vset.pattern.permute.xlu0 2
  %518 = vperm.xlu0 %517, %v504
  %v519 = vpop.permute.xlu0 %518
  %v521 = vmul.f32 %v519, %v438
  %523 = vrot.lane.b32.xlu0 %v521, 64
  %v524 = vpop.permute.xlu0 %523
  %v526 = vadd.f32 %v516, %v524
  %527 = vset.pattern.permute.xlu0 3
  %528 = vperm.xlu0 %527, %v504
  %v529 = vpop.permute.xlu0 %528
  %v531 = vmul.f32 %v529, %v450
  %v532 = vadd.f32 %v526, %v531
  %v533 = vmul.f32 %v418, 0.0
  %535 = vrot.lane.b32.xlu0 %v532, 32
  %v536 = vpop.permute.xlu0 %535
  %v538 = vadd.f32 %v533, %v536
  %v539 = vtanh.pop %v538
  %541 = vrot.lane.b32.xlu0 %v539, 32
  %v542 = vpop.permute.xlu0 %541
  %v544 = vmul.f32 %v418, %v542
  %546 = vrot.lane.b32.xlu0 %v544, 64
  %v547 = vpop.permute.xlu0 %546
  %vm549 = vcmask 261120
  %v550 = vsel %vm549, %v547, 0.0
  %v552 = vlaneseq
  %v553 = vshrl.u32 %v552, 7
  %v554 = vsub.s32 0, %v553
  %v555 = vrot.slane %v265, %v554
  %v558 = vsel %vm267, %v550, 0
  %560 = vmatprep.subr.mxu0 0.0
  %561 = vmatpush1.msra.mxu0 %v257
  %562 = vmatprep.subr.mxu0 0.0
  %563 = vmatpush1.msra.mxu0 %v258
  %564 = vmatprep.subr.mxu0 0.0
  %565 = vmatpush1.msra.mxu0 %v259
  %566 = vmatprep.subr.mxu0 0.0
  %567 = vmatpush1.msra.mxu0 %v260
  %568 = vmatprep.subr.mxu0 0.0
  %569 = vmatpush1.msra.mxu0 %v261
  %570 = vmatprep.subr.mxu0 0.0
  %571 = vmatpush1.msra.mxu0 %v262
  %572 = vmatprep.subr.mxu0 0.0
  %573 = vmatpush1.msra.mxu0 %v263
  %574 = vmatprep.subr.mxu0 0.0
  %575 = vmatpush1.msra.mxu0 %v264
  %576 = vmatprep.subr.mxu0 0.0
  %577 = vmatpush1.msra.mxu0 0.0
  %578 = vmatprep.subr.mxu0 0.0
  %579 = vmatpush1.msra.mxu0 0.0
  %580 = vmatprep.subr.mxu0 0.0
  %581 = vmatpush1.msra.mxu0 0.0
  %582 = vmatprep.subr.mxu0 0.0
  %583 = vmatpush1.msra.mxu0 0.0
  %584 = vmatprep.subr.mxu0 0.0
  %585 = vmatpush1.msra.mxu0 0.0
  %586 = vmatprep.subr.mxu0 0.0
  %587 = vmatpush1.msra.mxu0 0.0
  %588 = vmatprep.subr.mxu0 0.0
  %589 = vmatpush1.msra.mxu0 0.0
  %590 = vmatprep.subr.mxu0 0.0
  %591 = vmatpush1.msra.mxu0 0.0
  %592 = vmatprep.subr.mxu0 0.0
  %593 = vmatpush1.msra.mxu0 0.0
  %594 = vmatprep.subr.mxu0 0.0
  %595 = vmatpush1.msra.mxu0 0.0
  %596 = vmatprep.subr.mxu0 0.0
  %597 = vmatpush1.msra.mxu0 0.0
  %598 = vmatprep.subr.mxu0 0.0
  %599 = vmatpush1.msra.mxu0 0.0
  %600 = vmatprep.subr.mxu0 0.0
  %601 = vmatpush1.msra.mxu0 0.0
  %602 = vmatprep.subr.mxu0 0.0
  %603 = vmatpush1.msra.mxu0 0.0
  %604 = vmatprep.subr.mxu0 0.0
  %605 = vmatpush1.msra.mxu0 0.0
  %606 = vmatprep.subr.mxu0 0.0
  %607 = vmatpush1.msra.mxu0 0.0
  %608 = vmatprep.subr.mxu0 0.0
  %609 = vmatpush1.msra.mxu0 0.0
  %610 = vmatprep.subr.mxu0 0.0
  %611 = vmatpush1.msra.mxu0 0.0
  %612 = vmatprep.subr.mxu0 0.0
  %613 = vmatpush1.msra.mxu0 0.0
  %614 = vmatprep.subr.mxu0 0.0
  %615 = vmatpush1.msra.mxu0 0.0
  %616 = vmatprep.subr.mxu0 0.0
  %617 = vmatpush1.msra.mxu0 0.0
  %618 = vmatprep.subr.mxu0 0.0
  %619 = vmatpush1.msra.mxu0 0.0
  %620 = vmatprep.subr.mxu0 0.0
  %621 = vmatpush1.msra.mxu0 0.0
  %622 = vmatprep.subr.mxu0 0.0
  %623 = vmatpush1.msra.mxu0 0.0
  %624 = vmatprep.mubr.f32.mxu0 0.0
  %625 = vmatmul.mubr.f32.gmra.mrb[0].mxu0 %v558
  %v626 = vpop.f32.mrb[0].mxu0
  %v627 = vadd.f32 %v555, %v626
  %v628 = vpop.f32.mrb[0].mxu0
  %629 = vdwg.mxu0
  %v630 = vxor.u32 %v627, 2147483648
  %v631 = vmul.f32 %v630, 1.442695
  %v632 = vpow.pop %v631
  %v633 = vadd.f32 %v632, 1.0
  %v634 = vrcp.pop %v633
  %v635 = vmul.f32 1.0, %v634
  %v636 = vtanh.pop %v627
  %v637 = vmul.f32 %v635, 0.0
  %639 = vrot.lane.b32.xlu0 %v636, 64
  %v640 = vpop.permute.xlu0 %639
  %v642 = vmul.f32 %v635, %v640
  %644 = vrot.lane.b32.xlu0 %v642, 32
  %v645 = vpop.permute.xlu0 %644
  %v647 = vadd.f32 %v637, %v645
  %v648 = vtanh.pop %v647
  %650 = vrot.lane.b32.xlu0 %v648, 64
  %v651 = vpop.permute.xlu0 %650
  %v653 = vmul.f32 %v635, %v651
  %v654 = vsel %vm549, %v547, %v538
  %v656 = vsel %vm267, %v654, 0
  %658 = vmatprep.subr.mxu0 %v234
  %659 = vmatpush1.msra.mxu0 %v233
  %660 = vmatprep.subr.mxu0 %v237
  %661 = vmatpush1.msra.mxu0 %v236
  %662 = vmatprep.subr.mxu0 %v240
  %663 = vmatpush1.msra.mxu0 %v239
  %664 = vmatprep.subr.mxu0 %v243
  %665 = vmatpush1.msra.mxu0 %v242
  %666 = vmatprep.subr.mxu0 %v246
  %667 = vmatpush1.msra.mxu0 %v245
  %668 = vmatprep.subr.mxu0 %v249
  %669 = vmatpush1.msra.mxu0 %v248
  %670 = vmatprep.subr.mxu0 %v252
  %671 = vmatpush1.msra.mxu0 %v251
  %672 = vmatprep.subr.mxu0 %v255
  %673 = vmatpush1.msra.mxu0 %v254
  %674 = vmatprep.subr.mxu0 0.0
  %675 = vmatpush1.msra.mxu0 0.0
  %676 = vmatprep.subr.mxu0 0.0
  %677 = vmatpush1.msra.mxu0 0.0
  %678 = vmatprep.subr.mxu0 0.0
  %679 = vmatpush1.msra.mxu0 0.0
  %680 = vmatprep.subr.mxu0 0.0
  %681 = vmatpush1.msra.mxu0 0.0
  %682 = vmatprep.subr.mxu0 0.0
  %683 = vmatpush1.msra.mxu0 0.0
  %684 = vmatprep.subr.mxu0 0.0
  %685 = vmatpush1.msra.mxu0 0.0
  %686 = vmatprep.subr.mxu0 0.0
  %687 = vmatpush1.msra.mxu0 0.0
  %688 = vmatprep.subr.mxu0 0.0
  %689 = vmatpush1.msra.mxu0 0.0
  %690 = vmatprep.subr.mxu0 0.0
  %691 = vmatpush1.msra.mxu0 0.0
  %692 = vmatprep.subr.mxu0 0.0
  %693 = vmatpush1.msra.mxu0 0.0
  %694 = vmatprep.subr.mxu0 0.0
  %695 = vmatpush1.msra.mxu0 0.0
  %696 = vmatprep.subr.mxu0 0.0
  %697 = vmatpush1.msra.mxu0 0.0
  %698 = vmatprep.subr.mxu0 0.0
  %699 = vmatpush1.msra.mxu0 0.0
  %700 = vmatprep.subr.mxu0 0.0
  %701 = vmatpush1.msra.mxu0 0.0
  %702 = vmatprep.subr.mxu0 0.0
  %703 = vmatpush1.msra.mxu0 0.0
  %704 = vmatprep.subr.mxu0 0.0
  %705 = vmatpush1.msra.mxu0 0.0
  %706 = vmatprep.subr.mxu0 0.0
  %707 = vmatpush1.msra.mxu0 0.0
  %708 = vmatprep.subr.mxu0 0.0
  %709 = vmatpush1.msra.mxu0 0.0
  %710 = vmatprep.subr.mxu0 0.0
  %711 = vmatpush1.msra.mxu0 0.0
  %712 = vmatprep.subr.mxu0 0.0
  %713 = vmatpush1.msra.mxu0 0.0
  %714 = vmatprep.subr.mxu0 0.0
  %715 = vmatpush1.msra.mxu0 0.0
  %716 = vmatprep.subr.mxu0 0.0
  %717 = vmatpush1.msra.mxu0 0.0
  %718 = vmatprep.subr.mxu0 0.0
  %719 = vmatpush1.msra.mxu0 0.0
  %720 = vmatprep.subr.mxu0 0.0
  %721 = vmatpush1.msra.mxu0 0.0
  %722 = vmatprep.mubr.f32.mxu0 0.0
  %723 = vmatmul.mubr.f32.gmra.mrb[0].mxu0 %v656
  %v724 = vpop.f32.mrb[0].mxu0
  %v725 = vadd.f32 0.0, %v724
  %v726 = vpop.f32.mrb[0].mxu0
  %v727 = vadd.f32 0.0, %v726
  %728 = vdwg.mxu0
  %729 = vmatprep.subr.mxu0 0.0
  %730 = vmatpush1.msra.mxu0 %v235
  %731 = vmatprep.subr.mxu0 0.0
  %732 = vmatpush1.msra.mxu0 %v238
  %733 = vmatprep.subr.mxu0 0.0
  %734 = vmatpush1.msra.mxu0 %v241
  %735 = vmatprep.subr.mxu0 0.0
  %736 = vmatpush1.msra.mxu0 %v244
  %737 = vmatprep.subr.mxu0 0.0
  %738 = vmatpush1.msra.mxu0 %v247
  %739 = vmatprep.subr.mxu0 0.0
  %740 = vmatpush1.msra.mxu0 %v250
  %741 = vmatprep.subr.mxu0 0.0
  %742 = vmatpush1.msra.mxu0 %v253
  %743 = vmatprep.subr.mxu0 0.0
  %744 = vmatpush1.msra.mxu0 %v256
  %745 = vmatprep.subr.mxu0 0.0
  %746 = vmatpush1.msra.mxu0 0.0
  %747 = vmatprep.subr.mxu0 0.0
  %748 = vmatpush1.msra.mxu0 0.0
  %749 = vmatprep.subr.mxu0 0.0
  %750 = vmatpush1.msra.mxu0 0.0
  %751 = vmatprep.subr.mxu0 0.0
  %752 = vmatpush1.msra.mxu0 0.0
  %753 = vmatprep.subr.mxu0 0.0
  %754 = vmatpush1.msra.mxu0 0.0
  %755 = vmatprep.subr.mxu0 0.0
  %756 = vmatpush1.msra.mxu0 0.0
  %757 = vmatprep.subr.mxu0 0.0
  %758 = vmatpush1.msra.mxu0 0.0
  %759 = vmatprep.subr.mxu0 0.0
  %760 = vmatpush1.msra.mxu0 0.0
  %761 = vmatprep.subr.mxu0 0.0
  %762 = vmatpush1.msra.mxu0 0.0
  %763 = vmatprep.subr.mxu0 0.0
  %764 = vmatpush1.msra.mxu0 0.0
  %765 = vmatprep.subr.mxu0 0.0
  %766 = vmatpush1.msra.mxu0 0.0
  %767 = vmatprep.subr.mxu0 0.0
  %768 = vmatpush1.msra.mxu0 0.0
  %769 = vmatprep.subr.mxu0 0.0
  %770 = vmatpush1.msra.mxu0 0.0
  %771 = vmatprep.subr.mxu0 0.0
  %772 = vmatpush1.msra.mxu0 0.0
  %773 = vmatprep.subr.mxu0 0.0
  %774 = vmatpush1.msra.mxu0 0.0
  %775 = vmatprep.subr.mxu0 0.0
  %776 = vmatpush1.msra.mxu0 0.0
  %777 = vmatprep.subr.mxu0 0.0
  %778 = vmatpush1.msra.mxu0 0.0
  %779 = vmatprep.subr.mxu0 0.0
  %780 = vmatpush1.msra.mxu0 0.0
  %781 = vmatprep.subr.mxu0 0.0
  %782 = vmatpush1.msra.mxu0 0.0
  %783 = vmatprep.subr.mxu0 0.0
  %784 = vmatpush1.msra.mxu0 0.0
  %785 = vmatprep.subr.mxu0 0.0
  %786 = vmatpush1.msra.mxu0 0.0
  %787 = vmatprep.subr.mxu0 0.0
  %788 = vmatpush1.msra.mxu0 0.0
  %789 = vmatprep.subr.mxu0 0.0
  %790 = vmatpush1.msra.mxu0 0.0
  %791 = vmatprep.subr.mxu0 0.0
  %792 = vmatpush1.msra.mxu0 0.0
  %793 = vmatprep.mubr.f32.mxu0 0.0
  %794 = vmatmul.mubr.f32.gmra.mrb[0].mxu0 %v656
  %v795 = vpop.f32.mrb[0].mxu0
  %v796 = vadd.f32 0.0, %v795
  %v797 = vpop.f32.mrb[0].mxu0
  %798 = vdwg.mxu0
  %v800 = vrot.slane %v725, 6
  %v802 = vadd.f32 %v148, %v800
  %v803 = vxor.u32 %v802, 2147483648
  %v804 = vmul.f32 %v803, 1.442695
  %v805 = vpow.pop %v804
  %v806 = vadd.f32 %v805, 1.0
  %v807 = vrcp.pop %v806
  %v808 = vmul.f32 1.0, %v807
  %v809 = vtanh.pop %v802
  %v812 = vrot.slane %v727, 6
  %v813 = vrot.slane %v796, 6
  %v816 = vadd.f32 %v150, %v812
  %v817 = vadd.f32 %v225, %v813
  %819 = vrot.lane.b32.xlu0 %v809, 32
  %v820 = vpop.permute.xlu0 %819
  %v822 = vmul.f32 %v808, %v820
  %v823 = vxor.u32 %v816, 2147483648
  %v824 = vmul.f32 %v823, 1.442695
  %v825 = vpow.pop %v824
  %v826 = vadd.f32 %v825, 1.0
  %v827 = vrcp.pop %v826
  %v828 = vmul.f32 1.0, %v827
  %v829 = vtanh.pop %v816
  %831 = vrot.lane.b32.xlu0 %v829, 96
  %v832 = vpop.permute.xlu0 %831
  %v834 = vmul.f32 %v828, %v832
  %v835 = vxor.u32 %v817, 2147483648
  %v836 = vmul.f32 %v835, 1.442695
  %v837 = vpow.pop %v836
  %v838 = vadd.f32 %v837, 1.0
  %v839 = vrcp.pop %v838
  %v840 = vmul.f32 1.0, %v839
  %v841 = vtanh.pop %v817
  %843 = vrot.lane.b32.xlu0 %v841, 96
  %v844 = vpop.permute.xlu0 %843
  %v846 = vmul.f32 %v840, %v844
  %847 = vrot.lane.b32.xlu0 %v813, 64
  %v848 = vpop.permute.xlu0 %847
  %v850 = vmul.f32 %v822, %v848
  %vm851 = vcmask 257026
  %v852 = vsel %vm851, %v850, 0.0
  %853 = vadd.xlane.f32.xlu0 %v852
  %v854 = vpop.xlane.xlu0 %853
  %v855 = vmul.f32 %v834, %v848
  %v856 = vsel %vm851, %v855, 0.0
  %857 = vadd.xlane.f32.xlu0 %v856
  %v858 = vpop.xlane.xlu0 %857
  %v859 = vmul.f32 %v834, %v813
  %861 = vrot.lane.b32.xlu0 %v859, 64
  %v862 = vpop.permute.xlu0 %861
  %v864 = vsel %vm851, %v862, 0.0
  %865 = vadd.xlane.f32.xlu0 %v864
  %v866 = vpop.xlane.xlu0 %865
  %v867 = vmul.f32 %v846, %v848
  %v868 = vsel %vm851, %v867, 0.0
  %869 = vadd.xlane.f32.xlu0 %v868
  %v870 = vpop.xlane.xlu0 %869
  %v871 = vsel %vm476, %v854, %v858
  %v872 = vsel %vm478, %v871, %v866
  %v873 = vsel %vm480, %v872, %v870
  %v874 = vadd.f32 %v873, %v489
  %v875 = vtanh.pop %v874
  %vm876 = vcmask 27650
  %v877 = vsel %vm876, %v875, -inf
  %878 = vmax.xlane.f32.xlu0 %v877
  %v879 = vpop.xlane.xlu0 %878
  %v880 = vsub.f32 %v875, %v879
  %v881 = vmul.f32 %v880, 1.442695
  %v882 = vpow.pop %v881
  %v883 = vsel %vm876, %v882, 0.0
  %884 = vadd.xlane.f32.xlu0 %v883
  %v885 = vpop.xlane.xlu0 %884
  %v886 = vrcp.pop %v885
  %v887 = vmul.f32 %v882, %v886
  %889 = vset.pattern.permute.xlu0 0
  %890 = vperm.xlu0 %889, %v887
  %v891 = vpop.permute.xlu0 %890
  %v893 = vmul.f32 %v891, %v822
  %894 = vset.pattern.permute.xlu0 1
  %895 = vperm.xlu0 %894, %v887
  %v896 = vpop.permute.xlu0 %895
  %v898 = vmul.f32 %v896, %v834
  %v899 = vadd.f32 %v893, %v898
  %900 = vset.pattern.permute.xlu0 2
  %901 = vperm.xlu0 %900, %v887
  %v902 = vpop.permute.xlu0 %901
  %v904 = vmul.f32 %v902, %v834
  %906 = vrot.lane.b32.xlu0 %v904, 64
  %v907 = vpop.permute.xlu0 %906
  %v909 = vadd.f32 %v899, %v907
  %910 = vset.pattern.permute.xlu0 3
  %911 = vperm.xlu0 %910, %v887
  %v912 = vpop.permute.xlu0 %911
  %v914 = vmul.f32 %v912, %v846
  %v915 = vadd.f32 %v909, %v914
  %v917 = vrot.slane %v538, 6
  %v919 = vmul.f32 %v808, %v917
  %921 = vrot.lane.b32.xlu0 %v915, 32
  %v922 = vpop.permute.xlu0 %921
  %v924 = vadd.f32 %v919, %v922
  %v925 = vtanh.pop %v924
  %927 = vrot.lane.b32.xlu0 %v925, 32
  %v928 = vpop.permute.xlu0 %927
  %v930 = vmul.f32 %v808, %v928
  %932 = vrot.lane.b32.xlu0 %v930, 64
  %v933 = vpop.permute.xlu0 %932
  %v936 = vrot.slane %v653, 6
  %937 = vrot.lane.b32.xlu0 %v936, 64
  %v938 = vpop.permute.xlu0 %937
  %v940 = vsel %vm549, %v933, %v938
  %v942 = vrot.slane %v940, 2
  %v943 = vsel %vm267, %v942, 0
  %945 = vmatprep.subr.mxu0 0.0
  %946 = vmatpush1.msra.mxu0 %v257
  %947 = vmatprep.subr.mxu0 0.0
  %948 = vmatpush1.msra.mxu0 %v258
  %949 = vmatprep.subr.mxu0 0.0
  %950 = vmatpush1.msra.mxu0 %v259
  %951 = vmatprep.subr.mxu0 0.0
  %952 = vmatpush1.msra.mxu0 %v260
  %953 = vmatprep.subr.mxu0 0.0
  %954 = vmatpush1.msra.mxu0 %v261
  %955 = vmatprep.subr.mxu0 0.0
  %956 = vmatpush1.msra.mxu0 %v262
  %957 = vmatprep.subr.mxu0 0.0
  %958 = vmatpush1.msra.mxu0 %v263
  %959 = vmatprep.subr.mxu0 0.0
  %960 = vmatpush1.msra.mxu0 %v264
  %961 = vmatprep.subr.mxu0 0.0
  %962 = vmatpush1.msra.mxu0 0.0
  %963 = vmatprep.subr.mxu0 0.0
  %964 = vmatpush1.msra.mxu0 0.0
  %965 = vmatprep.subr.mxu0 0.0
  %966 = vmatpush1.msra.mxu0 0.0
  %967 = vmatprep.subr.mxu0 0.0
  %968 = vmatpush1.msra.mxu0 0.0
  %969 = vmatprep.subr.mxu0 0.0
  %970 = vmatpush1.msra.mxu0 0.0
  %971 = vmatprep.subr.mxu0 0.0
  %972 = vmatpush1.msra.mxu0 0.0
  %973 = vmatprep.subr.mxu0 0.0
  %974 = vmatpush1.msra.mxu0 0.0
  %975 = vmatprep.subr.mxu0 0.0
  %976 = vmatpush1.msra.mxu0 0.0
  %977 = vmatprep.subr.mxu0 0.0
  %978 = vmatpush1.msra.mxu0 0.0
  %979 = vmatprep.subr.mxu0 0.0
  %980 = vmatpush1.msra.mxu0 0.0
  %981 = vmatprep.subr.mxu0 0.0
  %982 = vmatpush1.msra.mxu0 0.0
  %983 = vmatprep.subr.mxu0 0.0
  %984 = vmatpush1.msra.mxu0 0.0
  %985 = vmatprep.subr.mxu0 0.0
  %986 = vmatpush1.msra.mxu0 0.0
  %987 = vmatprep.subr.mxu0 0.0
  %988 = vmatpush1.msra.mxu0 0.0
  %989 = vmatprep.subr.mxu0 0.0
  %990 = vmatpush1.msra.mxu0 0.0
  %991 = vmatprep.subr.mxu0 0.0
  %992 = vmatpush1.msra.mxu0 0.0
  %993 = vmatprep.subr.mxu0 0.0
  %994 = vmatpush1.msra.mxu0 0.0
  %995 = vmatprep.subr.mxu0 0.0
  %996 = vmatpush1.msra.mxu0 0.0
  %997 = vmatprep.subr.mxu0 0.0
  %998 = vmatpush1.msra.mxu0 0.0
  %999 = vmatprep.subr.mxu0 0.0
  %1000 = vmatpush1.msra.mxu0 0.0
  %1001 = vmatprep.subr.mxu0 0.0
  %1002 = vmatpush1.msra.mxu0 0.0
  %1003 = vmatprep.subr.mxu0 0.0
  %1004 = vmatpush1.msra.mxu0 0.0
  %1005 = vmatprep.subr.mxu0 0.0
  %1006 = vmatpush1.msra.mxu0 0.0
  %1007 = vmatprep.subr.mxu0 0.0
  %1008 = vmatpush1.msra.mxu0 0.0
  %1009 = vmatprep.mubr.f32.mxu0 0.0
  %1010 = vmatmul.mubr.f32.gmra.mrb[0].mxu0 %v943
  %v1011 = vpop.f32.mrb[0].mxu0
  %v1012 = vadd.f32 %v555, %v1011
  %v1013 = vpop.f32.mrb[0].mxu0
  %1014 = vdwg.mxu0
  %v1015 = vxor.u32 %v1012, 2147483648
  %v1016 = vmul.f32 %v1015, 1.442695
  %v1017 = vpow.pop %v1016
  %v1018 = vadd.f32 %v1017, 1.0
  %v1019 = vrcp.pop %v1018
  %v1020 = vmul.f32 1.0, %v1019
  %v1021 = vtanh.pop %v1012
  %v1022 = vmul.f32 %v1020, %v647
  %1024 = vrot.lane.b32.xlu0 %v1021, 64
  %v1025 = vpop.permute.xlu0 %1024
  %v1027 = vmul.f32 %v1020, %v1025
  %1029 = vrot.lane.b32.xlu0 %v1027, 32
  %v1030 = vpop.permute.xlu0 %1029
  %v1032 = vadd.f32 %v1022, %v1030
  %v1033 = vtanh.pop %v1032
  %1035 = vrot.lane.b32.xlu0 %v1033, 64
  %v1036 = vpop.permute.xlu0 %1035
  %v1038 = vmul.f32 %v1020, %v1036
  %v1039 = vsel %vm549, %v933, %v924
  %v1041 = vrot.slane %v1039, 2
  %v1042 = vsel %vm267, %v1041, 0
  %1044 = vmatprep.subr.mxu0 %v234
  %1045 = vmatpush1.msra.mxu0 %v233
  %1046 = vmatprep.subr.mxu0 %v237
  %1047 = vmatpush1.msra.mxu0 %v236
  %1048 = vmatprep.subr.mxu0 %v240
  %1049 = vmatpush1.msra.mxu0 %v239
  %1050 = vmatprep.subr.mxu0 %v243
  %1051 = vmatpush1.msra.mxu0 %v242
  %1052 = vmatprep.subr.mxu0 %v246
  %1053 = vmatpush1.msra.mxu0 %v245
  %1054 = vmatprep.subr.mxu0 %v249
  %1055 = vmatpush1.msra.mxu0 %v248
  %1056 = vmatprep.subr.mxu0 %v252
  %1057 = vmatpush1.msra.mxu0 %v251
  %1058 = vmatprep.subr.mxu0 %v255
  %1059 = vmatpush1.msra.mxu0 %v254
  %1060 = vmatprep.subr.mxu0 0.0
  %1061 = vmatpush1.msra.mxu0 0.0
  %1062 = vmatprep.subr.mxu0 0.0
  %1063 = vmatpush1.msra.mxu0 0.0
  %1064 = vmatprep.subr.mxu0 0.0
  %1065 = vmatpush1.msra.mxu0 0.0
  %1066 = vmatprep.subr.mxu0 0.0
  %1067 = vmatpush1.msra.mxu0 0.0
  %1068 = vmatprep.subr.mxu0 0.0
  %1069 = vmatpush1.msra.mxu0 0.0
  %1070 = vmatprep.subr.mxu0 0.0
  %1071 = vmatpush1.msra.mxu0 0.0
  %1072 = vmatprep.subr.mxu0 0.0
  %1073 = vmatpush1.msra.mxu0 0.0
  %1074 = vmatprep.subr.mxu0 0.0
  %1075 = vmatpush1.msra.mxu0 0.0
  %1076 = vmatprep.subr.mxu0 0.0
  %1077 = vmatpush1.msra.mxu0 0.0
  %1078 = vmatprep.subr.mxu0 0.0
  %1079 = vmatpush1.msra.mxu0 0.0
  %1080 = vmatprep.subr.mxu0 0.0
  %1081 = vmatpush1.msra.mxu0 0.0
  %1082 = vmatprep.subr.mxu0 0.0
  %1083 = vmatpush1.msra.mxu0 0.0
  %1084 = vmatprep.subr.mxu0 0.0
  %1085 = vmatpush1.msra.mxu0 0.0
  %1086 = vmatprep.subr.mxu0 0.0
  %1087 = vmatpush1.msra.mxu0 0.0
  %1088 = vmatprep.subr.mxu0 0.0
  %1089 = vmatpush1.msra.mxu0 0.0
  %1090 = vmatprep.subr.mxu0 0.0
  %1091 = vmatpush1.msra.mxu0 0.0
  %1092 = vmatprep.subr.mxu0 0.0
  %1093 = vmatpush1.msra.mxu0 0.0
  %1094 = vmatprep.subr.mxu0 0.0
  %1095 = vmatpush1.msra.mxu0 0.0
  %1096 = vmatprep.subr.mxu0 0.0
  %1097 = vmatpush1.msra.mxu0 0.0
  %1098 = vmatprep.subr.mxu0 0.0
  %1099 = vmatpush1.msra.mxu0 0.0
  %1100 = vmatprep.subr.mxu0 0.0
  %1101 = vmatpush1.msra.mxu0 0.0
  %1102 = vmatprep.subr.mxu0 0.0
  %1103 = vmatpush1.msra.mxu0 0.0
  %1104 = vmatprep.subr.mxu0 0.0
  %1105 = vmatpush1.msra.mxu0 0.0
  %1106 = vmatprep.subr.mxu0 0.0
  %1107 = vmatpush1.msra.mxu0 0.0
  %1108 = vmatprep.mubr.f32.mxu0 0.0
  %1109 = vmatmul.mubr.f32.gmra.mrb[0].mxu0 %v1042
  %v1110 = vpop.f32.mrb[0].mxu0
  %v1111 = vadd.f32 0.0, %v1110
  %v1112 = vpop.f32.mrb[0].mxu0
  %v1113 = vadd.f32 0.0, %v1112
  %1114 = vdwg.mxu0
  %1115 = vmatprep.subr.mxu0 0.0
  %1116 = vmatpush1.msra.mxu0 %v235
  %1117 = vmatprep.subr.mxu0 0.0
  %1118 = vmatpush1.msra.mxu0 %v238
  %1119 = vmatprep.subr.mxu0 0.0
  %1120 = vmatpush1.msra.mxu0 %v241
  %1121 = vmatprep.subr.mxu0 0.0
  %1122 = vmatpush1.msra.mxu0 %v244
  %1123 = vmatprep.subr.mxu0 0.0
  %1124 = vmatpush1.msra.mxu0 %v247
  %1125 = vmatprep.subr.mxu0 0.0
  %1126 = vmatpush1.msra.mxu0 %v250
  %1127 = vmatprep.subr.mxu0 0.0
  %1128 = vmatpush1.msra.mxu0 %v253
  %1129 = vmatprep.subr.mxu0 0.0
  %1130 = vmatpush1.msra.mxu0 %v256
  %1131 = vmatprep.subr.mxu0 0.0
  %1132 = vmatpush1.msra.mxu0 0.0
  %1133 = vmatprep.subr.mxu0 0.0
  %1134 = vmatpush1.msra.mxu0 0.0
  %1135 = vmatprep.subr.mxu0 0.0
  %1136 = vmatpush1.msra.mxu0 0.0
  %1137 = vmatprep.subr.mxu0 0.0
  %1138 = vmatpush1.msra.mxu0 0.0
  %1139 = vmatprep.subr.mxu0 0.0
  %1140 = vmatpush1.msra.mxu0 0.0
  %1141 = vmatprep.subr.mxu0 0.0
  %1142 = vmatpush1.msra.mxu0 0.0
  %1143 = vmatprep.subr.mxu0 0.0
  %1144 = vmatpush1.msra.mxu0 0.0
  %1145 = vmatprep.subr.mxu0 0.0
  %1146 = vmatpush1.msra.mxu0 0.0
  %1147 = vmatprep.subr.mxu0 0.0
  %1148 = vmatpush1.msra.mxu0 0.0
  %1149 = vmatprep.subr.mxu0 0.0
  %1150 = vmatpush1.msra.mxu0 0.0
  %1151 = vmatprep.subr.mxu0 0.0
  %1152 = vmatpush1.msra.mxu0 0.0
  %1153 = vmatprep.subr.mxu0 0.0
  %1154 = vmatpush1.msra.mxu0 0.0
  %1155 = vmatprep.subr.mxu0 0.0
  %1156 = vmatpush1.msra.mxu0 0.0
  %1157 = vmatprep.subr.mxu0 0.0
  %1158 = vmatpush1.msra.mxu0 0.0
  %1159 = vmatprep.subr.mxu0 0.0
  %1160 = vmatpush1.msra.mxu0 0.0
  %1161 = vmatprep.subr.mxu0 0.0
  %1162 = vmatpush1.msra.mxu0 0.0
  %1163 = vmatprep.subr.mxu0 0.0
  %1164 = vmatpush1.msra.mxu0 0.0
  %1165 = vmatprep.subr.mxu0 0.0
  %1166 = vmatpush1.msra.mxu0 0.0
  %1167 = vmatprep.subr.mxu0 0.0
  %1168 = vmatpush1.msra.mxu0 0.0
  %1169 = vmatprep.subr.mxu0 0.0
  %1170 = vmatpush1.msra.mxu0 0.0
  %1171 = vmatprep.subr.mxu0 0.0
  %1172 = vmatpush1.msra.mxu0 0.0
  %1173 = vmatprep.subr.mxu0 0.0
  %1174 = vmatpush1.msra.mxu0 0.0
  %1175 = vmatprep.subr.mxu0 0.0
  %1176 = vmatpush1.msra.mxu0 0.0
  %1177 = vmatprep.subr.mxu0 0.0
  %1178 = vmatpush1.msra.mxu0 0.0
  %1179 = vmatprep.mubr.f32.mxu0 0.0
  %1180 = vmatmul.mubr.f32.gmra.mrb[0].mxu0 %v1042
  %v1181 = vpop.f32.mrb[0].mxu0
  %v1182 = vadd.f32 0.0, %v1181
  %v1183 = vpop.f32.mrb[0].mxu0
  %1184 = vdwg.mxu0
  %v1186 = vrot.slane %v1111, 4
  %v1188 = vadd.f32 %v148, %v1186
  %v1189 = vxor.u32 %v1188, 2147483648
  %v1190 = vmul.f32 %v1189, 1.442695
  %v1191 = vpow.pop %v1190
  %v1192 = vadd.f32 %v1191, 1.0
  %v1193 = vrcp.pop %v1192
  %v1194 = vmul.f32 1.0, %v1193
  %v1195 = vtanh.pop %v1188
  %v1198 = vrot.slane %v1113, 4
  %v1199 = vrot.slane %v1182, 4
  %v1202 = vadd.f32 %v150, %v1198
  %v1203 = vadd.f32 %v225, %v1199
  %1205 = vrot.lane.b32.xlu0 %v1195, 32
  %v1206 = vpop.permute.xlu0 %1205
  %v1208 = vmul.f32 %v1194, %v1206
  %v1209 = vxor.u32 %v1202, 2147483648
  %v1210 = vmul.f32 %v1209, 1.442695
  %v1211 = vpow.pop %v1210
  %v1212 = vadd.f32 %v1211, 1.0
  %v1213 = vrcp.pop %v1212
  %v1214 = vmul.f32 1.0, %v1213
  %v1215 = vtanh.pop %v1202
  %1217 = vrot.lane.b32.xlu0 %v1215, 96
  %v1218 = vpop.permute.xlu0 %1217
  %v1220 = vmul.f32 %v1214, %v1218
  %v1221 = vxor.u32 %v1203, 2147483648
  %v1222 = vmul.f32 %v1221, 1.442695
  %v1223 = vpow.pop %v1222
  %v1224 = vadd.f32 %v1223, 1.0
  %v1225 = vrcp.pop %v1224
  %v1226 = vmul.f32 1.0, %v1225
  %v1227 = vtanh.pop %v1203
  %1229 = vrot.lane.b32.xlu0 %v1227, 96
  %v1230 = vpop.permute.xlu0 %1229
  %v1232 = vmul.f32 %v1226, %v1230
  %1233 = vrot.lane.b32.xlu0 %v1199, 64
  %v1234 = vpop.permute.xlu0 %1233
  %v1236 = vmul.f32 %v1208, %v1234
  %vm1237 = vcmask 259076
  %v1238 = vsel %vm1237, %v1236, 0.0
  %1239 = vadd.xlane.f32.xlu0 %v1238
  %v1240 = vpop.xlane.xlu0 %1239
  %v1241 = vmul.f32 %v1220, %v1234
  %v1242 = vsel %vm1237, %v1241, 0.0
  %1243 = vadd.xlane.f32.xlu0 %v1242
  %v1244 = vpop.xlane.xlu0 %1243
  %v1245 = vmul.f32 %v1220, %v1199
  %1247 = vrot.lane.b32.xlu0 %v1245, 64
  %v1248 = vpop.permute.xlu0 %1247
  %v1250 = vsel %vm1237, %v1248, 0.0
  %1251 = vadd.xlane.f32.xlu0 %v1250
  %v1252 = vpop.xlane.xlu0 %1251
  %v1253 = vmul.f32 %v1232, %v1234
  %v1254 = vsel %vm1237, %v1253, 0.0
  %1255 = vadd.xlane.f32.xlu0 %v1254
  %v1256 = vpop.xlane.xlu0 %1255
  %v1257 = vsel %vm476, %v1240, %v1244
  %v1258 = vsel %vm478, %v1257, %v1252
  %v1259 = vsel %vm480, %v1258, %v1256
  %v1260 = vadd.f32 %v1259, %v489
  %v1261 = vtanh.pop %v1260
  %vm1262 = vcmask 29700
  %v1263 = vsel %vm1262, %v1261, -inf
  %1264 = vmax.xlane.f32.xlu0 %v1263
  %v1265 = vpop.xlane.xlu0 %1264
  %v1266 = vsub.f32 %v1261, %v1265
  %v1267 = vmul.f32 %v1266, 1.442695
  %v1268 = vpow.pop %v1267
  %v1269 = vsel %vm1262, %v1268, 0.0
  %1270 = vadd.xlane.f32.xlu0 %v1269
  %v1271 = vpop.xlane.xlu0 %1270
  %v1272 = vrcp.pop %v1271
  %v1273 = vmul.f32 %v1268, %v1272
  %1275 = vset.pattern.permute.xlu0 0
  %1276 = vperm.xlu0 %1275, %v1273
  %v1277 = vpop.permute.xlu0 %1276
  %v1279 = vmul.f32 %v1277, %v1208
  %1280 = vset.pattern.permute.xlu0 1
  %1281 = vperm.xlu0 %1280, %v1273
  %v1282 = vpop.permute.xlu0 %1281
  %v1284 = vmul.f32 %v1282, %v1220
  %v1285 = vadd.f32 %v1279, %v1284
  %1286 = vset.pattern.permute.xlu0 2
  %1287 = vperm.xlu0 %1286, %v1273
  %v1288 = vpop.permute.xlu0 %1287
  %v1290 = vmul.f32 %v1288, %v1220
  %1292 = vrot.lane.b32.xlu0 %v1290, 64
  %v1293 = vpop.permute.xlu0 %1292
  %v1295 = vadd.f32 %v1285, %v1293
  %1296 = vset.pattern.permute.xlu0 3
  %1297 = vperm.xlu0 %1296, %v1273
  %v1298 = vpop.permute.xlu0 %1297
  %v1300 = vmul.f32 %v1298, %v1232
  %v1301 = vadd.f32 %v1295, %v1300
  %v1303 = vrot.slane %v924, 6
  %v1305 = vmul.f32 %v1194, %v1303
  %1307 = vrot.lane.b32.xlu0 %v1301, 32
  %v1308 = vpop.permute.xlu0 %1307
  %v1310 = vadd.f32 %v1305, %v1308
  %v1311 = vtanh.pop %v1310
  %1313 = vrot.lane.b32.xlu0 %v1311, 32
  %v1314 = vpop.permute.xlu0 %1313
  %v1316 = vmul.f32 %v1194, %v1314
  %1318 = vrot.lane.b32.xlu0 %v1316, 64
  %v1319 = vpop.permute.xlu0 %1318
  %v1322 = vrot.slane %v1038, 4
  %1323 = vrot.lane.b32.xlu0 %v1322, 64
  %v1324 = vpop.permute.xlu0 %1323
  %v1326 = vsel %vm549, %v1319, %v1324
  %v1328 = vrot.slane %v1326, 4
  %v1329 = vsel %vm267, %v1328, 0
  %1331 = vmatprep.subr.mxu0 0.0
  %1332 = vmatpush1.msra.mxu0 %v257
  %1333 = vmatprep.subr.mxu0 0.0
  %1334 = vmatpush1.msra.mxu0 %v258
  %1335 = vmatprep.subr.mxu0 0.0
  %1336 = vmatpush1.msra.mxu0 %v259
  %1337 = vmatprep.subr.mxu0 0.0
  %1338 = vmatpush1.msra.mxu0 %v260
  %1339 = vmatprep.subr.mxu0 0.0
  %1340 = vmatpush1.msra.mxu0 %v261
  %1341 = vmatprep.subr.mxu0 0.0
  %1342 = vmatpush1.msra.mxu0 %v262
  %1343 = vmatprep.subr.mxu0 0.0
  %1344 = vmatpush1.msra.mxu0 %v263
  %1345 = vmatprep.subr.mxu0 0.0
  %1346 = vmatpush1.msra.mxu0 %v264
  %1347 = vmatprep.subr.mxu0 0.0
  %1348 = vmatpush1.msra.mxu0 0.0
  %1349 = vmatprep.subr.mxu0 0.0
  %1350 = vmatpush1.msra.mxu0 0.0
  %1351 = vmatprep.subr.mxu0 0.0
  %1352 = vmatpush1.msra.mxu0 0.0
  %1353 = vmatprep.subr.mxu0 0.0
  %1354 = vmatpush1.msra.mxu0 0.0
  %1355 = vmatprep.subr.mxu0 0.0
  %1356 = vmatpush1.msra.mxu0 0.0
  %1357 = vmatprep.subr.mxu0 0.0
  %1358 = vmatpush1.msra.mxu0 0.0
  %1359 = vmatprep.subr.mxu0 0.0
  %1360 = vmatpush1.msra.mxu0 0.0
  %1361 = vmatprep.subr.mxu0 0.0
  %1362 = vmatpush1.msra.mxu0 0.0
  %1363 = vmatprep.subr.mxu0 0.0
  %1364 = vmatpush1.msra.mxu0 0.0
  %1365 = vmatprep.subr.mxu0 0.0
  %1366 = vmatpush1.msra.mxu0 0.0
  %1367 = vmatprep.subr.mxu0 0.0
  %1368 = vmatpush1.msra.mxu0 0.0
  %1369 = vmatprep.subr.mxu0 0.0
  %1370 = vmatpush1.msra.mxu0 0.0
  %1371 = vmatprep.subr.mxu0 0.0
  %1372 = vmatpush1.msra.mxu0 0.0
  %1373 = vmatprep.subr.mxu0 0.0
  %1374 = vmatpush1.msra.mxu0 0.0
  %1375 = vmatprep.subr.mxu0 0.0
  %1376 = vmatpush1.msra.mxu0 0.0
  %1377 = vmatprep.subr.mxu0 0.0
  %1378 = vmatpush1.msra.mxu0 0.0
  %1379 = vmatprep.subr.mxu0 0.0
  %1380 = vmatpush1.msra.mxu0 0.0
  %1381 = vmatprep.subr.mxu0 0.0
  %1382 = vmatpush1.msra.mxu0 0.0
  %1383 = vmatprep.subr.mxu0 0.0
  %1384 = vmatpush1.msra.mxu0 0.0
  %1385 = vmatprep.subr.mxu0 0.0
  %1386 = vmatpush1.msra.mxu0 0.0
  %1387 = vmatprep.subr.mxu0 0.0
  %1388 = vmatpush1.msra.mxu0 0.0
  %1389 = vmatprep.subr.mxu0 0.0
  %1390 = vmatpush1.msra.mxu0 0.0
  %1391 = vmatprep.subr.mxu0 0.0
  %1392 = vmatpush1.msra.mxu0 0.0
  %1393 = vmatprep.subr.mxu0 0.0
  %1394 = vmatpush1.msra.mxu0 0.0
  %1395 = vmatprep.mubr.f32.mxu0 0.0
  %1396 = vmatmul.mubr.f32.gmra.mrb[0].mxu0 %v1329
  %v1397 = vpop.f32.mrb[0].mxu0
  %v1398 = vadd.f32 %v555, %v1397
  %v1399 = vpop.f32.mrb[0].mxu0
  %1400 = vdwg.mxu0
  %v1401 = vxor.u32 %v1398, 2147483648
  %v1402 = vmul.f32 %v1401, 1.442695
  %v1403 = vpow.pop %v1402
  %v1404 = vadd.f32 %v1403, 1.0
  %v1405 = vrcp.pop %v1404
  %v1406 = vmul.f32 1.0, %v1405
  %v1407 = vtanh.pop %v1398
  %v1408 = vmul.f32 %v1406, %v1032
  %1410 = vrot.lane.b32.xlu0 %v1407, 64
  %v1411 = vpop.permute.xlu0 %1410
  %v1413 = vmul.f32 %v1406, %v1411
  %1415 = vrot.lane.b32.xlu0 %v1413, 32
  %v1416 = vpop.permute.xlu0 %1415
  %v1418 = vadd.f32 %v1408, %v1416
  %v1419 = vtanh.pop %v1418
  %1421 = vrot.lane.b32.xlu0 %v1419, 64
  %v1422 = vpop.permute.xlu0 %1421
  %v1424 = vmul.f32 %v1406, %v1422
  %v1425 = vsel %vm549, %v1319, %v1310
  %v1427 = vrot.slane %v1425, 4
  %v1428 = vsel %vm267, %v1427, 0
  %1430 = vmatprep.subr.mxu0 %v234
  %1431 = vmatpush1.msra.mxu0 %v233
  %1432 = vmatprep.subr.mxu0 %v237
  %1433 = vmatpush1.msra.mxu0 %v236
  %1434 = vmatprep.subr.mxu0 %v240
  %1435 = vmatpush1.msra.mxu0 %v239
  %1436 = vmatprep.subr.mxu0 %v243
  %1437 = vmatpush1.msra.mxu0 %v242
  %1438 = vmatprep.subr.mxu0 %v246
  %1439 = vmatpush1.msra.mxu0 %v245
  %1440 = vmatprep.subr.mxu0 %v249
  %1441 = vmatpush1.msra.mxu0 %v248
  %1442 = vmatprep.subr.mxu0 %v252
  %1443 = vmatpush1.msra.mxu0 %v251
  %1444 = vmatprep.subr.mxu0 %v255
  %1445 = vmatpush1.msra.mxu0 %v254
  %1446 = vmatprep.subr.mxu0 0.0
  %1447 = vmatpush1.msra.mxu0 0.0
  %1448 = vmatprep.subr.mxu0 0.0
  %1449 = vmatpush1.msra.mxu0 0.0
  %1450 = vmatprep.subr.mxu0 0.0
  %1451 = vmatpush1.msra.mxu0 0.0
  %1452 = vmatprep.subr.mxu0 0.0
  %1453 = vmatpush1.msra.mxu0 0.0
  %1454 = vmatprep.subr.mxu0 0.0
  %1455 = vmatpush1.msra.mxu0 0.0
  %1456 = vmatprep.subr.mxu0 0.0
  %1457 = vmatpush1.msra.mxu0 0.0
  %1458 = vmatprep.subr.mxu0 0.0
  %1459 = vmatpush1.msra.mxu0 0.0
  %1460 = vmatprep.subr.mxu0 0.0
  %1461 = vmatpush1.msra.mxu0 0.0
  %1462 = vmatprep.subr.mxu0 0.0
  %1463 = vmatpush1.msra.mxu0 0.0
  %1464 = vmatprep.subr.mxu0 0.0
  %1465 = vmatpush1.msra.mxu0 0.0
  %1466 = vmatprep.subr.mxu0 0.0
  %1467 = vmatpush1.msra.mxu0 0.0
  %1468 = vmatprep.subr.mxu0 0.0
  %1469 = vmatpush1.msra.mxu0 0.0
  %1470 = vmatprep.subr.mxu0 0.0
  %1471 = vmatpush1.msra.mxu0 0.0
  %1472 = vmatprep.subr.mxu0 0.0
  %1473 = vmatpush1.msra.mxu0 0.0
  %1474 = vmatprep.subr.mxu0 0.0
  %1475 = vmatpush1.msra.mxu0 0.0
  %1476 = vmatprep.subr.mxu0 0.0
  %1477 = vmatpush1.msra.mxu0 0.0
  %1478 = vmatprep.subr.mxu0 0.0
  %1479 = vmatpush1.msra.mxu0 0.0
  %1480 = vmatprep.subr.mxu0 0.0
  %1481 = vmatpush1.msra.mxu0 0.0
  %1482 = vmatprep.subr.mxu0 0.0
  %1483 = vmatpush1.msra.mxu0 0.0
  %1484 = vmatprep.subr.mxu0 0.0
  %1485 = vmatpush1.msra.mxu0 0.0
  %1486 = vmatprep.subr.mxu0 0.0
  %1487 = vmatpush1.msra.mxu0 0.0
  %1488 = vmatprep.subr.mxu0 0.0
  %1489 = vmatpush1.msra.mxu0 0.0
  %1490 = vmatprep.subr.mxu0 0.0
  %1491 = vmatpush1.msra.mxu0 0.0
  %1492 = vmatprep.subr.mxu0 0.0
  %1493 = vmatpush1.msra.mxu0 0.0
  %1494 = vmatprep.mubr.f32.mxu0 0.0
  %1495 = vmatmul.mubr.f32.gmra.mrb[0].mxu0 %v1428
  %v1496 = vpop.f32.mrb[0].mxu0
  %v1497 = vadd.f32 0.0, %v1496
  %v1498 = vpop.f32.mrb[0].mxu0
  %v1499 = vadd.f32 0.0, %v1498
  %1500 = vdwg.mxu0
  %1501 = vmatprep.subr.mxu0 0.0
  %1502 = vmatpush1.msra.mxu0 %v235
  %1503 = vmatprep.subr.mxu0 0.0
  %1504 = vmatpush1.msra.mxu0 %v238
  %1505 = vmatprep.subr.mxu0 0.0
  %1506 = vmatpush1.msra.mxu0 %v241
  %1507 = vmatprep.subr.mxu0 0.0
  %1508 = vmatpush1.msra.mxu0 %v244
  %1509 = vmatprep.subr.mxu0 0.0
  %1510 = vmatpush1.msra.mxu0 %v247
  %1511 = vmatprep.subr.mxu0 0.0
  %1512 = vmatpush1.msra.mxu0 %v250
  %1513 = vmatprep.subr.mxu0 0.0
  %1514 = vmatpush1.msra.mxu0 %v253
  %1515 = vmatprep.subr.mxu0 0.0
  %1516 = vmatpush1.msra.mxu0 %v256
  %1517 = vmatprep.subr.mxu0 0.0
  %1518 = vmatpush1.msra.mxu0 0.0
  %1519 = vmatprep.subr.mxu0 0.0
  %1520 = vmatpush1.msra.mxu0 0.0
  %1521 = vmatprep.subr.mxu0 0.0
  %1522 = vmatpush1.msra.mxu0 0.0
  %1523 = vmatprep.subr.mxu0 0.0
  %1524 = vmatpush1.msra.mxu0 0.0
  %1525 = vmatprep.subr.mxu0 0.0
  %1526 = vmatpush1.msra.mxu0 0.0
  %1527 = vmatprep.subr.mxu0 0.0
  %1528 = vmatpush1.msra.mxu0 0.0
  %1529 = vmatprep.subr.mxu0 0.0
  %1530 = vmatpush1.msra.mxu0 0.0
  %1531 = vmatprep.subr.mxu0 0.0
  %1532 = vmatpush1.msra.mxu0 0.0
  %1533 = vmatprep.subr.mxu0 0.0
  %1534 = vmatpush1.msra.mxu0 0.0
  %1535 = vmatprep.subr.mxu0 0.0
  %1536 = vmatpush1.msra.mxu0 0.0
  %1537 = vmatprep.subr.mxu0 0.0
  %1538 = vmatpush1.msra.mxu0 0.0
  %1539 = vmatprep.subr.mxu0 0.0
  %1540 = vmatpush1.msra.mxu0 0.0
  %1541 = vmatprep.subr.mxu0 0.0
  %1542 = vmatpush1.msra.mxu0 0.0
  %1543 = vmatprep.subr.mxu0 0.0
  %1544 = vmatpush1.msra.mxu0 0.0
  %1545 = vmatprep.subr.mxu0 0.0
  %1546 = vmatpush1.msra.mxu0 0.0
  %1547 = vmatprep.subr.mxu0 0.0
  %1548 = vmatpush1.msra.mxu0 0.0
  %1549 = vmatprep.subr.mxu0 0.0
  %1550 = vmatpush1.msra.mxu0 0.0
  %1551 = vmatprep.subr.mxu0 0.0
  %1552 = vmatpush1.msra.mxu0 0.0
  %1553 = vmatprep.subr.mxu0 0.0
  %1554 = vmatpush1.msra.mxu0 0.0
  %1555 = vmatprep.subr.mxu0 0.0
  %1556 = vmatpush1.msra.mxu0 0.0
  %1557 = vmatprep.subr.mxu0 0.0
  %1558 = vmatpush1.msra.mxu0 0.0
  %1559 = vmatprep.subr.mxu0 0.0
  %1560 = vmatpush1.msra.mxu0 0.0
  %1561 = vmatprep.subr.mxu0 0.0
  %1562 = vmatpush1.msra.mxu0 0.0
  %1563 = vmatprep.subr.mxu0 0.0
  %1564 = vmatpush1.msra.mxu0 0.0
  %1565 = vmatprep.mubr.f32.mxu0 0.0
  %1566 = vmatmul.mubr.f32.gmra.mrb[0].mxu0 %v1428
  %v1567 = vpop.f32.mrb[0].mxu0
  %v1568 = vadd.f32 0.0, %v1567
  %v1569 = vpop.f32.mrb[0].mxu0
  %1570 = vdwg.mxu0
  %v1572 = vrot.slane %v1497, 2
  %v1574 = vadd.f32 %v148, %v1572
  %v1575 = vxor.u32 %v1574, 2147483648
  %v1576 = vmul.f32 %v1575, 1.442695
  %v1577 = vpow.pop %v1576
  %v1578 = vadd.f32 %v1577, 1.0
  %v1579 = vrcp.pop %v1578
  %v1580 = vmul.f32 1.0, %v1579
  %v1581 = vtanh.pop %v1574
  %v1584 = vrot.slane %v1499, 2
  %v1585 = vrot.slane %v1568, 2
  %v1588 = vadd.f32 %v150, %v1584
  %v1589 = vadd.f32 %v225, %v1585
  %1591 = vrot.lane.b32.xlu0 %v1581, 32
  %v1592 = vpop.permute.xlu0 %1591
  %v1594 = vmul.f32 %v1580, %v1592
  %v1595 = vxor.u32 %v1588, 2147483648
  %v1596 = vmul.f32 %v1595, 1.442695
  %v1597 = vpow.pop %v1596
  %v1598 = vadd.f32 %v1597, 1.0
  %v1599 = vrcp.pop %v1598
  %v1600 = vmul.f32 1.0, %v1599
  %v1601 = vtanh.pop %v1588
  %1603 = vrot.lane.b32.xlu0 %v1601, 96
  %v1604 = vpop.permute.xlu0 %1603
  %v1606 = vmul.f32 %v1600, %v1604
  %v1607 = vxor.u32 %v1589, 2147483648
  %v1608 = vmul.f32 %v1607, 1.442695
  %v1609 = vpow.pop %v1608
  %v1610 = vadd.f32 %v1609, 1.0
  %v1611 = vrcp.pop %v1610
  %v1612 = vmul.f32 1.0, %v1611
  %v1613 = vtanh.pop %v1589
  %1615 = vrot.lane.b32.xlu0 %v1613, 96
  %v1616 = vpop.permute.xlu0 %1615
  %v1618 = vmul.f32 %v1612, %v1616
  %1619 = vrot.lane.b32.xlu0 %v1585, 64
  %v1620 = vpop.permute.xlu0 %1619
  %v1622 = vmul.f32 %v1594, %v1620
  %vm1623 = vcmask 261126
  %v1624 = vsel %vm1623, %v1622, 0.0
  %1625 = vadd.xlane.f32.xlu0 %v1624
  %v1626 = vpop.xlane.xlu0 %1625
  %v1627 = vmul.f32 %v1606, %v1620
  %v1628 = vsel %vm1623, %v1627, 0.0
  %1629 = vadd.xlane.f32.xlu0 %v1628
  %v1630 = vpop.xlane.xlu0 %1629
  %v1631 = vmul.f32 %v1606, %v1585
  %1633 = vrot.lane.b32.xlu0 %v1631, 64
  %v1634 = vpop.permute.xlu0 %1633
  %v1636 = vsel %vm1623, %v1634, 0.0
  %1637 = vadd.xlane.f32.xlu0 %v1636
  %v1638 = vpop.xlane.xlu0 %1637
  %v1639 = vmul.f32 %v1618, %v1620
  %v1640 = vsel %vm1623, %v1639, 0.0
  %1641 = vadd.xlane.f32.xlu0 %v1640
  %v1642 = vpop.xlane.xlu0 %1641
  %v1643 = vsel %vm476, %v1626, %v1630
  %v1644 = vsel %vm478, %v1643, %v1638
  %v1645 = vsel %vm480, %v1644, %v1642
  %v1646 = vadd.f32 %v1645, %v489
  %v1647 = vtanh.pop %v1646
  %vm1648 = vcmask 31750
  %v1649 = vsel %vm1648, %v1647, -inf
  %1650 = vmax.xlane.f32.xlu0 %v1649
  %v1651 = vpop.xlane.xlu0 %1650
  %v1652 = vsub.f32 %v1647, %v1651
  %v1653 = vmul.f32 %v1652, 1.442695
  %v1654 = vpow.pop %v1653
  %v1655 = vsel %vm1648, %v1654, 0.0
  %1656 = vadd.xlane.f32.xlu0 %v1655
  %v1657 = vpop.xlane.xlu0 %1656
  %v1658 = vrcp.pop %v1657
  %v1659 = vmul.f32 %v1654, %v1658
  %1661 = vset.pattern.permute.xlu0 0
  %1662 = vperm.xlu0 %1661, %v1659
  %v1663 = vpop.permute.xlu0 %1662
  %v1665 = vmul.f32 %v1663, %v1594
  %1666 = vset.pattern.permute.xlu0 1
  %1667 = vperm.xlu0 %1666, %v1659
  %v1668 = vpop.permute.xlu0 %1667
  %v1670 = vmul.f32 %v1668, %v1606
  %v1671 = vadd.f32 %v1665, %v1670
  %1672 = vset.pattern.permute.xlu0 2
  %1673 = vperm.xlu0 %1672, %v1659
  %v1674 = vpop.permute.xlu0 %1673
  %v1676 = vmul.f32 %v1674, %v1606
  %1678 = vrot.lane.b32.xlu0 %v1676, 64
  %v1679 = vpop.permute.xlu0 %1678
  %v1681 = vadd.f32 %v1671, %v1679
  %1682 = vset.pattern.permute.xlu0 3
  %1683 = vperm.xlu0 %1682, %v1659
  %v1684 = vpop.permute.xlu0 %1683
  %v1686 = vmul.f32 %v1684, %v1618
  %v1687 = vadd.f32 %v1681, %v1686
  %v1689 = vrot.slane %v1310, 6
  %v1691 = vmul.f32 %v1580, %v1689
  %1693 = vrot.lane.b32.xlu0 %v1687, 32
  %v1694 = vpop.permute.xlu0 %1693
  %v1696 = vadd.f32 %v1691, %v1694
  %v1697 = vtanh.pop %v1696
  %1699 = vrot.lane.b32.xlu0 %v1697, 32
  %v1700 = vpop.permute.xlu0 %1699
  %v1702 = vmul.f32 %v1580, %v1700
  %1704 = vrot.lane.b32.xlu0 %v1702, 64
  %v1705 = vpop.permute.xlu0 %1704
  %v1708 = vrot.slane %v1424, 2
  %1709 = vrot.lane.b32.xlu0 %v1708, 64
  %v1710 = vpop.permute.xlu0 %1709
  %v1712 = vsel %vm549, %v1705, %v1710
  %v1714 = vrot.slane %v1712, 6
  %v1715 = vsel %vm267, %v1714, 0
  %1717 = vmatprep.subr.mxu0 0.0
  %1718 = vmatpush1.msra.mxu0 %v257
  %1719 = vmatprep.subr.mxu0 0.0
  %1720 = vmatpush1.msra.mxu0 %v258
  %1721 = vmatprep.subr.mxu0 0.0
  %1722 = vmatpush1.msra.mxu0 %v259
  %1723 = vmatprep.subr.mxu0 0.0
  %1724 = vmatpush1.msra.mxu0 %v260
  %1725 = vmatprep.subr.mxu0 0.0
  %1726 = vmatpush1.msra.mxu0 %v261
  %1727 = vmatprep.subr.mxu0 0.0
  %1728 = vmatpush1.msra.mxu0 %v262
  %1729 = vmatprep.subr.mxu0 0.0
  %1730 = vmatpush1.msra.mxu0 %v263
  %1731 = vmatprep.subr.mxu0 0.0
  %1732 = vmatpush1.msra.mxu0 %v264
  %1733 = vmatprep.subr.mxu0 0.0
  %1734 = vmatpush1.msra.mxu0 0.0
  %1735 = vmatprep.subr.mxu0 0.0
  %1736 = vmatpush1.msra.mxu0 0.0
  %1737 = vmatprep.subr.mxu0 0.0
  %1738 = vmatpush1.msra.mxu0 0.0
  %1739 = vmatprep.subr.mxu0 0.0
  %1740 = vmatpush1.msra.mxu0 0.0
  %1741 = vmatprep.subr.mxu0 0.0
  %1742 = vmatpush1.msra.mxu0 0.0
  %1743 = vmatprep.subr.mxu0 0.0
  %1744 = vmatpush1.msra.mxu0 0.0
  %1745 = vmatprep.subr.mxu0 0.0
  %1746 = vmatpush1.msra.mxu0 0.0
  %1747 = vmatprep.subr.mxu0 0.0
  %1748 = vmatpush1.msra.mxu0 0.0
  %1749 = vmatprep.subr.mxu0 0.0
  %1750 = vmatpush1.msra.mxu0 0.0
  %1751 = vmatprep.subr.mxu0 0.0
  %1752 = vmatpush1.msra.mxu0 0.0
  %1753 = vmatprep.subr.mxu0 0.0
  %1754 = vmatpush1.msra.mxu0 0.0
  %1755 = vmatprep.subr.mxu0 0.0
  %1756 = vmatpush1.msra.mxu0 0.0
  %1757 = vmatprep.subr.mxu0 0.0
  %1758 = vmatpush1.msra.mxu0 0.0
  %1759 = vmatprep.subr.mxu0 0.0
  %1760 = vmatpush1.msra.mxu0 0.0
  %1761 = vmatprep.subr.mxu0 0.0
  %1762 = vmatpush1.msra.mxu0 0.0
  %1763 = vmatprep.subr.mxu0 0.0
  %1764 = vmatpush1.msra.mxu0 0.0
  %1765 = vmatprep.subr.mxu0 0.0
  %1766 = vmatpush1.msra.mxu0 0.0
  %1767 = vmatprep.subr.mxu0 0.0
  %1768 = vmatpush1.msra.mxu0 0.0
  %1769 = vmatprep.subr.mxu0 0.0
  %1770 = vmatpush1.msra.mxu0 0.0
  %1771 = vmatprep.subr.mxu0 0.0
  %1772 = vmatpush1.msra.mxu0 0.0
  %1773 = vmatprep.subr.mxu0 0.0
  %1774 = vmatpush1.msra.mxu0 0.0
  %1775 = vmatprep.subr.mxu0 0.0
  %1776 = vmatpush1.msra.mxu0 0.0
  %1777 = vmatprep.subr.mxu0 0.0
  %1778 = vmatpush1.msra.mxu0 0.0
  %1779 = vmatprep.subr.mxu0 0.0
  %1780 = vmatpush1.msra.mxu0 0.0
  %1781 = vmatprep.mubr.f32.mxu0 0.0
  %1782 = vmatmul.mubr.f32.gmra.mrb[0].mxu0 %v1715
  %v1783 = vpop.f32.mrb[0].mxu0
  %v1784 = vadd.f32 %v555, %v1783
  %v1785 = vpop.f32.mrb[0].mxu0
  %1786 = vdwg.mxu0
  %v1787 = vxor.u32 %v1784, 2147483648
  %v1788 = vmul.f32 %v1787, 1.442695
  %v1789 = vpow.pop %v1788
  %v1790 = vadd.f32 %v1789, 1.0
  %v1791 = vrcp.pop %v1790
  %v1792 = vmul.f32 1.0, %v1791
  %v1793 = vtanh.pop %v1784
  %v1794 = vmul.f32 %v1792, %v1418
  %1796 = vrot.lane.b32.xlu0 %v1793, 64
  %v1797 = vpop.permute.xlu0 %1796
  %v1799 = vmul.f32 %v1792, %v1797
  %1801 = vrot.lane.b32.xlu0 %v1799, 32
  %v1802 = vpop.permute.xlu0 %1801
  %v1804 = vadd.f32 %v1794, %v1802
  %v1805 = vtanh.pop %v1804
  %1807 = vrot.lane.b32.xlu0 %v1805, 64
  %v1808 = vpop.permute.xlu0 %1807
  %v1810 = vmul.f32 %v1792, %v1808
  %v1811 = vsel %vm549, %v1705, %v1696
  %v1813 = vrot.slane %v1811, 6
  %v1814 = vsel %vm267, %v1813, 0
  %1816 = vmatprep.subr.mxu0 %v234
  %1817 = vmatpush1.msra.mxu0 %v233
  %1818 = vmatprep.subr.mxu0 %v237
  %1819 = vmatpush1.msra.mxu0 %v236
  %1820 = vmatprep.subr.mxu0 %v240
  %1821 = vmatpush1.msra.mxu0 %v239
  %1822 = vmatprep.subr.mxu0 %v243
  %1823 = vmatpush1.msra.mxu0 %v242
  %1824 = vmatprep.subr.mxu0 %v246
  %1825 = vmatpush1.msra.mxu0 %v245
  %1826 = vmatprep.subr.mxu0 %v249
  %1827 = vmatpush1.msra.mxu0 %v248
  %1828 = vmatprep.subr.mxu0 %v252
  %1829 = vmatpush1.msra.mxu0 %v251
  %1830 = vmatprep.subr.mxu0 %v255
  %1831 = vmatpush1.msra.mxu0 %v254
  %1832 = vmatprep.subr.mxu0 0.0
  %1833 = vmatpush1.msra.mxu0 0.0
  %1834 = vmatprep.subr.mxu0 0.0
  %1835 = vmatpush1.msra.mxu0 0.0
  %1836 = vmatprep.subr.mxu0 0.0
  %1837 = vmatpush1.msra.mxu0 0.0
  %1838 = vmatprep.subr.mxu0 0.0
  %1839 = vmatpush1.msra.mxu0 0.0
  %1840 = vmatprep.subr.mxu0 0.0
  %1841 = vmatpush1.msra.mxu0 0.0
  %1842 = vmatprep.subr.mxu0 0.0
  %1843 = vmatpush1.msra.mxu0 0.0
  %1844 = vmatprep.subr.mxu0 0.0
  %1845 = vmatpush1.msra.mxu0 0.0
  %1846 = vmatprep.subr.mxu0 0.0
  %1847 = vmatpush1.msra.mxu0 0.0
  %1848 = vmatprep.subr.mxu0 0.0
  %1849 = vmatpush1.msra.mxu0 0.0
  %1850 = vmatprep.subr.mxu0 0.0
  %1851 = vmatpush1.msra.mxu0 0.0
  %1852 = vmatprep.subr.mxu0 0.0
  %1853 = vmatpush1.msra.mxu0 0.0
  %1854 = vmatprep.subr.mxu0 0.0
  %1855 = vmatpush1.msra.mxu0 0.0
  %1856 = vmatprep.subr.mxu0 0.0
  %1857 = vmatpush1.msra.mxu0 0.0
  %1858 = vmatprep.subr.mxu0 0.0
  %1859 = vmatpush1.msra.mxu0 0.0
  %1860 = vmatprep.subr.mxu0 0.0
  %1861 = vmatpush1.msra.mxu0 0.0
  %1862 = vmatprep.subr.mxu0 0.0
  %1863 = vmatpush1.msra.mxu0 0.0
  %1864 = vmatprep.subr.mxu0 0.0
  %1865 = vmatpush1.msra.mxu0 0.0
  %1866 = vmatprep.subr.mxu0 0.0
  %1867 = vmatpush1.msra.mxu0 0.0
  %1868 = vmatprep.subr.mxu0 0.0
  %1869 = vmatpush1.msra.mxu0 0.0
  %1870 = vmatprep.subr.mxu0 0.0
  %1871 = vmatpush1.msra.mxu0 0.0
  %1872 = vmatprep.subr.mxu0 0.0
  %1873 = vmatpush1.msra.mxu0 0.0
  %1874 = vmatprep.subr.mxu0 0.0
  %1875 = vmatpush1.msra.mxu0 0.0
  %1876 = vmatprep.subr.mxu0 0.0
  %1877 = vmatpush1.msra.mxu0 0.0
  %1878 = vmatprep.subr.mxu0 0.0
  %1879 = vmatpush1.msra.mxu0 0.0
  %1880 = vmatprep.mubr.f32.mxu0 0.0
  %1881 = vmatmul.mubr.f32.gmra.mrb[0].mxu0 %v1814
  %v1882 = vpop.f32.mrb[0].mxu0
  %v1883 = vadd.f32 0.0, %v1882
  %v1884 = vpop.f32.mrb[0].mxu0
  %v1885 = vadd.f32 0.0, %v1884
  %1886 = vdwg.mxu0
  %1887 = vmatprep.subr.mxu0 0.0
  %1888 = vmatpush1.msra.mxu0 %v235
  %1889 = vmatprep.subr.mxu0 0.0
  %1890 = vmatpush1.msra.mxu0 %v238
  %1891 = vmatprep.subr.mxu0 0.0
  %1892 = vmatpush1.msra.mxu0 %v241
  %1893 = vmatprep.subr.mxu0 0.0
  %1894 = vmatpush1.msra.mxu0 %v244
  %1895 = vmatprep.subr.mxu0 0.0
  %1896 = vmatpush1.msra.mxu0 %v247
  %1897 = vmatprep.subr.mxu0 0.0
  %1898 = vmatpush1.msra.mxu0 %v250
  %1899 = vmatprep.subr.mxu0 0.0
  %1900 = vmatpush1.msra.mxu0 %v253
  %1901 = vmatprep.subr.mxu0 0.0
  %1902 = vmatpush1.msra.mxu0 %v256
  %1903 = vmatprep.subr.mxu0 0.0
  %1904 = vmatpush1.msra.mxu0 0.0
  %1905 = vmatprep.subr.mxu0 0.0
  %1906 = vmatpush1.msra.mxu0 0.0
  %1907 = vmatprep.subr.mxu0 0.0
  %1908 = vmatpush1.msra.mxu0 0.0
  %1909 = vmatprep.subr.mxu0 0.0
  %1910 = vmatpush1.msra.mxu0 0.0
  %1911 = vmatprep.subr.mxu0 0.0
  %1912 = vmatpush1.msra.mxu0 0.0
  %1913 = vmatprep.subr.mxu0 0.0
  %1914 = vmatpush1.msra.mxu0 0.0
  %1915 = vmatprep.subr.mxu0 0.0
  %1916 = vmatpush1.msra.mxu0 0.0
  %1917 = vmatprep.subr.mxu0 0.0
  %1918 = vmatpush1.msra.mxu0 0.0
  %1919 = vmatprep.subr.mxu0 0.0
  %1920 = vmatpush1.msra.mxu0 0.0
  %1921 = vmatprep.subr.mxu0 0.0
  %1922 = vmatpush1.msra.mxu0 0.0
  %1923 = vmatprep.subr.mxu0 0.0
  %1924 = vmatpush1.msra.mxu0 0.0
  %1925 = vmatprep.subr.mxu0 0.0
  %1926 = vmatpush1.msra.mxu0 0.0
  %1927 = vmatprep.subr.mxu0 0.0
  %1928 = vmatpush1.msra.mxu0 0.0
  %1929 = vmatprep.subr.mxu0 0.0
  %1930 = vmatpush1.msra.mxu0 0.0
  %1931 = vmatprep.subr.mxu0 0.0
  %1932 = vmatpush1.msra.mxu0 0.0
  %1933 = vmatprep.subr.mxu0 0.0
  %1934 = vmatpush1.msra.mxu0 0.0
  %1935 = vmatprep.subr.mxu0 0.0
  %1936 = vmatpush1.msra.mxu0 0.0
  %1937 = vmatprep.subr.mxu0 0.0
  %1938 = vmatpush1.msra.mxu0 0.0
  %1939 = vmatprep.subr.mxu0 0.0
  %1940 = vmatpush1.msra.mxu0 0.0
  %1941 = vmatprep.subr.mxu0 0.0
  %1942 = vmatpush1.msra.mxu0 0.0
  %1943 = vmatprep.subr.mxu0 0.0
  %1944 = vmatpush1.msra.mxu0 0.0
  %1945 = vmatprep.subr.mxu0 0.0
  %1946 = vmatpush1.msra.mxu0 0.0
  %1947 = vmatprep.subr.mxu0 0.0
  %1948 = vmatpush1.msra.mxu0 0.0
  %1949 = vmatprep.subr.mxu0 0.0
  %1950 = vmatpush1.msra.mxu0 0.0
  %1951 = vmatprep.mubr.f32.mxu0 0.0
  %1952 = vmatmul.mubr.f32.gmra.mrb[0].mxu0 %v1814
  %v1953 = vpop.f32.mrb[0].mxu0
  %v1954 = vadd.f32 0.0, %v1953
  %v1955 = vpop.f32.mrb[0].mxu0
  %1956 = vdwg.mxu0
  %v1957 = vadd.f32 %v154, %v1883
  %v1958 = vxor.u32 %v1957, 2147483648
  %v1959 = vmul.f32 %v1958, 1.442695
  %v1960 = vpow.pop %v1959
  %v1961 = vadd.f32 %v1960, 1.0
  %v1962 = vrcp.pop %v1961
  %v1963 = vmul.f32 1.0, %v1962
  %v1964 = vtanh.pop %v1957
  %v1965 = vadd.f32 %v156, %v1885
  %v1966 = vadd.f32 %v230, %v1954
  %1968 = vrot.lane.b32.xlu0 %v1964, 32
  %v1969 = vpop.permute.xlu0 %1968
  %v1971 = vmul.f32 %v1963, %v1969
  %v1972 = vxor.u32 %v1965, 2147483648
  %v1973 = vmul.f32 %v1972, 1.442695
  %v1974 = vpow.pop %v1973
  %v1975 = vadd.f32 %v1974, 1.0
  %v1976 = vrcp.pop %v1975
  %v1977 = vmul.f32 1.0, %v1976
  %v1978 = vtanh.pop %v1965
  %1980 = vrot.lane.b32.xlu0 %v1978, 96
  %v1981 = vpop.permute.xlu0 %1980
  %v1983 = vmul.f32 %v1977, %v1981
  %v1984 = vxor.u32 %v1966, 2147483648
  %v1985 = vmul.f32 %v1984, 1.442695
  %v1986 = vpow.pop %v1985
  %v1987 = vadd.f32 %v1986, 1.0
  %v1988 = vrcp.pop %v1987
  %v1989 = vmul.f32 1.0, %v1988
  %v1990 = vtanh.pop %v1966
  %1992 = vrot.lane.b32.xlu0 %v1990, 96
  %v1993 = vpop.permute.xlu0 %1992
  %v1995 = vmul.f32 %v1989, %v1993
  %1997 = vrot.lane.b32.xlu0 %v1954, 64
  %v1998 = vpop.permute.xlu0 %1997
  %v2000 = vmul.f32 %v1971, %v1998
  %v2001 = vsel %vm456, %v2000, 0.0
  %2002 = vadd.xlane.f32.xlu0 %v2001
  %v2003 = vpop.xlane.xlu0 %2002
  %v2004 = vmul.f32 %v1983, %v1998
  %v2005 = vsel %vm456, %v2004, 0.0
  %2006 = vadd.xlane.f32.xlu0 %v2005
  %v2007 = vpop.xlane.xlu0 %2006
  %v2008 = vmul.f32 %v1983, %v1954
  %2010 = vrot.lane.b32.xlu0 %v2008, 64
  %v2011 = vpop.permute.xlu0 %2010
  %v2013 = vsel %vm456, %v2011, 0.0
  %2014 = vadd.xlane.f32.xlu0 %v2013
  %v2015 = vpop.xlane.xlu0 %2014
  %v2016 = vmul.f32 %v1995, %v1998
  %v2017 = vsel %vm456, %v2016, 0.0
  %2018 = vadd.xlane.f32.xlu0 %v2017
  %v2019 = vpop.xlane.xlu0 %2018
  %v2020 = vsel %vm476, %v2003, %v2007
  %v2021 = vsel %vm478, %v2020, %v2015
  %v2022 = vsel %vm480, %v2021, %v2019
  %v2023 = vadd.f32 %v2022, %v489
  %v2024 = vtanh.pop %v2023
  %v2025 = vsel %vm493, %v2024, -inf
  %2026 = vmax.xlane.f32.xlu0 %v2025
  %v2027 = vpop.xlane.xlu0 %2026
  %v2028 = vsub.f32 %v2024, %v2027
  %v2029 = vmul.f32 %v2028, 1.442695
  %v2030 = vpow.pop %v2029
  %v2031 = vsel %vm493, %v2030, 0.0
  %2032 = vadd.xlane.f32.xlu0 %v2031
  %v2033 = vpop.xlane.xlu0 %2032
  %v2034 = vrcp.pop %v2033
  %v2035 = vmul.f32 %v2030, %v2034
  %2037 = vset.pattern.permute.xlu0 0
  %2038 = vperm.xlu0 %2037, %v2035
  %v2039 = vpop.permute.xlu0 %2038
  %v2041 = vmul.f32 %v2039, %v1971
  %2042 = vset.pattern.permute.xlu0 1
  %2043 = vperm.xlu0 %2042, %v2035
  %v2044 = vpop.permute.xlu0 %2043
  %v2046 = vmul.f32 %v2044, %v1983
  %v2047 = vadd.f32 %v2041, %v2046
  %2048 = vset.pattern.permute.xlu0 2
  %2049 = vperm.xlu0 %2048, %v2035
  %v2050 = vpop.permute.xlu0 %2049
  %v2052 = vmul.f32 %v2050, %v1983
  %2054 = vrot.lane.b32.xlu0 %v2052, 64
  %v2055 = vpop.permute.xlu0 %2054
  %v2057 = vadd.f32 %v2047, %v2055
  %2058 = vset.pattern.permute.xlu0 3
  %2059 = vperm.xlu0 %2058, %v2035
  %v2060 = vpop.permute.xlu0 %2059
  %v2062 = vmul.f32 %v2060, %v1995
  %v2063 = vadd.f32 %v2057, %v2062
  %v2065 = vrot.slane %v1696, 6
  %v2067 = vmul.f32 %v1963, %v2065
  %2069 = vrot.lane.b32.xlu0 %v2063, 32
  %v2070 = vpop.permute.xlu0 %2069
  %v2072 = vadd.f32 %v2067, %v2070
  %v2073 = vtanh.pop %v2072
  %2075 = vrot.lane.b32.xlu0 %v2073, 32
  %v2076 = vpop.permute.xlu0 %2075
  %v2078 = vmul.f32 %v1963, %v2076
  %2080 = vrot.lane.b32.xlu0 %v2078, 64
  %v2081 = vpop.permute.xlu0 %2080
  %2084 = vrot.lane.b32.xlu0 %v1810, 64
  %v2085 = vpop.permute.xlu0 %2084
  %v2087 = vsel %vm549, %v2081, %v2085
  %v2089 = vsel %vm267, %v2087, 0
  %2091 = vmatprep.subr.mxu0 0.0
  %2092 = vmatpush1.msra.mxu0 %v257
  %2093 = vmatprep.subr.mxu0 0.0
  %2094 = vmatpush1.msra.mxu0 %v258
  %2095 = vmatprep.subr.mxu0 0.0
  %2096 = vmatpush1.msra.mxu0 %v259
  %2097 = vmatprep.subr.mxu0 0.0
  %2098 = vmatpush1.msra.mxu0 %v260
  %2099 = vmatprep.subr.mxu0 0.0
  %2100 = vmatpush1.msra.mxu0 %v261
  %2101 = vmatprep.subr.mxu0 0.0
  %2102 = vmatpush1.msra.mxu0 %v262
  %2103 = vmatprep.subr.mxu0 0.0
  %2104 = vmatpush1.msra.mxu0 %v263
  %2105 = vmatprep.subr.mxu0 0.0
  %2106 = vmatpush1.msra.mxu0 %v264
  %2107 = vmatprep.subr.mxu0 0.0
  %2108 = vmatpush1.msra.mxu0 0.0
  %2109 = vmatprep.subr.mxu0 0.0
  %2110 = vmatpush1.msra.mxu0 0.0
  %2111 = vmatprep.subr.mxu0 0.0
  %2112 = vmatpush1.msra.mxu0 0.0
  %2113 = vmatprep.subr.mxu0 0.0
  %2114 = vmatpush1.msra.mxu0 0.0
  %2115 = vmatprep.subr.mxu0 0.0
  %2116 = vmatpush1.msra.mxu0 0.0
  %2117 = vmatprep.subr.mxu0 0.0
  %2118 = vmatpush1.msra.mxu0 0.0
  %2119 = vmatprep.subr.mxu0 0.0
  %2120 = vmatpush1.msra.mxu0 0.0
  %2121 = vmatprep.subr.mxu0 0.0
  %2122 = vmatpush1.msra.mxu0 0.0
  %2123 = vmatprep.subr.mxu0 0.0
  %2124 = vmatpush1.msra.mxu0 0.0
  %2125 = vmatprep.subr.mxu0 0.0
  %2126 = vmatpush1.msra.mxu0 0.0
  %2127 = vmatprep.subr.mxu0 0.0
  %2128 = vmatpush1.msra.mxu0 0.0
  %2129 = vmatprep.subr.mxu0 0.0
  %2130 = vmatpush1.msra.mxu0 0.0
  %2131 = vmatprep.subr.mxu0 0.0
  %2132 = vmatpush1.msra.mxu0 0.0
  %2133 = vmatprep.subr.mxu0 0.0
  %2134 = vmatpush1.msra.mxu0 0.0
  %2135 = vmatprep.subr.mxu0 0.0
  %2136 = vmatpush1.msra.mxu0 0.0
  %2137 = vmatprep.subr.mxu0 0.0
  %2138 = vmatpush1.msra.mxu0 0.0
  %2139 = vmatprep.subr.mxu0 0.0
  %2140 = vmatpush1.msra.mxu0 0.0
  %2141 = vmatprep.subr.mxu0 0.0
  %2142 = vmatpush1.msra.mxu0 0.0
  %2143 = vmatprep.subr.mxu0 0.0
  %2144 = vmatpush1.msra.mxu0 0.0
  %2145 = vmatprep.subr.mxu0 0.0
  %2146 = vmatpush1.msra.mxu0 0.0
  %2147 = vmatprep.subr.mxu0 0.0
  %2148 = vmatpush1.msra.mxu0 0.0
  %2149 = vmatprep.subr.mxu0 0.0
  %2150 = vmatpush1.msra.mxu0 0.0
  %2151 = vmatprep.subr.mxu0 0.0
  %2152 = vmatpush1.msra.mxu0 0.0
  %2153 = vmatprep.subr.mxu0 0.0
  %2154 = vmatpush1.msra.mxu0 0.0
  %2155 = vmatprep.mubr.f32.mxu0 0.0
  %2156 = vmatmul.mubr.f32.gmra.mrb[0].mxu0 %v2089
  %v2157 = vpop.f32.mrb[0].mxu0
  %v2158 = vadd.f32 %v555, %v2157
  %v2159 = vpop.f32.mrb[0].mxu0
  %2160 = vdwg.mxu0
  %v2161 = vxor.u32 %v2158, 2147483648
  %v2162 = vmul.f32 %v2161, 1.442695
  %v2163 = vpow.pop %v2162
  %v2164 = vadd.f32 %v2163, 1.0
  %v2165 = vrcp.pop %v2164
  %v2166 = vmul.f32 1.0, %v2165
  %v2167 = vtanh.pop %v2158
  %v2168 = vmul.f32 %v2166, %v1804
  %2170 = vrot.lane.b32.xlu0 %v2167, 64
  %v2171 = vpop.permute.xlu0 %2170
  %v2173 = vmul.f32 %v2166, %v2171
  %2175 = vrot.lane.b32.xlu0 %v2173, 32
  %v2176 = vpop.permute.xlu0 %2175
  %v2178 = vadd.f32 %v2168, %v2176
  %v2179 = vtanh.pop %v2178
  %2181 = vrot.lane.b32.xlu0 %v2179, 64
  %v2182 = vpop.permute.xlu0 %2181
  %v2184 = vmul.f32 %v2166, %v2182
  %v2185 = vsel %vm549, %v2081, %v2072
  %v2187 = vsel %vm267, %v2185, 0
  %2189 = vmatprep.subr.mxu0 %v234
  %2190 = vmatpush1.msra.mxu0 %v233
  %2191 = vmatprep.subr.mxu0 %v237
  %2192 = vmatpush1.msra.mxu0 %v236
  %2193 = vmatprep.subr.mxu0 %v240
  %2194 = vmatpush1.msra.mxu0 %v239
  %2195 = vmatprep.subr.mxu0 %v243
  %2196 = vmatpush1.msra.mxu0 %v242
  %2197 = vmatprep.subr.mxu0 %v246
  %2198 = vmatpush1.msra.mxu0 %v245
  %2199 = vmatprep.subr.mxu0 %v249
  %2200 = vmatpush1.msra.mxu0 %v248
  %2201 = vmatprep.subr.mxu0 %v252
  %2202 = vmatpush1.msra.mxu0 %v251
  %2203 = vmatprep.subr.mxu0 %v255
  %2204 = vmatpush1.msra.mxu0 %v254
  %2205 = vmatprep.subr.mxu0 0.0
  %2206 = vmatpush1.msra.mxu0 0.0
  %2207 = vmatprep.subr.mxu0 0.0
  %2208 = vmatpush1.msra.mxu0 0.0
  %2209 = vmatprep.subr.mxu0 0.0
  %2210 = vmatpush1.msra.mxu0 0.0
  %2211 = vmatprep.subr.mxu0 0.0
  %2212 = vmatpush1.msra.mxu0 0.0
  %2213 = vmatprep.subr.mxu0 0.0
  %2214 = vmatpush1.msra.mxu0 0.0
  %2215 = vmatprep.subr.mxu0 0.0
  %2216 = vmatpush1.msra.mxu0 0.0
  %2217 = vmatprep.subr.mxu0 0.0
  %2218 = vmatpush1.msra.mxu0 0.0
  %2219 = vmatprep.subr.mxu0 0.0
  %2220 = vmatpush1.msra.mxu0 0.0
  %2221 = vmatprep.subr.mxu0 0.0
  %2222 = vmatpush1.msra.mxu0 0.0
  %2223 = vmatprep.subr.mxu0 0.0
  %2224 = vmatpush1.msra.mxu0 0.0
  %2225 = vmatprep.subr.mxu0 0.0
  %2226 = vmatpush1.msra.mxu0 0.0
  %2227 = vmatprep.subr.mxu0 0.0
  %2228 = vmatpush1.msra.mxu0 0.0
  %2229 = vmatprep.subr.mxu0 0.0
  %2230 = vmatpush1.msra.mxu0 0.0
  %2231 = vmatprep.subr.mxu0 0.0
  %2232 = vmatpush1.msra.mxu0 0.0
  %2233 = vmatprep.subr.mxu0 0.0
  %2234 = vmatpush1.msra.mxu0 0.0
  %2235 = vmatprep.subr.mxu0 0.0
  %2236 = vmatpush1.msra.mxu0 0.0
  %2237 = vmatprep.subr.mxu0 0.0
  %2238 = vmatpush1.msra.mxu0 0.0
  %2239 = vmatprep.subr.mxu0 0.0
  %2240 = vmatpush1.msra.mxu0 0.0
  %2241 = vmatprep.subr.mxu0 0.0
  %2242 = vmatpush1.msra.mxu0 0.0
  %2243 = vmatprep.subr.mxu0 0.0
  %2244 = vmatpush1.msra.mxu0 0.0
  %2245 = vmatprep.subr.mxu0 0.0
  %2246 = vmatpush1.msra.mxu0 0.0
  %2247 = vmatprep.subr.mxu0 0.0
  %2248 = vmatpush1.msra.mxu0 0.0
  %2249 = vmatprep.subr.mxu0 0.0
  %2250 = vmatpush1.msra.mxu0 0.0
  %2251 = vmatprep.subr.mxu0 0.0
  %2252 = vmatpush1.msra.mxu0 0.0
  %2253 = vmatprep.mubr.f32.mxu0 0.0
  %2254 = vmatmul.mubr.f32.gmra.mrb[0].mxu0 %v2187
  %v2255 = vpop.f32.mrb[0].mxu0
  %v2256 = vadd.f32 0.0, %v2255
  %v2257 = vpop.f32.mrb[0].mxu0
  %v2258 = vadd.f32 0.0, %v2257
  %2259 = vdwg.mxu0
  %2260 = vmatprep.subr.mxu0 0.0
  %2261 = vmatpush1.msra.mxu0 %v235
  %2262 = vmatprep.subr.mxu0 0.0
  %2263 = vmatpush1.msra.mxu0 %v238
  %2264 = vmatprep.subr.mxu0 0.0
  %2265 = vmatpush1.msra.mxu0 %v241
  %2266 = vmatprep.subr.mxu0 0.0
  %2267 = vmatpush1.msra.mxu0 %v244
  %2268 = vmatprep.subr.mxu0 0.0
  %2269 = vmatpush1.msra.mxu0 %v247
  %2270 = vmatprep.subr.mxu0 0.0
  %2271 = vmatpush1.msra.mxu0 %v250
  %2272 = vmatprep.subr.mxu0 0.0
  %2273 = vmatpush1.msra.mxu0 %v253
  %2274 = vmatprep.subr.mxu0 0.0
  %2275 = vmatpush1.msra.mxu0 %v256
  %2276 = vmatprep.subr.mxu0 0.0
  %2277 = vmatpush1.msra.mxu0 0.0
  %2278 = vmatprep.subr.mxu0 0.0
  %2279 = vmatpush1.msra.mxu0 0.0
  %2280 = vmatprep.subr.mxu0 0.0
  %2281 = vmatpush1.msra.mxu0 0.0
  %2282 = vmatprep.subr.mxu0 0.0
  %2283 = vmatpush1.msra.mxu0 0.0
  %2284 = vmatprep.subr.mxu0 0.0
  %2285 = vmatpush1.msra.mxu0 0.0
  %2286 = vmatprep.subr.mxu0 0.0
  %2287 = vmatpush1.msra.mxu0 0.0
  %2288 = vmatprep.subr.mxu0 0.0
  %2289 = vmatpush1.msra.mxu0 0.0
  %2290 = vmatprep.subr.mxu0 0.0
  %2291 = vmatpush1.msra.mxu0 0.0
  %2292 = vmatprep.subr.mxu0 0.0
  %2293 = vmatpush1.msra.mxu0 0.0
  %2294 = vmatprep.subr.mxu0 0.0
  %2295 = vmatpush1.msra.mxu0 0.0
  %2296 = vmatprep.subr.mxu0 0.0
  %2297 = vmatpush1.msra.mxu0 0.0
  %2298 = vmatprep.subr.mxu0 0.0
  %2299 = vmatpush1.msra.mxu0 0.0
  %2300 = vmatprep.subr.mxu0 0.0
  %2301 = vmatpush1.msra.mxu0 0.0
  %2302 = vmatprep.subr.mxu0 0.0
  %2303 = vmatpush1.msra.mxu0 0.0
  %2304 = vmatprep.subr.mxu0 0.0
  %2305 = vmatpush1.msra.mxu0 0.0
  %2306 = vmatprep.subr.mxu0 0.0
  %2307 = vmatpush1.msra.mxu0 0.0
  %2308 = vmatprep.subr.mxu0 0.0
  %2309 = vmatpush1.msra.mxu0 0.0
  %2310 = vmatprep.subr.mxu0 0.0
  %2311 = vmatpush1.msra.mxu0 0.0
  %2312 = vmatprep.subr.mxu0 0.0
  %2313 = vmatpush1.msra.mxu0 0.0
  %2314 = vmatprep.subr.mxu0 0.0
  %2315 = vmatpush1.msra.mxu0 0.0
  %2316 = vmatprep.subr.mxu0 0.0
  %2317 = vmatpush1.msra.mxu0 0.0
  %2318 = vmatprep.subr.mxu0 0.0
  %2319 = vmatpush1.msra.mxu0 0.0
  %2320 = vmatprep.subr.mxu0 0.0
  %2321 = vmatpush1.msra.mxu0 0.0
  %2322 = vmatprep.subr.mxu0 0.0
  %2323 = vmatpush1.msra.mxu0 0.0
  %2324 = vmatprep.mubr.f32.mxu0 0.0
  %2325 = vmatmul.mubr.f32.gmra.mrb[0].mxu0 %v2187
  %v2326 = vpop.f32.mrb[0].mxu0
  %v2327 = vadd.f32 0.0, %v2326
  %v2328 = vpop.f32.mrb[0].mxu0
  %2329 = vdwg.mxu0
  %v2331 = vrot.slane %v2256, 6
  %v2333 = vadd.f32 %v154, %v2331
  %v2334 = vxor.u32 %v2333, 2147483648
  %v2335 = vmul.f32 %v2334, 1.442695
  %v2336 = vpow.pop %v2335
  %v2337 = vadd.f32 %v2336, 1.0
  %v2338 = vrcp.pop %v2337
  %v2339 = vmul.f32 1.0, %v2338
  %v2340 = vtanh.pop %v2333
  %v2343 = vrot.slane %v2258, 6
  %v2344 = vrot.slane %v2327, 6
  %v2347 = vadd.f32 %v156, %v2343
  %v2348 = vadd.f32 %v230, %v2344
  %2350 = vrot.lane.b32.xlu0 %v2340, 32
  %v2351 = vpop.permute.xlu0 %2350
  %v2353 = vmul.f32 %v2339, %v2351
  %v2354 = vxor.u32 %v2347, 2147483648
  %v2355 = vmul.f32 %v2354, 1.442695
  %v2356 = vpow.pop %v2355
  %v2357 = vadd.f32 %v2356, 1.0
  %v2358 = vrcp.pop %v2357
  %v2359 = vmul.f32 1.0, %v2358
  %v2360 = vtanh.pop %v2347
  %2362 = vrot.lane.b32.xlu0 %v2360, 96
  %v2363 = vpop.permute.xlu0 %2362
  %v2365 = vmul.f32 %v2359, %v2363
  %v2366 = vxor.u32 %v2348, 2147483648
  %v2367 = vmul.f32 %v2366, 1.442695
  %v2368 = vpow.pop %v2367
  %v2369 = vadd.f32 %v2368, 1.0
  %v2370 = vrcp.pop %v2369
  %v2371 = vmul.f32 1.0, %v2370
  %v2372 = vtanh.pop %v2348
  %2374 = vrot.lane.b32.xlu0 %v2372, 96
  %v2375 = vpop.permute.xlu0 %2374
  %v2377 = vmul.f32 %v2371, %v2375
  %2378 = vrot.lane.b32.xlu0 %v2344, 64
  %v2379 = vpop.permute.xlu0 %2378
  %v2381 = vmul.f32 %v2353, %v2379
  %v2382 = vsel %vm851, %v2381, 0.0
  %2383 = vadd.xlane.f32.xlu0 %v2382
  %v2384 = vpop.xlane.xlu0 %2383
  %v2385 = vmul.f32 %v2365, %v2379
  %v2386 = vsel %vm851, %v2385, 0.0
  %2387 = vadd.xlane.f32.xlu0 %v2386
  %v2388 = vpop.xlane.xlu0 %2387
  %v2389 = vmul.f32 %v2365, %v2344
  %2391 = vrot.lane.b32.xlu0 %v2389, 64
  %v2392 = vpop.permute.xlu0 %2391
  %v2394 = vsel %vm851, %v2392, 0.0
  %2395 = vadd.xlane.f32.xlu0 %v2394
  %v2396 = vpop.xlane.xlu0 %2395
  %v2397 = vmul.f32 %v2377, %v2379
  %v2398 = vsel %vm851, %v2397, 0.0
  %2399 = vadd.xlane.f32.xlu0 %v2398
  %v2400 = vpop.xlane.xlu0 %2399
  %v2401 = vsel %vm476, %v2384, %v2388
  %v2402 = vsel %vm478, %v2401, %v2396
  %v2403 = vsel %vm480, %v2402, %v2400
  %v2404 = vadd.f32 %v2403, %v489
  %v2405 = vtanh.pop %v2404
  %v2406 = vsel %vm876, %v2405, -inf
  %2407 = vmax.xlane.f32.xlu0 %v2406
  %v2408 = vpop.xlane.xlu0 %2407
  %v2409 = vsub.f32 %v2405, %v2408
  %v2410 = vmul.f32 %v2409, 1.442695
  %v2411 = vpow.pop %v2410
  %v2412 = vsel %vm876, %v2411, 0.0
  %2413 = vadd.xlane.f32.xlu0 %v2412
  %v2414 = vpop.xlane.xlu0 %2413
  %v2415 = vrcp.pop %v2414
  %v2416 = vmul.f32 %v2411, %v2415
  %2418 = vset.pattern.permute.xlu0 0
  %2419 = vperm.xlu0 %2418, %v2416
  %v2420 = vpop.permute.xlu0 %2419
  %v2422 = vmul.f32 %v2420, %v2353
  %2423 = vset.pattern.permute.xlu0 1
  %2424 = vperm.xlu0 %2423, %v2416
  %v2425 = vpop.permute.xlu0 %2424
  %v2427 = vmul.f32 %v2425, %v2365
  %v2428 = vadd.f32 %v2422, %v2427
  %2429 = vset.pattern.permute.xlu0 2
  %2430 = vperm.xlu0 %2429, %v2416
  %v2431 = vpop.permute.xlu0 %2430
  %v2433 = vmul.f32 %v2431, %v2365
  %2435 = vrot.lane.b32.xlu0 %v2433, 64
  %v2436 = vpop.permute.xlu0 %2435
  %v2438 = vadd.f32 %v2428, %v2436
  %2439 = vset.pattern.permute.xlu0 3
  %2440 = vperm.xlu0 %2439, %v2416
  %v2441 = vpop.permute.xlu0 %2440
  %v2443 = vmul.f32 %v2441, %v2377
  %v2444 = vadd.f32 %v2438, %v2443
  %v2446 = vrot.slane %v2072, 6
  %v2448 = vmul.f32 %v2339, %v2446
  %2450 = vrot.lane.b32.xlu0 %v2444, 32
  %v2451 = vpop.permute.xlu0 %2450
  %v2453 = vadd.f32 %v2448, %v2451
  %v2454 = vtanh.pop %v2453
  %2456 = vrot.lane.b32.xlu0 %v2454, 32
  %v2457 = vpop.permute.xlu0 %2456
  %v2459 = vmul.f32 %v2339, %v2457
  %2461 = vrot.lane.b32.xlu0 %v2459, 64
  %v2462 = vpop.permute.xlu0 %2461
  %v2465 = vrot.slane %v2184, 6
  %2466 = vrot.lane.b32.xlu0 %v2465, 64
  %v2467 = vpop.permute.xlu0 %2466
  %v2469 = vsel %vm549, %v2462, %v2467
  %v2471 = vrot.slane %v2469, 2
  %v2472 = vsel %vm267, %v2471, 0
  %2474 = vmatprep.subr.mxu0 0.0
  %2475 = vmatpush1.msra.mxu0 %v257
  %2476 = vmatprep.subr.mxu0 0.0
  %2477 = vmatpush1.msra.mxu0 %v258
  %2478 = vmatprep.subr.mxu0 0.0
  %2479 = vmatpush1.msra.mxu0 %v259
  %2480 = vmatprep.subr.mxu0 0.0
  %2481 = vmatpush1.msra.mxu0 %v260
  %2482 = vmatprep.subr.mxu0 0.0
  %2483 = vmatpush1.msra.mxu0 %v261
  %2484 = vmatprep.subr.mxu0 0.0
  %2485 = vmatpush1.msra.mxu0 %v262
  %2486 = vmatprep.subr.mxu0 0.0
  %2487 = vmatpush1.msra.mxu0 %v263
  %2488 = vmatprep.subr.mxu0 0.0
  %2489 = vmatpush1.msra.mxu0 %v264
  %2490 = vmatprep.subr.mxu0 0.0
  %2491 = vmatpush1.msra.mxu0 0.0
  %2492 = vmatprep.subr.mxu0 0.0
  %2493 = vmatpush1.msra.mxu0 0.0
  %2494 = vmatprep.subr.mxu0 0.0
  %2495 = vmatpush1.msra.mxu0 0.0
  %2496 = vmatprep.subr.mxu0 0.0
  %2497 = vmatpush1.msra.mxu0 0.0
  %2498 = vmatprep.subr.mxu0 0.0
  %2499 = vmatpush1.msra.mxu0 0.0
  %2500 = vmatprep.subr.mxu0 0.0
  %2501 = vmatpush1.msra.mxu0 0.0
  %2502 = vmatprep.subr.mxu0 0.0
  %2503 = vmatpush1.msra.mxu0 0.0
  %2504 = vmatprep.subr.mxu0 0.0
  %2505 = vmatpush1.msra.mxu0 0.0
  %2506 = vmatprep.subr.mxu0 0.0
  %2507 = vmatpush1.msra.mxu0 0.0
  %2508 = vmatprep.subr.mxu0 0.0
  %2509 = vmatpush1.msra.mxu0 0.0
  %2510 = vmatprep.subr.mxu0 0.0
  %2511 = vmatpush1.msra.mxu0 0.0
  %2512 = vmatprep.subr.mxu0 0.0
  %2513 = vmatpush1.msra.mxu0 0.0
  %2514 = vmatprep.subr.mxu0 0.0
  %2515 = vmatpush1.msra.mxu0 0.0
  %2516 = vmatprep.subr.mxu0 0.0
  %2517 = vmatpush1.msra.mxu0 0.0
  %2518 = vmatprep.subr.mxu0 0.0
  %2519 = vmatpush1.msra.mxu0 0.0
  %2520 = vmatprep.subr.mxu0 0.0
  %2521 = vmatpush1.msra.mxu0 0.0
  %2522 = vmatprep.subr.mxu0 0.0
  %2523 = vmatpush1.msra.mxu0 0.0
  %2524 = vmatprep.subr.mxu0 0.0
  %2525 = vmatpush1.msra.mxu0 0.0
  %2526 = vmatprep.subr.mxu0 0.0
  %2527 = vmatpush1.msra.mxu0 0.0
  %2528 = vmatprep.subr.mxu0 0.0
  %2529 = vmatpush1.msra.mxu0 0.0
  %2530 = vmatprep.subr.mxu0 0.0
  %2531 = vmatpush1.msra.mxu0 0.0
  %2532 = vmatprep.subr.mxu0 0.0
  %2533 = vmatpush1.msra.mxu0 0.0
  %2534 = vmatprep.subr.mxu0 0.0
  %2535 = vmatpush1.msra.mxu0 0.0
  %2536 = vmatprep.subr.mxu0 0.0
  %2537 = vmatpush1.msra.mxu0 0.0
  %2538 = vmatprep.mubr.f32.mxu0 0.0
  %2539 = vmatmul.mubr.f32.gmra.mrb[0].mxu0 %v2472
  %v2540 = vpop.f32.mrb[0].mxu0
  %v2541 = vadd.f32 %v555, %v2540
  %v2542 = vpop.f32.mrb[0].mxu0
  %2543 = vdwg.mxu0
  %v2544 = vxor.u32 %v2541, 2147483648
  %v2545 = vmul.f32 %v2544, 1.442695
  %v2546 = vpow.pop %v2545
  %v2547 = vadd.f32 %v2546, 1.0
  %v2548 = vrcp.pop %v2547
  %v2549 = vmul.f32 1.0, %v2548
  %v2550 = vtanh.pop %v2541
  %v2551 = vmul.f32 %v2549, %v2178
  %2553 = vrot.lane.b32.xlu0 %v2550, 64
  %v2554 = vpop.permute.xlu0 %2553
  %v2556 = vmul.f32 %v2549, %v2554
  %2558 = vrot.lane.b32.xlu0 %v2556, 32
  %v2559 = vpop.permute.xlu0 %2558
  %v2561 = vadd.f32 %v2551, %v2559
  %v2562 = vtanh.pop %v2561
  %2564 = vrot.lane.b32.xlu0 %v2562, 64
  %v2565 = vpop.permute.xlu0 %2564
  %v2567 = vmul.f32 %v2549, %v2565
  %v2568 = vsel %vm549, %v2462, %v2453
  %v2570 = vrot.slane %v2568, 2
  %v2571 = vsel %vm267, %v2570, 0
  %2573 = vmatprep.subr.mxu0 %v234
  %2574 = vmatpush1.msra.mxu0 %v233
  %2575 = vmatprep.subr.mxu0 %v237
  %2576 = vmatpush1.msra.mxu0 %v236
  %2577 = vmatprep.subr.mxu0 %v240
  %2578 = vmatpush1.msra.mxu0 %v239
  %2579 = vmatprep.subr.mxu0 %v243
  %2580 = vmatpush1.msra.mxu0 %v242
  %2581 = vmatprep.subr.mxu0 %v246
  %2582 = vmatpush1.msra.mxu0 %v245
  %2583 = vmatprep.subr.mxu0 %v249
  %2584 = vmatpush1.msra.mxu0 %v248
  %2585 = vmatprep.subr.mxu0 %v252
  %2586 = vmatpush1.msra.mxu0 %v251
  %2587 = vmatprep.subr.mxu0 %v255
  %2588 = vmatpush1.msra.mxu0 %v254
  %2589 = vmatprep.subr.mxu0 0.0
  %2590 = vmatpush1.msra.mxu0 0.0
  %2591 = vmatprep.subr.mxu0 0.0
  %2592 = vmatpush1.msra.mxu0 0.0
  %2593 = vmatprep.subr.mxu0 0.0
  %2594 = vmatpush1.msra.mxu0 0.0
  %2595 = vmatprep.subr.mxu0 0.0
  %2596 = vmatpush1.msra.mxu0 0.0
  %2597 = vmatprep.subr.mxu0 0.0
  %2598 = vmatpush1.msra.mxu0 0.0
  %2599 = vmatprep.subr.mxu0 0.0
  %2600 = vmatpush1.msra.mxu0 0.0
  %2601 = vmatprep.subr.mxu0 0.0
  %2602 = vmatpush1.msra.mxu0 0.0
  %2603 = vmatprep.subr.mxu0 0.0
  %2604 = vmatpush1.msra.mxu0 0.0
  %2605 = vmatprep.subr.mxu0 0.0
  %2606 = vmatpush1.msra.mxu0 0.0
  %2607 = vmatprep.subr.mxu0 0.0
  %2608 = vmatpush1.msra.mxu0 0.0
  %2609 = vmatprep.subr.mxu0 0.0
  %2610 = vmatpush1.msra.mxu0 0.0
  %2611 = vmatprep.subr.mxu0 0.0
  %2612 = vmatpush1.msra.mxu0 0.0
  %2613 = vmatprep.subr.mxu0 0.0
  %2614 = vmatpush1.msra.mxu0 0.0
  %2615 = vmatprep.subr.mxu0 0.0
  %2616 = vmatpush1.msra.mxu0 0.0
  %2617 = vmatprep.subr.mxu0 0.0
  %2618 = vmatpush1.msra.mxu0 0.0
  %2619 = vmatprep.subr.mxu0 0.0
  %2620 = vmatpush1.msra.mxu0 0.0
  %2621 = vmatprep.subr.mxu0 0.0
  %2622 = vmatpush1.msra.mxu0 0.0
  %2623 = vmatprep.subr.mxu0 0.0
  %2624 = vmatpush1.msra.mxu0 0.0
  %2625 = vmatprep.subr.mxu0 0.0
  %2626 = vmatpush1.msra.mxu0 0.0
  %2627 = vmatprep.subr.mxu0 0.0
  %2628 = vmatpush1.msra.mxu0 0.0
  %2629 = vmatprep.subr.mxu0 0.0
  %2630 = vmatpush1.msra.mxu0 0.0
  %2631 = vmatprep.subr.mxu0 0.0
  %2632 = vmatpush1.msra.mxu0 0.0
  %2633 = vmatprep.subr.mxu0 0.0
  %2634 = vmatpush1.msra.mxu0 0.0
  %2635 = vmatprep.subr.mxu0 0.0
  %2636 = vmatpush1.msra.mxu0 0.0
  %2637 = vmatprep.mubr.f32.mxu0 0.0
  %2638 = vmatmul.mubr.f32.gmra.mrb[0].mxu0 %v2571
  %v2639 = vpop.f32.mrb[0].mxu0
  %v2640 = vadd.f32 0.0, %v2639
  %v2641 = vpop.f32.mrb[0].mxu0
  %v2642 = vadd.f32 0.0, %v2641
  %2643 = vdwg.mxu0
  %2644 = vmatprep.subr.mxu0 0.0
  %2645 = vmatpush1.msra.mxu0 %v235
  %2646 = vmatprep.subr.mxu0 0.0
  %2647 = vmatpush1.msra.mxu0 %v238
  %2648 = vmatprep.subr.mxu0 0.0
  %2649 = vmatpush1.msra.mxu0 %v241
  %2650 = vmatprep.subr.mxu0 0.0
  %2651 = vmatpush1.msra.mxu0 %v244
  %2652 = vmatprep.subr.mxu0 0.0
  %2653 = vmatpush1.msra.mxu0 %v247
  %2654 = vmatprep.subr.mxu0 0.0
  %2655 = vmatpush1.msra.mxu0 %v250
  %2656 = vmatprep.subr.mxu0 0.0
  %2657 = vmatpush1.msra.mxu0 %v253
  %2658 = vmatprep.subr.mxu0 0.0
  %2659 = vmatpush1.msra.mxu0 %v256
  %2660 = vmatprep.subr.mxu0 0.0
  %2661 = vmatpush1.msra.mxu0 0.0
  %2662 = vmatprep.subr.mxu0 0.0
  %2663 = vmatpush1.msra.mxu0 0.0
  %2664 = vmatprep.subr.mxu0 0.0
  %2665 = vmatpush1.msra.mxu0 0.0
  %2666 = vmatprep.subr.mxu0 0.0
  %2667 = vmatpush1.msra.mxu0 0.0
  %2668 = vmatprep.subr.mxu0 0.0
  %2669 = vmatpush1.msra.mxu0 0.0
  %2670 = vmatprep.subr.mxu0 0.0
  %2671 = vmatpush1.msra.mxu0 0.0
  %2672 = vmatprep.subr.mxu0 0.0
  %2673 = vmatpush1.msra.mxu0 0.0
  %2674 = vmatprep.subr.mxu0 0.0
  %2675 = vmatpush1.msra.mxu0 0.0
  %2676 = vmatprep.subr.mxu0 0.0
  %2677 = vmatpush1.msra.mxu0 0.0
  %2678 = vmatprep.subr.mxu0 0.0
  %2679 = vmatpush1.msra.mxu0 0.0
  %2680 = vmatprep.subr.mxu0 0.0
  %2681 = vmatpush1.msra.mxu0 0.0
  %2682 = vmatprep.subr.mxu0 0.0
  %2683 = vmatpush1.msra.mxu0 0.0
  %2684 = vmatprep.subr.mxu0 0.0
  %2685 = vmatpush1.msra.mxu0 0.0
  %2686 = vmatprep.subr.mxu0 0.0
  %2687 = vmatpush1.msra.mxu0 0.0
  %2688 = vmatprep.subr.mxu0 0.0
  %2689 = vmatpush1.msra.mxu0 0.0
  %2690 = vmatprep.subr.mxu0 0.0
  %2691 = vmatpush1.msra.mxu0 0.0
  %2692 = vmatprep.subr.mxu0 0.0
  %2693 = vmatpush1.msra.mxu0 0.0
  %2694 = vmatprep.subr.mxu0 0.0
  %2695 = vmatpush1.msra.mxu0 0.0
  %2696 = vmatprep.subr.mxu0 0.0
  %2697 = vmatpush1.msra.mxu0 0.0
  %2698 = vmatprep.subr.mxu0 0.0
  %2699 = vmatpush1.msra.mxu0 0.0
  %2700 = vmatprep.subr.mxu0 0.0
  %2701 = vmatpush1.msra.mxu0 0.0
  %2702 = vmatprep.subr.mxu0 0.0
  %2703 = vmatpush1.msra.mxu0 0.0
  %2704 = vmatprep.subr.mxu0 0.0
  %2705 = vmatpush1.msra.mxu0 0.0
  %2706 = vmatprep.subr.mxu0 0.0
  %2707 = vmatpush1.msra.mxu0 0.0
  %2708 = vmatprep.mubr.f32.mxu0 0.0
  %2709 = vmatmul.mubr.f32.gmra.mrb[0].mxu0 %v2571
  %v2710 = vpop.f32.mrb[0].mxu0
  %v2711 = vadd.f32 0.0, %v2710
  %v2712 = vpop.f32.mrb[0].mxu0
  %2713 = vdwg.mxu0
  %v2715 = vrot.slane %v2640, 4
  %v2717 = vadd.f32 %v154, %v2715
  %v2718 = vxor.u32 %v2717, 2147483648
  %v2719 = vmul.f32 %v2718, 1.442695
  %v2720 = vpow.pop %v2719
  %v2721 = vadd.f32 %v2720, 1.0
  %v2722 = vrcp.pop %v2721
  %v2723 = vmul.f32 1.0, %v2722
  %v2724 = vtanh.pop %v2717
  %v2727 = vrot.slane %v2642, 4
  %v2728 = vrot.slane %v2711, 4
  %v2731 = vadd.f32 %v156, %v2727
  %v2732 = vadd.f32 %v230, %v2728
  %2734 = vrot.lane.b32.xlu0 %v2724, 32
  %v2735 = vpop.permute.xlu0 %2734
  %v2737 = vmul.f32 %v2723, %v2735
  %v2738 = vxor.u32 %v2731, 2147483648
  %v2739 = vmul.f32 %v2738, 1.442695
  %v2740 = vpow.pop %v2739
  %v2741 = vadd.f32 %v2740, 1.0
  %v2742 = vrcp.pop %v2741
  %v2743 = vmul.f32 1.0, %v2742
  %v2744 = vtanh.pop %v2731
  %2746 = vrot.lane.b32.xlu0 %v2744, 96
  %v2747 = vpop.permute.xlu0 %2746
  %v2749 = vmul.f32 %v2743, %v2747
  %v2750 = vxor.u32 %v2732, 2147483648
  %v2751 = vmul.f32 %v2750, 1.442695
  %v2752 = vpow.pop %v2751
  %v2753 = vadd.f32 %v2752, 1.0
  %v2754 = vrcp.pop %v2753
  %v2755 = vmul.f32 1.0, %v2754
  %v2756 = vtanh.pop %v2732
  %2758 = vrot.lane.b32.xlu0 %v2756, 96
  %v2759 = vpop.permute.xlu0 %2758
  %v2761 = vmul.f32 %v2755, %v2759
  %2762 = vrot.lane.b32.xlu0 %v2728, 64
  %v2763 = vpop.permute.xlu0 %2762
  %v2765 = vmul.f32 %v2737, %v2763
  %v2766 = vsel %vm1237, %v2765, 0.0
  %2767 = vadd.xlane.f32.xlu0 %v2766
  %v2768 = vpop.xlane.xlu0 %2767
  %v2769 = vmul.f32 %v2749, %v2763
  %v2770 = vsel %vm1237, %v2769, 0.0
  %2771 = vadd.xlane.f32.xlu0 %v2770
  %v2772 = vpop.xlane.xlu0 %2771
  %v2773 = vmul.f32 %v2749, %v2728
  %2775 = vrot.lane.b32.xlu0 %v2773, 64
  %v2776 = vpop.permute.xlu0 %2775
  %v2778 = vsel %vm1237, %v2776, 0.0
  %2779 = vadd.xlane.f32.xlu0 %v2778
  %v2780 = vpop.xlane.xlu0 %2779
  %v2781 = vmul.f32 %v2761, %v2763
  %v2782 = vsel %vm1237, %v2781, 0.0
  %2783 = vadd.xlane.f32.xlu0 %v2782
  %v2784 = vpop.xlane.xlu0 %2783
  %v2785 = vsel %vm476, %v2768, %v2772
  %v2786 = vsel %vm478, %v2785, %v2780
  %v2787 = vsel %vm480, %v2786, %v2784
  %v2788 = vadd.f32 %v2787, %v489
  %v2789 = vtanh.pop %v2788
  %v2790 = vsel %vm1262, %v2789, -inf
  %2791 = vmax.xlane.f32.xlu0 %v2790
  %v2792 = vpop.xlane.xlu0 %2791
  %v2793 = vsub.f32 %v2789, %v2792
  %v2794 = vmul.f32 %v2793, 1.442695
  %v2795 = vpow.pop %v2794
  %v2796 = vsel %vm1262, %v2795, 0.0
  %2797 = vadd.xlane.f32.xlu0 %v2796
  %v2798 = vpop.xlane.xlu0 %2797
  %v2799 = vrcp.pop %v2798
  %v2800 = vmul.f32 %v2795, %v2799
  %2802 = vset.pattern.permute.xlu0 0
  %2803 = vperm.xlu0 %2802, %v2800
  %v2804 = vpop.permute.xlu0 %2803
  %v2806 = vmul.f32 %v2804, %v2737
  %2807 = vset.pattern.permute.xlu0 1
  %2808 = vperm.xlu0 %2807, %v2800
  %v2809 = vpop.permute.xlu0 %2808
  %v2811 = vmul.f32 %v2809, %v2749
  %v2812 = vadd.f32 %v2806, %v2811
  %2813 = vset.pattern.permute.xlu0 2
  %2814 = vperm.xlu0 %2813, %v2800
  %v2815 = vpop.permute.xlu0 %2814
  %v2817 = vmul.f32 %v2815, %v2749
  %2819 = vrot.lane.b32.xlu0 %v2817, 64
  %v2820 = vpop.permute.xlu0 %2819
  %v2822 = vadd.f32 %v2812, %v2820
  %2823 = vset.pattern.permute.xlu0 3
  %2824 = vperm.xlu0 %2823, %v2800
  %v2825 = vpop.permute.xlu0 %2824
  %v2827 = vmul.f32 %v2825, %v2761
  %v2828 = vadd.f32 %v2822, %v2827
  %v2830 = vrot.slane %v2453, 6
  %v2832 = vmul.f32 %v2723, %v2830
  %2834 = vrot.lane.b32.xlu0 %v2828, 32
  %v2835 = vpop.permute.xlu0 %2834
  %v2837 = vadd.f32 %v2832, %v2835
  %v2838 = vtanh.pop %v2837
  %2840 = vrot.lane.b32.xlu0 %v2838, 32
  %v2841 = vpop.permute.xlu0 %2840
  %v2843 = vmul.f32 %v2723, %v2841
  %2845 = vrot.lane.b32.xlu0 %v2843, 64
  %v2846 = vpop.permute.xlu0 %2845
  %v2849 = vrot.slane %v2567, 4
  %2850 = vrot.lane.b32.xlu0 %v2849, 64
  %v2851 = vpop.permute.xlu0 %2850
  %v2853 = vsel %vm549, %v2846, %v2851
  %v2855 = vrot.slane %v2853, 4
  %v2856 = vsel %vm267, %v2855, 0
  %2858 = vmatprep.subr.mxu0 0.0
  %2859 = vmatpush1.msra.mxu0 %v257
  %2860 = vmatprep.subr.mxu0 0.0
  %2861 = vmatpush1.msra.mxu0 %v258
  %2862 = vmatprep.subr.mxu0 0.0
  %2863 = vmatpush1.msra.mxu0 %v259
  %2864 = vmatprep.subr.mxu0 0.0
  %2865 = vmatpush1.msra.mxu0 %v260
  %2866 = vmatprep.subr.mxu0 0.0
  %2867 = vmatpush1.msra.mxu0 %v261
  %2868 = vmatprep.subr.mxu0 0.0
  %2869 = vmatpush1.msra.mxu0 %v262
  %2870 = vmatprep.subr.mxu0 0.0
  %2871 = vmatpush1.msra.mxu0 %v263
  %2872 = vmatprep.subr.mxu0 0.0
  %2873 = vmatpush1.msra.mxu0 %v264
  %2874 = vmatprep.subr.mxu0 0.0
  %2875 = vmatpush1.msra.mxu0 0.0
  %2876 = vmatprep.subr.mxu0 0.0
  %2877 = vmatpush1.msra.mxu0 0.0
  %2878 = vmatprep.subr.mxu0 0.0
  %2879 = vmatpush1.msra.mxu0 0.0
  %2880 = vmatprep.subr.mxu0 0.0
  %2881 = vmatpush1.msra.mxu0 0.0
  %2882 = vmatprep.subr.mxu0 0.0
  %2883 = vmatpush1.msra.mxu0 0.0
  %2884 = vmatprep.subr.mxu0 0.0
  %2885 = vmatpush1.msra.mxu0 0.0
  %2886 = vmatprep.subr.mxu0 0.0
  %2887 = vmatpush1.msra.mxu0 0.0
  %2888 = vmatprep.subr.mxu0 0.0
  %2889 = vmatpush1.msra.mxu0 0.0
  %2890 = vmatprep.subr.mxu0 0.0
  %2891 = vmatpush1.msra.mxu0 0.0
  %2892 = vmatprep.subr.mxu0 0.0
  %2893 = vmatpush1.msra.mxu0 0.0
  %2894 = vmatprep.subr.mxu0 0.0
  %2895 = vmatpush1.msra.mxu0 0.0
  %2896 = vmatprep.subr.mxu0 0.0
  %2897 = vmatpush1.msra.mxu0 0.0
  %2898 = vmatprep.subr.mxu0 0.0
  %2899 = vmatpush1.msra.mxu0 0.0
  %2900 = vmatprep.subr.mxu0 0.0
  %2901 = vmatpush1.msra.mxu0 0.0
  %2902 = vmatprep.subr.mxu0 0.0
  %2903 = vmatpush1.msra.mxu0 0.0
  %2904 = vmatprep.subr.mxu0 0.0
  %2905 = vmatpush1.msra.mxu0 0.0
  %2906 = vmatprep.subr.mxu0 0.0
  %2907 = vmatpush1.msra.mxu0 0.0
  %2908 = vmatprep.subr.mxu0 0.0
  %2909 = vmatpush1.msra.mxu0 0.0
  %2910 = vmatprep.subr.mxu0 0.0
  %2911 = vmatpush1.msra.mxu0 0.0
  %2912 = vmatprep.subr.mxu0 0.0
  %2913 = vmatpush1.msra.mxu0 0.0
  %2914 = vmatprep.subr.mxu0 0.0
  %2915 = vmatpush1.msra.mxu0 0.0
  %2916 = vmatprep.subr.mxu0 0.0
  %2917 = vmatpush1.msra.mxu0 0.0
  %2918 = vmatprep.subr.mxu0 0.0
  %2919 = vmatpush1.msra.mxu0 0.0
  %2920 = vmatprep.subr.mxu0 0.0
  %2921 = vmatpush1.msra.mxu0 0.0
  %2922 = vmatprep.mubr.f32.mxu0 0.0
  %2923 = vmatmul.mubr.f32.gmra.mrb[0].mxu0 %v2856
  %v2924 = vpop.f32.mrb[0].mxu0
  %v2925 = vadd.f32 %v555, %v2924
  %v2926 = vpop.f32.mrb[0].mxu0
  %2927 = vdwg.mxu0
  %v2928 = vxor.u32 %v2925, 2147483648
  %v2929 = vmul.f32 %v2928, 1.442695
  %v2930 = vpow.pop %v2929
  %v2931 = vadd.f32 %v2930, 1.0
  %v2932 = vrcp.pop %v2931
  %v2933 = vmul.f32 1.0, %v2932
  %v2934 = vtanh.pop %v2925
  %v2935 = vmul.f32 %v2933, %v2561
  %2937 = vrot.lane.b32.xlu0 %v2934, 64
  %v2938 = vpop.permute.xlu0 %2937
  %v2940 = vmul.f32 %v2933, %v2938
  %2942 = vrot.lane.b32.xlu0 %v2940, 32
  %v2943 = vpop.permute.xlu0 %2942
  %v2945 = vadd.f32 %v2935, %v2943
  %v2946 = vtanh.pop %v2945
  %2948 = vrot.lane.b32.xlu0 %v2946, 64
  %v2949 = vpop.permute.xlu0 %2948
  %v2951 = vmul.f32 %v2933, %v2949
  %v2952 = vsel %vm549, %v2846, %v2837
  %v2954 = vrot.slane %v2952, 4
  %v2955 = vsel %vm267, %v2954, 0
  %2957 = vmatprep.subr.mxu0 %v234
  %2958 = vmatpush1.msra.mxu0 %v233
  %2959 = vmatprep.subr.mxu0 %v237
  %2960 = vmatpush1.msra.mxu0 %v236
  %2961 = vmatprep.subr.mxu0 %v240
  %2962 = vmatpush1.msra.mxu0 %v239
  %2963 = vmatprep.subr.mxu0 %v243
  %2964 = vmatpush1.msra.mxu0 %v242
  %2965 = vmatprep.subr.mxu0 %v246
  %2966 = vmatpush1.msra.mxu0 %v245
  %2967 = vmatprep.subr.mxu0 %v249
  %2968 = vmatpush1.msra.mxu0 %v248
  %2969 = vmatprep.subr.mxu0 %v252
  %2970 = vmatpush1.msra.mxu0 %v251
  %2971 = vmatprep.subr.mxu0 %v255
  %2972 = vmatpush1.msra.mxu0 %v254
  %2973 = vmatprep.subr.mxu0 0.0
  %2974 = vmatpush1.msra.mxu0 0.0
  %2975 = vmatprep.subr.mxu0 0.0
  %2976 = vmatpush1.msra.mxu0 0.0
  %2977 = vmatprep.subr.mxu0 0.0
  %2978 = vmatpush1.msra.mxu0 0.0
  %2979 = vmatprep.subr.mxu0 0.0
  %2980 = vmatpush1.msra.mxu0 0.0
  %2981 = vmatprep.subr.mxu0 0.0
  %2982 = vmatpush1.msra.mxu0 0.0
  %2983 = vmatprep.subr.mxu0 0.0
  %2984 = vmatpush1.msra.mxu0 0.0
  %2985 = vmatprep.subr.mxu0 0.0
  %2986 = vmatpush1.msra.mxu0 0.0
  %2987 = vmatprep.subr.mxu0 0.0
  %2988 = vmatpush1.msra.mxu0 0.0
  %2989 = vmatprep.subr.mxu0 0.0
  %2990 = vmatpush1.msra.mxu0 0.0
  %2991 = vmatprep.subr.mxu0 0.0
  %2992 = vmatpush1.msra.mxu0 0.0
  %2993 = vmatprep.subr.mxu0 0.0
  %2994 = vmatpush1.msra.mxu0 0.0
  %2995 = vmatprep.subr.mxu0 0.0
  %2996 = vmatpush1.msra.mxu0 0.0
  %2997 = vmatprep.subr.mxu0 0.0
  %2998 = vmatpush1.msra.mxu0 0.0
  %2999 = vmatprep.subr.mxu0 0.0
  %3000 = vmatpush1.msra.mxu0 0.0
  %3001 = vmatprep.subr.mxu0 0.0
  %3002 = vmatpush1.msra.mxu0 0.0
  %3003 = vmatprep.subr.mxu0 0.0
  %3004 = vmatpush1.msra.mxu0 0.0
  %3005 = vmatprep.subr.mxu0 0.0
  %3006 = vmatpush1.msra.mxu0 0.0
  %3007 = vmatprep.subr.mxu0 0.0
  %3008 = vmatpush1.msra.mxu0 0.0
  %3009 = vmatprep.subr.mxu0 0.0
  %3010 = vmatpush1.msra.mxu0 0.0
  %3011 = vmatprep.subr.mxu0 0.0
  %3012 = vmatpush1.msra.mxu0 0.0
  %3013 = vmatprep.subr.mxu0 0.0
  %3014 = vmatpush1.msra.mxu0 0.0
  %3015 = vmatprep.subr.mxu0 0.0
  %3016 = vmatpush1.msra.mxu0 0.0
  %3017 = vmatprep.subr.mxu0 0.0
  %3018 = vmatpush1.msra.mxu0 0.0
  %3019 = vmatprep.subr.mxu0 0.0
  %3020 = vmatpush1.msra.mxu0 0.0
  %3021 = vmatprep.mubr.f32.mxu0 0.0
  %3022 = vmatmul.mubr.f32.gmra.mrb[0].mxu0 %v2955
  %v3023 = vpop.f32.mrb[0].mxu0
  %v3024 = vadd.f32 0.0, %v3023
  %v3025 = vpop.f32.mrb[0].mxu0
  %v3026 = vadd.f32 0.0, %v3025
  %3027 = vdwg.mxu0
  %3028 = vmatprep.subr.mxu0 0.0
  %3029 = vmatpush1.msra.mxu0 %v235
  %3030 = vmatprep.subr.mxu0 0.0
  %3031 = vmatpush1.msra.mxu0 %v238
  %3032 = vmatprep.subr.mxu0 0.0
  %3033 = vmatpush1.msra.mxu0 %v241
  %3034 = vmatprep.subr.mxu0 0.0
  %3035 = vmatpush1.msra.mxu0 %v244
  %3036 = vmatprep.subr.mxu0 0.0
  %3037 = vmatpush1.msra.mxu0 %v247
  %3038 = vmatprep.subr.mxu0 0.0
  %3039 = vmatpush1.msra.mxu0 %v250
  %3040 = vmatprep.subr.mxu0 0.0
  %3041 = vmatpush1.msra.mxu0 %v253
  %3042 = vmatprep.subr.mxu0 0.0
  %3043 = vmatpush1.msra.mxu0 %v256
  %3044 = vmatprep.subr.mxu0 0.0
  %3045 = vmatpush1.msra.mxu0 0.0
  %3046 = vmatprep.subr.mxu0 0.0
  %3047 = vmatpush1.msra.mxu0 0.0
  %3048 = vmatprep.subr.mxu0 0.0
  %3049 = vmatpush1.msra.mxu0 0.0
  %3050 = vmatprep.subr.mxu0 0.0
  %3051 = vmatpush1.msra.mxu0 0.0
  %3052 = vmatprep.subr.mxu0 0.0
  %3053 = vmatpush1.msra.mxu0 0.0
  %3054 = vmatprep.subr.mxu0 0.0
  %3055 = vmatpush1.msra.mxu0 0.0
  %3056 = vmatprep.subr.mxu0 0.0
  %3057 = vmatpush1.msra.mxu0 0.0
  %3058 = vmatprep.subr.mxu0 0.0
  %3059 = vmatpush1.msra.mxu0 0.0
  %3060 = vmatprep.subr.mxu0 0.0
  %3061 = vmatpush1.msra.mxu0 0.0
  %3062 = vmatprep.subr.mxu0 0.0
  %3063 = vmatpush1.msra.mxu0 0.0
  %3064 = vmatprep.subr.mxu0 0.0
  %3065 = vmatpush1.msra.mxu0 0.0
  %3066 = vmatprep.subr.mxu0 0.0
  %3067 = vmatpush1.msra.mxu0 0.0
  %3068 = vmatprep.subr.mxu0 0.0
  %3069 = vmatpush1.msra.mxu0 0.0
  %3070 = vmatprep.subr.mxu0 0.0
  %3071 = vmatpush1.msra.mxu0 0.0
  %3072 = vmatprep.subr.mxu0 0.0
  %3073 = vmatpush1.msra.mxu0 0.0
  %3074 = vmatprep.subr.mxu0 0.0
  %3075 = vmatpush1.msra.mxu0 0.0
  %3076 = vmatprep.subr.mxu0 0.0
  %3077 = vmatpush1.msra.mxu0 0.0
  %3078 = vmatprep.subr.mxu0 0.0
  %3079 = vmatpush1.msra.mxu0 0.0
  %3080 = vmatprep.subr.mxu0 0.0
  %3081 = vmatpush1.msra.mxu0 0.0
  %3082 = vmatprep.subr.mxu0 0.0
  %3083 = vmatpush1.msra.mxu0 0.0
  %3084 = vmatprep.subr.mxu0 0.0
  %3085 = vmatpush1.msra.mxu0 0.0
  %3086 = vmatprep.subr.mxu0 0.0
  %3087 = vmatpush1.msra.mxu0 0.0
  %3088 = vmatprep.subr.mxu0 0.0
  %3089 = vmatpush1.msra.mxu0 0.0
  %3090 = vmatprep.subr.mxu0 0.0
  %3091 = vmatpush1.msra.mxu0 0.0
  %3092 = vmatprep.mubr.f32.mxu0 0.0
  %3093 = vmatmul.mubr.f32.gmra.mrb[0].mxu0 %v2955
  %v3094 = vpop.f32.mrb[0].mxu0
  %v3095 = vadd.f32 0.0, %v3094
  %v3096 = vpop.f32.mrb[0].mxu0
  %3097 = vdwg.mxu0
  %v3099 = vrot.slane %v3024, 2
  %v3101 = vadd.f32 %v154, %v3099
  %v3102 = vxor.u32 %v3101, 2147483648
  %v3103 = vmul.f32 %v3102, 1.442695
  %v3104 = vpow.pop %v3103
  %v3105 = vadd.f32 %v3104, 1.0
  %v3106 = vrcp.pop %v3105
  %v3107 = vmul.f32 1.0, %v3106
  %v3108 = vtanh.pop %v3101
  %v3111 = vrot.slane %v3026, 2
  %v3112 = vrot.slane %v3095, 2
  %v3115 = vadd.f32 %v156, %v3111
  %v3116 = vadd.f32 %v230, %v3112
  %3118 = vrot.lane.b32.xlu0 %v3108, 32
  %v3119 = vpop.permute.xlu0 %3118
  %v3121 = vmul.f32 %v3107, %v3119
  %v3122 = vxor.u32 %v3115, 2147483648
  %v3123 = vmul.f32 %v3122, 1.442695
  %v3124 = vpow.pop %v3123
  %v3125 = vadd.f32 %v3124, 1.0
  %v3126 = vrcp.pop %v3125
  %v3127 = vmul.f32 1.0, %v3126
  %v3128 = vtanh.pop %v3115
  %3130 = vrot.lane.b32.xlu0 %v3128, 96
  %v3131 = vpop.permute.xlu0 %3130
  %v3133 = vmul.f32 %v3127, %v3131
  %v3134 = vxor.u32 %v3116, 2147483648
  %v3135 = vmul.f32 %v3134, 1.442695
  %v3136 = vpow.pop %v3135
  %v3137 = vadd.f32 %v3136, 1.0
  %v3138 = vrcp.pop %v3137
  %v3139 = vmul.f32 1.0, %v3138
  %v3140 = vtanh.pop %v3116
  %3142 = vrot.lane.b32.xlu0 %v3140, 96
  %v3143 = vpop.permute.xlu0 %3142
  %v3145 = vmul.f32 %v3139, %v3143
  %3146 = vrot.lane.b32.xlu0 %v3112, 64
  %v3147 = vpop.permute.xlu0 %3146
  %v3149 = vmul.f32 %v3121, %v3147
  %v3150 = vsel %vm1623, %v3149, 0.0
  %3151 = vadd.xlane.f32.xlu0 %v3150
  %v3152 = vpop.xlane.xlu0 %3151
  %v3153 = vmul.f32 %v3133, %v3147
  %v3154 = vsel %vm1623, %v3153, 0.0
  %3155 = vadd.xlane.f32.xlu0 %v3154
  %v3156 = vpop.xlane.xlu0 %3155
  %v3157 = vmul.f32 %v3133, %v3112
  %3159 = vrot.lane.b32.xlu0 %v3157, 64
  %v3160 = vpop.permute.xlu0 %3159
  %v3162 = vsel %vm1623, %v3160, 0.0
  %3163 = vadd.xlane.f32.xlu0 %v3162
  %v3164 = vpop.xlane.xlu0 %3163
  %v3165 = vmul.f32 %v3145, %v3147
  %v3166 = vsel %vm1623, %v3165, 0.0
  %3167 = vadd.xlane.f32.xlu0 %v3166
  %v3168 = vpop.xlane.xlu0 %3167
  %v3169 = vsel %vm476, %v3152, %v3156
  %v3170 = vsel %vm478, %v3169, %v3164
  %v3171 = vsel %vm480, %v3170, %v3168
  %v3172 = vadd.f32 %v3171, %v489
  %v3173 = vtanh.pop %v3172
  %v3174 = vsel %vm1648, %v3173, -inf
  %3175 = vmax.xlane.f32.xlu0 %v3174
  %v3176 = vpop.xlane.xlu0 %3175
  %v3177 = vsub.f32 %v3173, %v3176
  %v3178 = vmul.f32 %v3177, 1.442695
  %v3179 = vpow.pop %v3178
  %v3180 = vsel %vm1648, %v3179, 0.0
  %3181 = vadd.xlane.f32.xlu0 %v3180
  %v3182 = vpop.xlane.xlu0 %3181
  %v3183 = vrcp.pop %v3182
  %v3184 = vmul.f32 %v3179, %v3183
  %3186 = vset.pattern.permute.xlu0 0
  %3187 = vperm.xlu0 %3186, %v3184
  %v3188 = vpop.permute.xlu0 %3187
  %v3190 = vmul.f32 %v3188, %v3121
  %3191 = vset.pattern.permute.xlu0 1
  %3192 = vperm.xlu0 %3191, %v3184
  %v3193 = vpop.permute.xlu0 %3192
  %v3195 = vmul.f32 %v3193, %v3133
  %v3196 = vadd.f32 %v3190, %v3195
  %3197 = vset.pattern.permute.xlu0 2
  %3198 = vperm.xlu0 %3197, %v3184
  %v3199 = vpop.permute.xlu0 %3198
  %v3201 = vmul.f32 %v3199, %v3133
  %3203 = vrot.lane.b32.xlu0 %v3201, 64
  %v3204 = vpop.permute.xlu0 %3203
  %v3206 = vadd.f32 %v3196, %v3204
  %3207 = vset.pattern.permute.xlu0 3
  %3208 = vperm.xlu0 %3207, %v3184
  %v3209 = vpop.permute.xlu0 %3208
  %v3211 = vmul.f32 %v3209, %v3145
  %v3212 = vadd.f32 %v3206, %v3211
  %v3214 = vrot.slane %v2837, 6
  %v3216 = vmul.f32 %v3107, %v3214
  %3218 = vrot.lane.b32.xlu0 %v3212, 32
  %v3219 = vpop.permute.xlu0 %3218
  %v3221 = vadd.f32 %v3216, %v3219
  %v3222 = vtanh.pop %v3221
  %3224 = vrot.lane.b32.xlu0 %v3222, 32
  %v3225 = vpop.permute.xlu0 %3224
  %v3227 = vmul.f32 %v3107, %v3225
  %3229 = vrot.lane.b32.xlu0 %v3227, 64
  %v3230 = vpop.permute.xlu0 %3229
  %v3233 = vrot.slane %v2951, 2
  %3234 = vrot.lane.b32.xlu0 %v3233, 64
  %v3235 = vpop.permute.xlu0 %3234
  %v3237 = vsel %vm549, %v3230, %v3235
  %v3239 = vrot.slane %v3237, 6
  %v3240 = vsel %vm267, %v3239, 0
  %3242 = vmatprep.subr.mxu0 0.0
  %3243 = vmatpush1.msra.mxu0 %v257
  %3244 = vmatprep.subr.mxu0 0.0
  %3245 = vmatpush1.msra.mxu0 %v258
  %3246 = vmatprep.subr.mxu0 0.0
  %3247 = vmatpush1.msra.mxu0 %v259
  %3248 = vmatprep.subr.mxu0 0.0
  %3249 = vmatpush1.msra.mxu0 %v260
  %3250 = vmatprep.subr.mxu0 0.0
  %3251 = vmatpush1.msra.mxu0 %v261
  %3252 = vmatprep.subr.mxu0 0.0
  %3253 = vmatpush1.msra.mxu0 %v262
  %3254 = vmatprep.subr.mxu0 0.0
  %3255 = vmatpush1.msra.mxu0 %v263
  %3256 = vmatprep.subr.mxu0 0.0
  %3257 = vmatpush1.msra.mxu0 %v264
  %3258 = vmatprep.subr.mxu0 0.0
  %3259 = vmatpush1.msra.mxu0 0.0
  %3260 = vmatprep.subr.mxu0 0.0
  %3261 = vmatpush1.msra.mxu0 0.0
  %3262 = vmatprep.subr.mxu0 0.0
  %3263 = vmatpush1.msra.mxu0 0.0
  %3264 = vmatprep.subr.mxu0 0.0
  %3265 = vmatpush1.msra.mxu0 0.0
  %3266 = vmatprep.subr.mxu0 0.0
  %3267 = vmatpush1.msra.mxu0 0.0
  %3268 = vmatprep.subr.mxu0 0.0
  %3269 = vmatpush1.msra.mxu0 0.0
  %3270 = vmatprep.subr.mxu0 0.0
  %3271 = vmatpush1.msra.mxu0 0.0
  %3272 = vmatprep.subr.mxu0 0.0
  %3273 = vmatpush1.msra.mxu0 0.0
  %3274 = vmatprep.subr.mxu0 0.0
  %3275 = vmatpush1.msra.mxu0 0.0
  %3276 = vmatprep.subr.mxu0 0.0
  %3277 = vmatpush1.msra.mxu0 0.0
  %3278 = vmatprep.subr.mxu0 0.0
  %3279 = vmatpush1.msra.mxu0 0.0
  %3280 = vmatprep.subr.mxu0 0.0
  %3281 = vmatpush1.msra.mxu0 0.0
  %3282 = vmatprep.subr.mxu0 0.0
  %3283 = vmatpush1.msra.mxu0 0.0
  %3284 = vmatprep.subr.mxu0 0.0
  %3285 = vmatpush1.msra.mxu0 0.0
  %3286 = vmatprep.subr.mxu0 0.0
  %3287 = vmatpush1.msra.mxu0 0.0
  %3288 = vmatprep.subr.mxu0 0.0
  %3289 = vmatpush1.msra.mxu0 0.0
  %3290 = vmatprep.subr.mxu0 0.0
  %3291 = vmatpush1.msra.mxu0 0.0
  %3292 = vmatprep.subr.mxu0 0.0
  %3293 = vmatpush1.msra.mxu0 0.0
  %3294 = vmatprep.subr.mxu0 0.0
  %3295 = vmatpush1.msra.mxu0 0.0
  %3296 = vmatprep.subr.mxu0 0.0
  %3297 = vmatpush1.msra.mxu0 0.0
  %3298 = vmatprep.subr.mxu0 0.0
  %3299 = vmatpush1.msra.mxu0 0.0
  %3300 = vmatprep.subr.mxu0 0.0
  %3301 = vmatpush1.msra.mxu0 0.0
  %3302 = vmatprep.subr.mxu0 0.0
  %3303 = vmatpush1.msra.mxu0 0.0
  %3304 = vmatprep.subr.mxu0 0.0
  %3305 = vmatpush1.msra.mxu0 0.0
  %3306 = vmatprep.mubr.f32.mxu0 0.0
  %3307 = vmatmul.mubr.f32.gmra.mrb[0].mxu0 %v3240
  %v3308 = vpop.f32.mrb[0].mxu0
  %v3309 = vadd.f32 %v555, %v3308
  %v3310 = vpop.f32.mrb[0].mxu0
  %3311 = vdwg.mxu0
  %v3312 = vxor.u32 %v3309, 2147483648
  %v3313 = vmul.f32 %v3312, 1.442695
  %v3314 = vpow.pop %v3313
  %v3315 = vadd.f32 %v3314, 1.0
  %v3316 = vrcp.pop %v3315
  %v3317 = vmul.f32 1.0, %v3316
  %v3318 = vtanh.pop %v3309
  %v3319 = vmul.f32 %v3317, %v2945
  %3321 = vrot.lane.b32.xlu0 %v3318, 64
  %v3322 = vpop.permute.xlu0 %3321
  %v3324 = vmul.f32 %v3317, %v3322
  %3326 = vrot.lane.b32.xlu0 %v3324, 32
  %v3327 = vpop.permute.xlu0 %3326
  %v3329 = vadd.f32 %v3319, %v3327
  %v3330 = vtanh.pop %v3329
  %3332 = vrot.lane.b32.xlu0 %v3330, 64
  %v3333 = vpop.permute.xlu0 %3332
  %v3335 = vmul.f32 %v3317, %v3333
  %v3336 = vmax.f32 %v3335, 0.0
  %v3337 = vld [vmem:[%s7] sm:$0xff]
  %v3338 = vld [vmem:[%s7 + $0x8] sm:$0xff]
  %v3339 = vld [vmem:[%s7 + $0x10] sm:$0xff]
  %v3340 = vld [vmem:[%s7 + $0x18] sm:$0xff]
  %v3341 = vld [vmem:[#allocation3] sm:$0x1]
  %v3343 = vlaneseq
  %v3344 = vshrl.u32 %v3343, 7
  %v3345 = vsub.s32 0, %v3344
  %v3346 = vrot.slane %v3341, %v3345
  %3349 = vrot.lane.b32.xlu0 %v3336, 32
  %v3350 = vpop.permute.xlu0 %3349
  %v3351 = vsel %vm549, %v3350, 0
  %3353 = vmatprep.subr.mxu0 0.0
  %3354 = vmatpush1.msra.mxu0 %v3337
  %3355 = vmatprep.subr.mxu0 0.0
  %3356 = vmatpush1.msra.mxu0 %v3338
  %3357 = vmatprep.subr.mxu0 0.0
  %3358 = vmatpush1.msra.mxu0 %v3339
  %3359 = vmatprep.subr.mxu0 0.0
  %3360 = vmatpush1.msra.mxu0 %v3340
  %3361 = vmatprep.subr.mxu0 0.0
  %3362 = vmatpush1.msra.mxu0 0.0
  %3363 = vmatprep.subr.mxu0 0.0
  %3364 = vmatpush1.msra.mxu0 0.0
  %3365 = vmatprep.subr.mxu0 0.0
  %3366 = vmatpush1.msra.mxu0 0.0
  %3367 = vmatprep.subr.mxu0 0.0
  %3368 = vmatpush1.msra.mxu0 0.0
  %3369 = vmatprep.subr.mxu0 0.0
  %3370 = vmatpush1.msra.mxu0 0.0
  %3371 = vmatprep.subr.mxu0 0.0
  %3372 = vmatpush1.msra.mxu0 0.0
  %3373 = vmatprep.subr.mxu0 0.0
  %3374 = vmatpush1.msra.mxu0 0.0
  %3375 = vmatprep.subr.mxu0 0.0
  %3376 = vmatpush1.msra.mxu0 0.0
  %3377 = vmatprep.subr.mxu0 0.0
  %3378 = vmatpush1.msra.mxu0 0.0
  %3379 = vmatprep.subr.mxu0 0.0
  %3380 = vmatpush1.msra.mxu0 0.0
  %3381 = vmatprep.subr.mxu0 0.0
  %3382 = vmatpush1.msra.mxu0 0.0
  %3383 = vmatprep.subr.mxu0 0.0
  %3384 = vmatpush1.msra.mxu0 0.0
  %3385 = vmatprep.subr.mxu0 0.0
  %3386 = vmatpush1.msra.mxu0 0.0
  %3387 = vmatprep.subr.mxu0 0.0
  %3388 = vmatpush1.msra.mxu0 0.0
  %3389 = vmatprep.subr.mxu0 0.0
  %3390 = vmatpush1.msra.mxu0 0.0
  %3391 = vmatprep.subr.mxu0 0.0
  %3392 = vmatpush1.msra.mxu0 0.0
  %3393 = vmatprep.subr.mxu0 0.0
  %3394 = vmatpush1.msra.mxu0 0.0
  %3395 = vmatprep.subr.mxu0 0.0
  %3396 = vmatpush1.msra.mxu0 0.0
  %3397 = vmatprep.subr.mxu0 0.0
  %3398 = vmatpush1.msra.mxu0 0.0
  %3399 = vmatprep.subr.mxu0 0.0
  %3400 = vmatpush1.msra.mxu0 0.0
  %3401 = vmatprep.subr.mxu0 0.0
  %3402 = vmatpush1.msra.mxu0 0.0
  %3403 = vmatprep.subr.mxu0 0.0
  %3404 = vmatpush1.msra.mxu0 0.0
  %3405 = vmatprep.subr.mxu0 0.0
  %3406 = vmatpush1.msra.mxu0 0.0
  %3407 = vmatprep.subr.mxu0 0.0
  %3408 = vmatpush1.msra.mxu0 0.0
  %3409 = vmatprep.subr.mxu0 0.0
  %3410 = vmatpush1.msra.mxu0 0.0
  %3411 = vmatprep.subr.mxu0 0.0
  %3412 = vmatpush1.msra.mxu0 0.0
  %3413 = vmatprep.subr.mxu0 0.0
  %3414 = vmatpush1.msra.mxu0 0.0
  %3415 = vmatprep.subr.mxu0 0.0
  %3416 = vmatpush1.msra.mxu0 0.0
  %3417 = vmatprep.mubr.f32.mxu0 0.0
  %3418 = vmatmul.mubr.f32.gmra.mrb[0].mxu0 %v3351
  %v3419 = vpop.f32.mrb[0].mxu0
  %v3420 = vadd.f32 %v3346, %v3419
  %v3421 = vpop.f32.mrb[0].mxu0
  %3422 = vdwg.mxu0
  %vm3423 = vcmask 1024
  %3424 = vst.msk [vmem:[%s9] sm:$0x3] %vm3423, %v3420
  // Predicated region
  $region38: #{net_forward.1} parent=0 // pred_check
    _
  $region39: #{net_forward.1} parent=0 // pred_check_branch
    %3426 = sbr.rel (0) target = $region41
  $region40: #{net_forward.1} parent=0 // pred_region
    _
  $region41: #{net_forward.1} parent=0 // pred_fallthru
    _
  // Predicated region
  $region42: #{net_forward.1} parent=0 // pred_check
    _
  $region43: #{net_forward.1} parent=0 // pred_check_branch
    %3428 = sbr.rel (0) target = $region45
  $region44: #{net_forward.1} parent=0 // pred_region
    _
  $region45: #{net_forward.1} parent=0 // pred_fallthru
    _

</llo_original>
